<compile_context>
chip_gen: v6e
topology: v6e:2x2x1
jax: 0.10.0
libtpu: 0.0.40
codegen_flags: <defaults>
</compile_context>

<pallas_src>
import functools

import jax
import jax.numpy as jnp
import numpy as np
from jax import lax
from jax.experimental import pallas as pl
from jax.experimental.pallas import tpu as pltpu

NEG_SLOPE = 0.2       # LeakyReLU slope (get_act default)
RES_SCALE = 1.0       # ResBlock default
REDUCTION = 16        # SEModule default


def _resblock_kernel(x_ref, w1_ref, b1_ref, w2_ref, b2_ref,
                     ws1_ref, bs1_ref, ws2_ref, bs2_ref,
                     o_ref, pad_ref, col_ref, *, img_w, halo):
    """One image per grid step.

    x_ref   : (1, H*W, C)        image, rows flattened h-major
    w1/w2   : (9*C, C)           conv weights, rows ordered (dy, dx, cin)
    pad_ref : (H*W + 2*halo, C)  scratch; image rows live at [halo, halo+H*W)
    col_ref : (H*W, 9*C)         im2col scratch (fully rewritten per conv)
    """
    _, HW, C = x_ref.shape
    W = img_w

    x = x_ref[0]                                            # (HW, C) f32

    # Zero only the halo rows (tiny), never the whole buffer.
    pad_ref[pl.ds(0, halo), :] = jnp.zeros((halo, C), jnp.float32)
    pad_ref[pl.ds(halo + HW, halo), :] = jnp.zeros((halo, C), jnp.float32)

    # Row masks zeroing the taps that read across the left/right image edge.
    wpos = lax.rem(lax.broadcasted_iota(jnp.int32, (HW, 1), 0), W)
    not_first_col = wpos > 0             # valid rows for a dx = -1 tap
    not_last_col = wpos < (W - 1)        # valid rows for a dx = +1 tap

    def build_im2col():
        # col[:, t*C:(t+1)*C] = input shifted by (dy-1, dx-1), zero padded.
        # H-overflow lands in the zero halo rows; W-overflow is masked.
        for dy in range(3):
            for dx in range(3):
                start = halo + (dy - 1) * W + (dx - 1)      # static offset
                tap = pad_ref[pl.ds(start, HW), :]
                if dx == 0:
                    tap = jnp.where(not_first_col, tap, 0.0)
                elif dx == 2:
                    tap = jnp.where(not_last_col, tap, 0.0)
                col_ref[:, pl.ds((dy * 3 + dx) * C, C)] = tap

    # ---- conv1 (3x3, pad=1, bias) + LeakyReLU(0.2) -----------------------
    pad_ref[pl.ds(halo, HW), :] = x
    build_im2col()
    h = jnp.dot(col_ref[...], w1_ref[...], preferred_element_type=jnp.float32)
    h = h + b1_ref[...]
    h = jnp.maximum(h, NEG_SLOPE * h)

    # ---- conv2 (3x3, pad=1, bias) -----------------------------------------
    pad_ref[pl.ds(halo, HW), :] = h
    build_im2col()
    r = jnp.dot(col_ref[...], w2_ref[...], preferred_element_type=jnp.float32)
    r = r + b2_ref[...]

    # ---- SE channel attention: avgpool -> 1x1 -> ReLU -> 1x1 -> sigmoid ----
    s = jnp.mean(r, axis=0, keepdims=True)                  # (1, C)
    z = jnp.dot(s, ws1_ref[...], preferred_element_type=jnp.float32) + bs1_ref[...]
    z = jnp.maximum(z, 0.0)                                 # ReLU
    g = jnp.dot(z, ws2_ref[...], preferred_element_type=jnp.float32) + bs2_ref[...]
    g = 1.0 / (1.0 + jnp.exp(-g))                           # sigmoid (exact; (1, C) only)

    # ---- residual ----------------------------------------------------------
    out = r * g * RES_SCALE + x
    o_ref[0] = out.astype(o_ref.dtype)


def resblock_pallas(x_nchw, params):
    """x_nchw: (N, C, H, W) float32. Returns (N, C, H, W) float32."""
    N, C, H, W = x_nchw.shape
    HW = H * W
    Cr = params["ws1"].shape[1]

    # NCHW -> (N, H*W, C): channels on lanes, flattened rows on sublanes.
    x = jnp.transpose(x_nchw, (0, 2, 3, 1)).reshape(N, HW, C)
    # (3, 3, Cin, Cout) -> (9*Cin, Cout): row order (dy, dx, cin) == im2col order.
    w1c = params["w1"].reshape(9 * C, C)
    w2c = params["w2"].reshape(9 * C, C)

    # Halo rows above/below the flattened image: >= W+1 (room for the
    # (dy-1, dx-1) slice offsets), rounded to a multiple of 8 so the dx=1 taps
    # stay sublane-aligned.
    halo = ((W + 1 + 7) // 8) * 8

    kernel = functools.partial(_resblock_kernel, img_w=W, halo=halo)

    def fixed(shape):
        return pl.BlockSpec(shape, lambda n: (0,) * len(shape))

    out = pl.pallas_call(
        kernel,
        out_shape=jax.ShapeDtypeStruct((N, HW, C), jnp.float32),
        grid_spec=pltpu.PrefetchScalarGridSpec(
            num_scalar_prefetch=0,
            grid=(N,),
            in_specs=[
                pl.BlockSpec((1, HW, C), lambda n: (n, 0, 0)),   # x
                fixed((9 * C, C)),                               # w1 (im2col layout)
                fixed((1, C)),                                   # b1
                fixed((9 * C, C)),                               # w2 (im2col layout)
                fixed((1, C)),                                   # b2
                fixed((C, Cr)),                                  # ws1
                fixed((1, Cr)),                                  # bs1
                fixed((Cr, C)),                                  # ws2
                fixed((1, C)),                                   # bs2
            ],
            out_specs=pl.BlockSpec((1, HW, C), lambda n: (n, 0, 0)),
            scratch_shapes=[
                pltpu.VMEM((HW + 2 * halo, C), jnp.float32),     # H-halo'd rows
                pltpu.VMEM((HW, 9 * C), jnp.float32),            # im2col matrix
            ],
        ),
        compiler_params=pltpu.CompilerParams(
            dimension_semantics=("parallel",),       # batch split across TCs on v7x
            vmem_limit_bytes=32 * 1024 * 1024,
        ),
    )(x, w1c, params["b1"], w2c, params["b2"],
      params["ws1"], params["bs1"], params["ws2"], params["bs2"])

    return jnp.transpose(out.reshape(N, H, W, C), (0, 3, 1, 2))  # -> NCHW


# ---------------- pure-JAX reference (NCHW, mirrors PyTorch) ----------------
def resblock_ref(x, params):
    dn = ("NCHW", "OIHW", "NCHW")

    def conv3x3(inp, w_khkwio, b):
        w_oihw = jnp.transpose(w_khkwio, (3, 2, 0, 1))     # (O, I, kh, kw)
        y = lax.conv_general_dilated(inp, w_oihw, (1, 1), "SAME",
                                     dimension_numbers=dn)
        return y + b.reshape(1, -1, 1, 1)

    h = conv3x3(x, params["w1"], params["b1"][0])
    h = jnp.where(h > 0, h, NEG_SLOPE * h)
    r = conv3x3(h, params["w2"], params["b2"][0])
    # SE
    s = jnp.mean(r, axis=(2, 3))                            # (N, C)
    z1 = jnp.maximum(s @ params["ws1"] + params["bs1"][0], 0.0)
    z2 = jax.nn.sigmoid(z1 @ params["ws2"] + params["bs2"][0])
    r = r * z2[:, :, None, None]
    return r * RES_SCALE + x


def init_params(key, n_feats, reduction=REDUCTION):
    cr = n_feats // reduction
    ks = jax.random.split(key, 8)
    scale = 0.1
    return {
        "w1": scale * jax.random.normal(ks[0], (3, 3, n_feats, n_feats), jnp.float32),
        "b1": scale * jax.random.normal(ks[1], (1, n_feats), jnp.float32),
        "w2": scale * jax.random.normal(ks[2], (3, 3, n_feats, n_feats), jnp.float32),
        "b2": scale * jax.random.normal(ks[3], (1, n_feats), jnp.float32),
        "ws1": scale * jax.random.normal(ks[4], (n_feats, cr), jnp.float32),
        "bs1": scale * jax.random.normal(ks[5], (1, cr), jnp.float32),
        "ws2": scale * jax.random.normal(ks[6], (cr, n_feats), jnp.float32),
        "bs2": scale * jax.random.normal(ks[7], (1, n_feats), jnp.float32),
    }


if __name__ == "__main__":
    N, C, H, W = 2, 32, 16, 16    # n_feats=32 so SE squeeze = 32 // 16 = 2
    key = jax.random.PRNGKey(0)
    kx, kp = jax.random.split(key)
    x = jax.random.normal(kx, (N, C, H, W), jnp.float32)
    params = init_params(kp, C)

    out = jax.block_until_ready(resblock_pallas(x, params))
    ref = jax.block_until_ready(resblock_ref(x, params))

    np.testing.assert_allclose(np.asarray(out), np.asarray(ref),
                               rtol=1e-3, atol=1e-3)
    print("KERNEL_OK")
</pallas_src>

<mosaic_0001>
module attributes {stable_mosaic.version = 11 : i64} {
  func.func @_resblock_kernel(%arg0: i32, %arg1: memref<1x256x32xf32, #tpu.memory_space<vmem>>, %arg2: memref<288x32xf32, #tpu.memory_space<vmem>>, %arg3: memref<1x32xf32, #tpu.memory_space<vmem>>, %arg4: memref<288x32xf32, #tpu.memory_space<vmem>>, %arg5: memref<1x32xf32, #tpu.memory_space<vmem>>, %arg6: memref<32x2xf32, #tpu.memory_space<vmem>>, %arg7: memref<1x2xf32, #tpu.memory_space<vmem>>, %arg8: memref<2x32xf32, #tpu.memory_space<vmem>>, %arg9: memref<1x32xf32, #tpu.memory_space<vmem>>, %arg10: memref<1x256x32xf32, #tpu.memory_space<vmem>>, %arg11: memref<304x32xf32, #tpu.memory_space<vmem>>, %arg12: memref<256x288xf32, #tpu.memory_space<vmem>>) attributes {dimension_semantics = [#tpu.dimension_semantics<parallel>], iteration_bounds = array<i64: 2>, scalar_prefetch = 0 : i64, scratch_operands = 2 : i64, tpu.core_type = #tpu.core_type<tc>, window_params = [{transform_indices = @transform_0, window_bounds = array<i64: 1, 256, 32>}, {pipeline_mode = #tpu.pipeline_mode<synchronous>, transform_indices = @transform_1, window_bounds = array<i64: 288, 32>}, {pipeline_mode = #tpu.pipeline_mode<synchronous>, transform_indices = @transform_2, window_bounds = array<i64: 1, 32>}, {pipeline_mode = #tpu.pipeline_mode<synchronous>, transform_indices = @transform_3, window_bounds = array<i64: 288, 32>}, {pipeline_mode = #tpu.pipeline_mode<synchronous>, transform_indices = @transform_4, window_bounds = array<i64: 1, 32>}, {pipeline_mode = #tpu.pipeline_mode<synchronous>, transform_indices = @transform_5, window_bounds = array<i64: 32, 2>}, {pipeline_mode = #tpu.pipeline_mode<synchronous>, transform_indices = @transform_6, window_bounds = array<i64: 1, 2>}, {pipeline_mode = #tpu.pipeline_mode<synchronous>, transform_indices = @transform_7, window_bounds = array<i64: 2, 32>}, {pipeline_mode = #tpu.pipeline_mode<synchronous>, transform_indices = @transform_8, window_bounds = array<i64: 1, 32>}, {transform_indices = @transform_9, window_bounds = array<i64: 1, 256, 32>}]} {
    %c0 = arith.constant 0 : index
    %c0_0 = arith.constant 0 : index
    %c0_1 = arith.constant 0 : index
    %0 = vector.load %arg1[%c0, %c0_0, %c0_1] : memref<1x256x32xf32, #tpu.memory_space<vmem>>, vector<1x256x32xf32>
    %1 = vector.shape_cast %0 : vector<1x256x32xf32> to vector<256x32xf32>
    %cst = arith.constant 0.000000e+00 : f32
    %2 = vector.broadcast %cst : f32 to vector<24x32xf32>
    %c0_2 = arith.constant 0 : index
    %c0_3 = arith.constant 0 : index
    %3 = vector.load %arg11[%c0_2, %c0_3] : memref<304x32xf32, #tpu.memory_space<vmem>>, vector<24x32xf32>
    tpu.vector_store %arg11[%c0_2, %c0_3], %2 {strides = array<i32>} : memref<304x32xf32, #tpu.memory_space<vmem>>, vector<24x32xf32>,
    %cst_4 = arith.constant 0.000000e+00 : f32
    %4 = vector.broadcast %cst_4 : f32 to vector<24x32xf32>
    %c280 = arith.constant 280 : index
    %c0_5 = arith.constant 0 : index
    %5 = vector.load %arg11[%c280, %c0_5] : memref<304x32xf32, #tpu.memory_space<vmem>>, vector<24x32xf32>
    tpu.vector_store %arg11[%c280, %c0_5], %4 {strides = array<i32>} : memref<304x32xf32, #tpu.memory_space<vmem>>, vector<24x32xf32>,
    %6 = tpu.iota {dimensions = array<i32: 0>} : vector<256x1xi32>
    %c16_i32 = arith.constant 16 : i32
    %7 = vector.broadcast %c16_i32 : i32 to vector<256x1xi32>
    %8 = arith.remsi %6, %7 : vector<256x1xi32>
    %c0_i32 = arith.constant 0 : i32
    %9 = vector.broadcast %c0_i32 : i32 to vector<256x1xi32>
    %10 = arith.cmpi sgt, %8, %9 : vector<256x1xi32>
    %c15_i32 = arith.constant 15 : i32
    %11 = vector.broadcast %c15_i32 : i32 to vector<256x1xi32>
    %12 = arith.cmpi slt, %8, %11 : vector<256x1xi32>
    %c24 = arith.constant 24 : index
    %c0_6 = arith.constant 0 : index
    %13 = vector.load %arg11[%c24, %c0_6] : memref<304x32xf32, #tpu.memory_space<vmem>>, vector<256x32xf32>
    tpu.vector_store %arg11[%c24, %c0_6], %1 {strides = array<i32>} : memref<304x32xf32, #tpu.memory_space<vmem>>, vector<256x32xf32>,
    %c7 = arith.constant 7 : index
    %c0_7 = arith.constant 0 : index
    %14 = vector.load %arg11[%c7, %c0_7] : memref<304x32xf32, #tpu.memory_space<vmem>>, vector<256x32xf32>
    %cst_8 = arith.constant 0.000000e+00 : f32
    %15 = vector.shape_cast %10 : vector<256x1xi1> to vector<256x1xi1>
    %16 = vector.broadcast %15 : vector<256x1xi1> to vector<256x32xi1>
    %17 = vector.broadcast %cst_8 : f32 to vector<256x32xf32>
    %18 = arith.select %16, %14, %17 : vector<256x32xi1>, vector<256x32xf32>
    %c0_9 = arith.constant 0 : index
    %c0_10 = arith.constant 0 : index
    %19 = vector.load %arg12[%c0_9, %c0_10] : memref<256x288xf32, #tpu.memory_space<vmem>>, vector<256x32xf32>
    tpu.vector_store %arg12[%c0_9, %c0_10], %18 {strides = array<i32>} : memref<256x288xf32, #tpu.memory_space<vmem>>, vector<256x32xf32>,
    %c8 = arith.constant 8 : index
    %c0_11 = arith.constant 0 : index
    %20 = vector.load %arg11[%c8, %c0_11] : memref<304x32xf32, #tpu.memory_space<vmem>>, vector<256x32xf32>
    %c0_12 = arith.constant 0 : index
    %c32 = arith.constant 32 : index
    %21 = vector.load %arg12[%c0_12, %c32] : memref<256x288xf32, #tpu.memory_space<vmem>>, vector<256x32xf32>
    tpu.vector_store %arg12[%c0_12, %c32], %20 {strides = array<i32>} : memref<256x288xf32, #tpu.memory_space<vmem>>, vector<256x32xf32>,
    %c9 = arith.constant 9 : index
    %c0_13 = arith.constant 0 : index
    %22 = vector.load %arg11[%c9, %c0_13] : memref<304x32xf32, #tpu.memory_space<vmem>>, vector<256x32xf32>
    %cst_14 = arith.constant 0.000000e+00 : f32
    %23 = vector.shape_cast %12 : vector<256x1xi1> to vector<256x1xi1>
    %24 = vector.broadcast %23 : vector<256x1xi1> to vector<256x32xi1>
    %25 = vector.broadcast %cst_14 : f32 to vector<256x32xf32>
    %26 = arith.select %24, %22, %25 : vector<256x32xi1>, vector<256x32xf32>
    %c0_15 = arith.constant 0 : index
    %c64 = arith.constant 64 : index
    %27 = vector.load %arg12[%c0_15, %c64] : memref<256x288xf32, #tpu.memory_space<vmem>>, vector<256x32xf32>
    tpu.vector_store %arg12[%c0_15, %c64], %26 {strides = array<i32>} : memref<256x288xf32, #tpu.memory_space<vmem>>, vector<256x32xf32>,
    %c23 = arith.constant 23 : index
    %c0_16 = arith.constant 0 : index
    %28 = vector.load %arg11[%c23, %c0_16] : memref<304x32xf32, #tpu.memory_space<vmem>>, vector<256x32xf32>
    %cst_17 = arith.constant 0.000000e+00 : f32
    %29 = vector.shape_cast %10 : vector<256x1xi1> to vector<256x1xi1>
    %30 = vector.broadcast %29 : vector<256x1xi1> to vector<256x32xi1>
    %31 = vector.broadcast %cst_17 : f32 to vector<256x32xf32>
    %32 = arith.select %30, %28, %31 : vector<256x32xi1>, vector<256x32xf32>
    %c0_18 = arith.constant 0 : index
    %c96 = arith.constant 96 : index
    %33 = vector.load %arg12[%c0_18, %c96] : memref<256x288xf32, #tpu.memory_space<vmem>>, vector<256x32xf32>
    tpu.vector_store %arg12[%c0_18, %c96], %32 {strides = array<i32>} : memref<256x288xf32, #tpu.memory_space<vmem>>, vector<256x32xf32>,
    %c24_19 = arith.constant 24 : index
    %c0_20 = arith.constant 0 : index
    %34 = vector.load %arg11[%c24_19, %c0_20] : memref<304x32xf32, #tpu.memory_space<vmem>>, vector<256x32xf32>
    %c0_21 = arith.constant 0 : index
    %c128 = arith.constant 128 : index
    %35 = vector.load %arg12[%c0_21, %c128] : memref<256x288xf32, #tpu.memory_space<vmem>>, vector<256x32xf32>
    tpu.vector_store %arg12[%c0_21, %c128], %34 {strides = array<i32>} : memref<256x288xf32, #tpu.memory_space<vmem>>, vector<256x32xf32>,
    %c25 = arith.constant 25 : index
    %c0_22 = arith.constant 0 : index
    %36 = vector.load %arg11[%c25, %c0_22] : memref<304x32xf32, #tpu.memory_space<vmem>>, vector<256x32xf32>
    %cst_23 = arith.constant 0.000000e+00 : f32
    %37 = vector.shape_cast %12 : vector<256x1xi1> to vector<256x1xi1>
    %38 = vector.broadcast %37 : vector<256x1xi1> to vector<256x32xi1>
    %39 = vector.broadcast %cst_23 : f32 to vector<256x32xf32>
    %40 = arith.select %38, %36, %39 : vector<256x32xi1>, vector<256x32xf32>
    %c0_24 = arith.constant 0 : index
    %c160 = arith.constant 160 : index
    %41 = vector.load %arg12[%c0_24, %c160] : memref<256x288xf32, #tpu.memory_space<vmem>>, vector<256x32xf32>
    tpu.vector_store %arg12[%c0_24, %c160], %40 {strides = array<i32>} : memref<256x288xf32, #tpu.memory_space<vmem>>, vector<256x32xf32>,
    %c39 = arith.constant 39 : index
    %c0_25 = arith.constant 0 : index
    %42 = vector.load %arg11[%c39, %c0_25] : memref<304x32xf32, #tpu.memory_space<vmem>>, vector<256x32xf32>
    %cst_26 = arith.constant 0.000000e+00 : f32
    %43 = vector.shape_cast %10 : vector<256x1xi1> to vector<256x1xi1>
    %44 = vector.broadcast %43 : vector<256x1xi1> to vector<256x32xi1>
    %45 = vector.broadcast %cst_26 : f32 to vector<256x32xf32>
    %46 = arith.select %44, %42, %45 : vector<256x32xi1>, vector<256x32xf32>
    %c0_27 = arith.constant 0 : index
    %c192 = arith.constant 192 : index
    %47 = vector.load %arg12[%c0_27, %c192] : memref<256x288xf32, #tpu.memory_space<vmem>>, vector<256x32xf32>
    tpu.vector_store %arg12[%c0_27, %c192], %46 {strides = array<i32>} : memref<256x288xf32, #tpu.memory_space<vmem>>, vector<256x32xf32>,
    %c40 = arith.constant 40 : index
    %c0_28 = arith.constant 0 : index
    %48 = vector.load %arg11[%c40, %c0_28] : memref<304x32xf32, #tpu.memory_space<vmem>>, vector<256x32xf32>
    %c0_29 = arith.constant 0 : index
    %c224 = arith.constant 224 : index
    %49 = vector.load %arg12[%c0_29, %c224] : memref<256x288xf32, #tpu.memory_space<vmem>>, vector<256x32xf32>
    tpu.vector_store %arg12[%c0_29, %c224], %48 {strides = array<i32>} : memref<256x288xf32, #tpu.memory_space<vmem>>, vector<256x32xf32>,
    %c41 = arith.constant 41 : index
    %c0_30 = arith.constant 0 : index
    %50 = vector.load %arg11[%c41, %c0_30] : memref<304x32xf32, #tpu.memory_space<vmem>>, vector<256x32xf32>
    %cst_31 = arith.constant 0.000000e+00 : f32
    %51 = vector.shape_cast %12 : vector<256x1xi1> to vector<256x1xi1>
    %52 = vector.broadcast %51 : vector<256x1xi1> to vector<256x32xi1>
    %53 = vector.broadcast %cst_31 : f32 to vector<256x32xf32>
    %54 = arith.select %52, %50, %53 : vector<256x32xi1>, vector<256x32xf32>
    %c0_32 = arith.constant 0 : index
    %c256 = arith.constant 256 : index
    %55 = vector.load %arg12[%c0_32, %c256] : memref<256x288xf32, #tpu.memory_space<vmem>>, vector<256x32xf32>
    tpu.vector_store %arg12[%c0_32, %c256], %54 {strides = array<i32>} : memref<256x288xf32, #tpu.memory_space<vmem>>, vector<256x32xf32>,
    %c0_33 = arith.constant 0 : index
    %c0_34 = arith.constant 0 : index
    %56 = vector.load %arg12[%c0_33, %c0_34] : memref<256x288xf32, #tpu.memory_space<vmem>>, vector<256x288xf32>
    %c0_35 = arith.constant 0 : index
    %c0_36 = arith.constant 0 : index
    %57 = vector.load %arg2[%c0_35, %c0_36] : memref<288x32xf32, #tpu.memory_space<vmem>>, vector<288x32xf32>
    %cst_37 = arith.constant dense<0.000000e+00> : vector<256x32xf32>
    %58 = tpu.matmul %56, %57, %cst_37 {dimension_numbers = #tpu.dot_dimension_numbers<[1], [0], [0], [1], [0, 0, 1, 1], [], []>} : vector<256x288xf32>, vector<288x32xf32>, vector<256x32xf32> -> vector<256x32xf32>
    %c0_38 = arith.constant 0 : index
    %c0_39 = arith.constant 0 : index
    %59 = vector.load %arg3[%c0_38, %c0_39] : memref<1x32xf32, #tpu.memory_space<vmem>>, vector<1x32xf32>
    %60 = vector.broadcast %59 : vector<1x32xf32> to vector<256x32xf32>
    %61 = arith.addf %58, %60 : vector<256x32xf32>
    %cst_40 = arith.constant 2.000000e-01 : f32
    %62 = vector.broadcast %cst_40 : f32 to vector<256x32xf32>
    %63 = arith.mulf %62, %61 : vector<256x32xf32>
    %64 = arith.maximumf %61, %63 : vector<256x32xf32>
    %c24_41 = arith.constant 24 : index
    %c0_42 = arith.constant 0 : index
    %65 = vector.load %arg11[%c24_41, %c0_42] : memref<304x32xf32, #tpu.memory_space<vmem>>, vector<256x32xf32>
    tpu.vector_store %arg11[%c24_41, %c0_42], %64 {strides = array<i32>} : memref<304x32xf32, #tpu.memory_space<vmem>>, vector<256x32xf32>,
    %c7_43 = arith.constant 7 : index
    %c0_44 = arith.constant 0 : index
    %66 = vector.load %arg11[%c7_43, %c0_44] : memref<304x32xf32, #tpu.memory_space<vmem>>, vector<256x32xf32>
    %cst_45 = arith.constant 0.000000e+00 : f32
    %67 = vector.shape_cast %10 : vector<256x1xi1> to vector<256x1xi1>
    %68 = vector.broadcast %67 : vector<256x1xi1> to vector<256x32xi1>
    %69 = vector.broadcast %cst_45 : f32 to vector<256x32xf32>
    %70 = arith.select %68, %66, %69 : vector<256x32xi1>, vector<256x32xf32>
    %c0_46 = arith.constant 0 : index
    %c0_47 = arith.constant 0 : index
    %71 = vector.load %arg12[%c0_46, %c0_47] : memref<256x288xf32, #tpu.memory_space<vmem>>, vector<256x32xf32>
    tpu.vector_store %arg12[%c0_46, %c0_47], %70 {strides = array<i32>} : memref<256x288xf32, #tpu.memory_space<vmem>>, vector<256x32xf32>,
    %c8_48 = arith.constant 8 : index
    %c0_49 = arith.constant 0 : index
    %72 = vector.load %arg11[%c8_48, %c0_49] : memref<304x32xf32, #tpu.memory_space<vmem>>, vector<256x32xf32>
    %c0_50 = arith.constant 0 : index
    %c32_51 = arith.constant 32 : index
    %73 = vector.load %arg12[%c0_50, %c32_51] : memref<256x288xf32, #tpu.memory_space<vmem>>, vector<256x32xf32>
    tpu.vector_store %arg12[%c0_50, %c32_51], %72 {strides = array<i32>} : memref<256x288xf32, #tpu.memory_space<vmem>>, vector<256x32xf32>,
    %c9_52 = arith.constant 9 : index
    %c0_53 = arith.constant 0 : index
    %74 = vector.load %arg11[%c9_52, %c0_53] : memref<304x32xf32, #tpu.memory_space<vmem>>, vector<256x32xf32>
    %cst_54 = arith.constant 0.000000e+00 : f32
    %75 = vector.shape_cast %12 : vector<256x1xi1> to vector<256x1xi1>
    %76 = vector.broadcast %75 : vector<256x1xi1> to vector<256x32xi1>
    %77 = vector.broadcast %cst_54 : f32 to vector<256x32xf32>
    %78 = arith.select %76, %74, %77 : vector<256x32xi1>, vector<256x32xf32>
    %c0_55 = arith.constant 0 : index
    %c64_56 = arith.constant 64 : index
    %79 = vector.load %arg12[%c0_55, %c64_56] : memref<256x288xf32, #tpu.memory_space<vmem>>, vector<256x32xf32>
    tpu.vector_store %arg12[%c0_55, %c64_56], %78 {strides = array<i32>} : memref<256x288xf32, #tpu.memory_space<vmem>>, vector<256x32xf32>,
    %c23_57 = arith.constant 23 : index
    %c0_58 = arith.constant 0 : index
    %80 = vector.load %arg11[%c23_57, %c0_58] : memref<304x32xf32, #tpu.memory_space<vmem>>, vector<256x32xf32>
    %cst_59 = arith.constant 0.000000e+00 : f32
    %81 = vector.shape_cast %10 : vector<256x1xi1> to vector<256x1xi1>
    %82 = vector.broadcast %81 : vector<256x1xi1> to vector<256x32xi1>
    %83 = vector.broadcast %cst_59 : f32 to vector<256x32xf32>
    %84 = arith.select %82, %80, %83 : vector<256x32xi1>, vector<256x32xf32>
    %c0_60 = arith.constant 0 : index
    %c96_61 = arith.constant 96 : index
    %85 = vector.load %arg12[%c0_60, %c96_61] : memref<256x288xf32, #tpu.memory_space<vmem>>, vector<256x32xf32>
    tpu.vector_store %arg12[%c0_60, %c96_61], %84 {strides = array<i32>} : memref<256x288xf32, #tpu.memory_space<vmem>>, vector<256x32xf32>,
    %c24_62 = arith.constant 24 : index
    %c0_63 = arith.constant 0 : index
    %86 = vector.load %arg11[%c24_62, %c0_63] : memref<304x32xf32, #tpu.memory_space<vmem>>, vector<256x32xf32>
    %c0_64 = arith.constant 0 : index
    %c128_65 = arith.constant 128 : index
    %87 = vector.load %arg12[%c0_64, %c128_65] : memref<256x288xf32, #tpu.memory_space<vmem>>, vector<256x32xf32>
    tpu.vector_store %arg12[%c0_64, %c128_65], %86 {strides = array<i32>} : memref<256x288xf32, #tpu.memory_space<vmem>>, vector<256x32xf32>,
    %c25_66 = arith.constant 25 : index
    %c0_67 = arith.constant 0 : index
    %88 = vector.load %arg11[%c25_66, %c0_67] : memref<304x32xf32, #tpu.memory_space<vmem>>, vector<256x32xf32>
    %cst_68 = arith.constant 0.000000e+00 : f32
    %89 = vector.shape_cast %12 : vector<256x1xi1> to vector<256x1xi1>
    %90 = vector.broadcast %89 : vector<256x1xi1> to vector<256x32xi1>
    %91 = vector.broadcast %cst_68 : f32 to vector<256x32xf32>
    %92 = arith.select %90, %88, %91 : vector<256x32xi1>, vector<256x32xf32>
    %c0_69 = arith.constant 0 : index
    %c160_70 = arith.constant 160 : index
    %93 = vector.load %arg12[%c0_69, %c160_70] : memref<256x288xf32, #tpu.memory_space<vmem>>, vector<256x32xf32>
    tpu.vector_store %arg12[%c0_69, %c160_70], %92 {strides = array<i32>} : memref<256x288xf32, #tpu.memory_space<vmem>>, vector<256x32xf32>,
    %c39_71 = arith.constant 39 : index
    %c0_72 = arith.constant 0 : index
    %94 = vector.load %arg11[%c39_71, %c0_72] : memref<304x32xf32, #tpu.memory_space<vmem>>, vector<256x32xf32>
    %cst_73 = arith.constant 0.000000e+00 : f32
    %95 = vector.shape_cast %10 : vector<256x1xi1> to vector<256x1xi1>
    %96 = vector.broadcast %95 : vector<256x1xi1> to vector<256x32xi1>
    %97 = vector.broadcast %cst_73 : f32 to vector<256x32xf32>
    %98 = arith.select %96, %94, %97 : vector<256x32xi1>, vector<256x32xf32>
    %c0_74 = arith.constant 0 : index
    %c192_75 = arith.constant 192 : index
    %99 = vector.load %arg12[%c0_74, %c192_75] : memref<256x288xf32, #tpu.memory_space<vmem>>, vector<256x32xf32>
    tpu.vector_store %arg12[%c0_74, %c192_75], %98 {strides = array<i32>} : memref<256x288xf32, #tpu.memory_space<vmem>>, vector<256x32xf32>,
    %c40_76 = arith.constant 40 : index
    %c0_77 = arith.constant 0 : index
    %100 = vector.load %arg11[%c40_76, %c0_77] : memref<304x32xf32, #tpu.memory_space<vmem>>, vector<256x32xf32>
    %c0_78 = arith.constant 0 : index
    %c224_79 = arith.constant 224 : index
    %101 = vector.load %arg12[%c0_78, %c224_79] : memref<256x288xf32, #tpu.memory_space<vmem>>, vector<256x32xf32>
    tpu.vector_store %arg12[%c0_78, %c224_79], %100 {strides = array<i32>} : memref<256x288xf32, #tpu.memory_space<vmem>>, vector<256x32xf32>,
    %c41_80 = arith.constant 41 : index
    %c0_81 = arith.constant 0 : index
    %102 = vector.load %arg11[%c41_80, %c0_81] : memref<304x32xf32, #tpu.memory_space<vmem>>, vector<256x32xf32>
    %cst_82 = arith.constant 0.000000e+00 : f32
    %103 = vector.shape_cast %12 : vector<256x1xi1> to vector<256x1xi1>
    %104 = vector.broadcast %103 : vector<256x1xi1> to vector<256x32xi1>
    %105 = vector.broadcast %cst_82 : f32 to vector<256x32xf32>
    %106 = arith.select %104, %102, %105 : vector<256x32xi1>, vector<256x32xf32>
    %c0_83 = arith.constant 0 : index
    %c256_84 = arith.constant 256 : index
    %107 = vector.load %arg12[%c0_83, %c256_84] : memref<256x288xf32, #tpu.memory_space<vmem>>, vector<256x32xf32>
    tpu.vector_store %arg12[%c0_83, %c256_84], %106 {strides = array<i32>} : memref<256x288xf32, #tpu.memory_space<vmem>>, vector<256x32xf32>,
    %c0_85 = arith.constant 0 : index
    %c0_86 = arith.constant 0 : index
    %108 = vector.load %arg12[%c0_85, %c0_86] : memref<256x288xf32, #tpu.memory_space<vmem>>, vector<256x288xf32>
    %c0_87 = arith.constant 0 : index
    %c0_88 = arith.constant 0 : index
    %109 = vector.load %arg4[%c0_87, %c0_88] : memref<288x32xf32, #tpu.memory_space<vmem>>, vector<288x32xf32>
    %cst_89 = arith.constant dense<0.000000e+00> : vector<256x32xf32>
    %110 = tpu.matmul %108, %109, %cst_89 {dimension_numbers = #tpu.dot_dimension_numbers<[1], [0], [0], [1], [0, 0, 1, 1], [], []>} : vector<256x288xf32>, vector<288x32xf32>, vector<256x32xf32> -> vector<256x32xf32>
    %c0_90 = arith.constant 0 : index
    %c0_91 = arith.constant 0 : index
    %111 = vector.load %arg5[%c0_90, %c0_91] : memref<1x32xf32, #tpu.memory_space<vmem>>, vector<1x32xf32>
    %112 = vector.broadcast %111 : vector<1x32xf32> to vector<256x32xf32>
    %113 = arith.addf %110, %112 : vector<256x32xf32>
    %cst_92 = arith.constant dense<0.000000e+00> : vector<32xf32>
    %114 = vector.multi_reduction <add>, %113, %cst_92 [0] : vector<256x32xf32> to vector<32xf32>
    %115 = vector.shape_cast %114 : vector<32xf32> to vector<1x32xf32>
    %cst_93 = arith.constant 2.560000e+02 : f32
    %116 = vector.broadcast %cst_93 : f32 to vector<1x32xf32>
    %117 = arith.divf %115, %116 : vector<1x32xf32>
    %c0_94 = arith.constant 0 : index
    %c0_95 = arith.constant 0 : index
    %118 = vector.load %arg6[%c0_94, %c0_95] : memref<32x2xf32, #tpu.memory_space<vmem>>, vector<32x2xf32>
    %cst_96 = arith.constant dense<0.000000e+00> : vector<1x2xf32>
    %119 = tpu.matmul %117, %118, %cst_96 {dimension_numbers = #tpu.dot_dimension_numbers<[1], [0], [0], [1], [0, 0, 1, 1], [], []>} : vector<1x32xf32>, vector<32x2xf32>, vector<1x2xf32> -> vector<1x2xf32>
    %c0_97 = arith.constant 0 : index
    %c0_98 = arith.constant 0 : index
    %120 = vector.load %arg7[%c0_97, %c0_98] : memref<1x2xf32, #tpu.memory_space<vmem>>, vector<1x2xf32>
    %121 = arith.addf %119, %120 : vector<1x2xf32>
    %cst_99 = arith.constant 0.000000e+00 : f32
    %122 = vector.broadcast %cst_99 : f32 to vector<1x2xf32>
    %123 = arith.maximumf %121, %122 : vector<1x2xf32>
    %c0_100 = arith.constant 0 : index
    %c0_101 = arith.constant 0 : index
    %124 = vector.load %arg8[%c0_100, %c0_101] : memref<2x32xf32, #tpu.memory_space<vmem>>, vector<2x32xf32>
    %cst_102 = arith.constant dense<0.000000e+00> : vector<1x32xf32>
    %125 = tpu.matmul %123, %124, %cst_102 {dimension_numbers = #tpu.dot_dimension_numbers<[1], [0], [0], [1], [0, 0, 1, 1], [], []>} : vector<1x2xf32>, vector<2x32xf32>, vector<1x32xf32> -> vector<1x32xf32>
    %c0_103 = arith.constant 0 : index
    %c0_104 = arith.constant 0 : index
    %126 = vector.load %arg9[%c0_103, %c0_104] : memref<1x32xf32, #tpu.memory_space<vmem>>, vector<1x32xf32>
    %127 = arith.addf %125, %126 : vector<1x32xf32>
    %cst_105 = arith.constant 0.000000e+00 : f32
    %128 = vector.broadcast %cst_105 : f32 to vector<1x32xf32>
    %129 = arith.subf %128, %127 : vector<1x32xf32>
    %130 = math.exp %129 : vector<1x32xf32>
    %cst_106 = arith.constant 1.000000e+00 : f32
    %131 = vector.broadcast %cst_106 : f32 to vector<1x32xf32>
    %132 = arith.addf %131, %130 : vector<1x32xf32>
    %cst_107 = arith.constant 1.000000e+00 : f32
    %133 = vector.broadcast %cst_107 : f32 to vector<1x32xf32>
    %134 = arith.divf %133, %132 : vector<1x32xf32>
    %135 = vector.broadcast %134 : vector<1x32xf32> to vector<256x32xf32>
    %136 = arith.mulf %113, %135 : vector<256x32xf32>
    %cst_108 = arith.constant 1.000000e+00 : f32
    %137 = vector.broadcast %cst_108 : f32 to vector<256x32xf32>
    %138 = arith.mulf %136, %137 : vector<256x32xf32>
    %139 = arith.addf %138, %1 : vector<256x32xf32>
    %c0_109 = arith.constant 0 : index
    %c0_110 = arith.constant 0 : index
    %c0_111 = arith.constant 0 : index
    %140 = vector.load %arg10[%c0_109, %c0_110, %c0_111] : memref<1x256x32xf32, #tpu.memory_space<vmem>>, vector<1x256x32xf32>
    %141 = vector.shape_cast %140 : vector<1x256x32xf32> to vector<256x32xf32>
    %142 = vector.shape_cast %139 : vector<256x32xf32> to vector<1x256x32xf32>
    tpu.vector_store %arg10[%c0_109, %c0_110, %c0_111], %142 {strides = array<i32>} : memref<1x256x32xf32, #tpu.memory_space<vmem>>, vector<1x256x32xf32>,
    return
  }
  func.func @transform_0(%arg0: i32) -> (i32, i32, i32) {
    %c0_i32 = arith.constant 0 : i32
    %c0_i32_0 = arith.constant 0 : i32
    %c0_i32_1 = arith.constant 0 : i32
    return %arg0, %c0_i32, %c0_i32_0 : i32, i32, i32
  }
  func.func @transform_1(%arg0: i32) -> (i32, i32) {
    %c0_i32 = arith.constant 0 : i32
    %c0_i32_0 = arith.constant 0 : i32
    %c0_i32_1 = arith.constant 0 : i32
    return %c0_i32, %c0_i32_0 : i32, i32
  }
  func.func @transform_2(%arg0: i32) -> (i32, i32) {
    %c0_i32 = arith.constant 0 : i32
    %c0_i32_0 = arith.constant 0 : i32
    %c0_i32_1 = arith.constant 0 : i32
    return %c0_i32, %c0_i32_0 : i32, i32
  }
  func.func @transform_3(%arg0: i32) -> (i32, i32) {
    %c0_i32 = arith.constant 0 : i32
    %c0_i32_0 = arith.constant 0 : i32
    %c0_i32_1 = arith.constant 0 : i32
    return %c0_i32, %c0_i32_0 : i32, i32
  }
  func.func @transform_4(%arg0: i32) -> (i32, i32) {
    %c0_i32 = arith.constant 0 : i32
    %c0_i32_0 = arith.constant 0 : i32
    %c0_i32_1 = arith.constant 0 : i32
    return %c0_i32, %c0_i32_0 : i32, i32
  }
  func.func @transform_5(%arg0: i32) -> (i32, i32) {
    %c0_i32 = arith.constant 0 : i32
    %c0_i32_0 = arith.constant 0 : i32
    %c0_i32_1 = arith.constant 0 : i32
    return %c0_i32, %c0_i32_0 : i32, i32
  }
  func.func @transform_6(%arg0: i32) -> (i32, i32) {
    %c0_i32 = arith.constant 0 : i32
    %c0_i32_0 = arith.constant 0 : i32
    %c0_i32_1 = arith.constant 0 : i32
    return %c0_i32, %c0_i32_0 : i32, i32
  }
  func.func @transform_7(%arg0: i32) -> (i32, i32) {
    %c0_i32 = arith.constant 0 : i32
    %c0_i32_0 = arith.constant 0 : i32
    %c0_i32_1 = arith.constant 0 : i32
    return %c0_i32, %c0_i32_0 : i32, i32
  }
  func.func @transform_8(%arg0: i32) -> (i32, i32) {
    %c0_i32 = arith.constant 0 : i32
    %c0_i32_0 = arith.constant 0 : i32
    %c0_i32_1 = arith.constant 0 : i32
    return %c0_i32, %c0_i32_0 : i32, i32
  }
  func.func @transform_9(%arg0: i32) -> (i32, i32, i32) {
    %c0_i32 = arith.constant 0 : i32
    %c0_i32_0 = arith.constant 0 : i32
    %c0_i32_1 = arith.constant 0 : i32
    return %arg0, %c0_i32, %c0_i32_0 : i32, i32, i32
  }
}

</mosaic_0001>

<llo_original>
// kernel: tpu_custom_call.1
$region0: #{tpu_custom_call.1}
  #allocation0 [shape = 'u32[]', space=smem, size = 0x4, offset = 0x4, fixed_abs, tag = 'smem constant byte address 0x4 - core index']
  #allocation1 [shape = 'u32[144,128]{1,0:T(1,128)}', space=vmem, size = 0x12000, scoped, tag = 'internal scratch']
  #allocation2 [shape = 'f32[304,32]{1,0:T(8,128)}', space=vmem, size = 0x26000, scoped, tag = 'scratch operand']
  #allocation3 [shape = 'f32[256,288]{1,0:T(8,128)}', space=vmem, size = 0x60000, scoped, tag = 'scratch operand']
  %s0 = inlined_call_operand.vmem [shape: f32[2,256,32], index: 0, kind: input, shape index: {}]
  %s1 = inlined_call_operand.vmem [shape: f32[288,32], index: 1, kind: input, shape index: {}]
  %s2 = inlined_call_operand.vmem [shape: f32[1,32], index: 2, kind: input, shape index: {}]
  %s3 = inlined_call_operand.vmem [shape: f32[288,32], index: 3, kind: input, shape index: {}]
  %s4 = inlined_call_operand.vmem [shape: f32[1,32], index: 4, kind: input, shape index: {}]
  %s5 = inlined_call_operand.vmem [shape: f32[32,2], index: 5, kind: input, shape index: {}]
  %s6 = inlined_call_operand.vmem [shape: f32[1,2], index: 6, kind: input, shape index: {}]
  %s7 = inlined_call_operand.vmem [shape: f32[2,32], index: 7, kind: input, shape index: {}]
  %s8 = inlined_call_operand.vmem [shape: f32[1,32], index: 8, kind: input, shape index: {}]
  %s9 = inlined_call_operand.vmem [shape: f32[2,256,32], index: 9, kind: output, shape index: {}]
  %s10 = sld [smem:[#allocation0]]
  $region69: #{tpu_custom_call.1} parent=0
    _
  %s12 = ssub.s32 1, %s10
  %s13 = scalar_select 0, %s12, %s10
  loop: start=0, step=1, limit=4
  $region2: #{tpu_custom_call.1} parent=0 // loop_pre_header
    _
  $region3: #{tpu_custom_call.1} parent=0 // loop_header
    %s15 = sphi 0, %s19
    %p16 = scmp.ge.s32.totalorder %s15, 4
    %s25 = sphi 0, %s27
    %s28 = sphi 0, %s25
    %s29 = sphi 0, %s28
    %s45 = sphi 0, %s29
    %s49 = sphi 0, %s49
    %s51 = sphi 0, %s49
    %s52 = sphi 0, %s51
    %s66 = sphi 0, %s52
    %s70 = sphi 0, %s70
    %s72 = sphi 0, %s70
    %s73 = sphi 0, %s72
    %s87 = sphi 0, %s73
    %s91 = sphi 0, %s91
    %s93 = sphi 0, %s91
    %s94 = sphi 0, %s93
    %s108 = sphi 0, %s94
    %s112 = sphi 0, %s112
    %s114 = sphi 0, %s112
    %s115 = sphi 0, %s114
    %s129 = sphi 0, %s115
    %s133 = sphi 0, %s133
    %s135 = sphi 0, %s133
    %s136 = sphi 0, %s135
    %s150 = sphi 0, %s136
    %s154 = sphi 0, %s154
    %s156 = sphi 0, %s154
    %s157 = sphi 0, %s156
    %s171 = sphi 0, %s157
    %s175 = sphi 0, %s175
    %s177 = sphi 0, %s175
    %s178 = sphi 0, %s177
    %s192 = sphi 0, %s178
    %s196 = sphi 0, %s196
    %s198 = sphi 0, %s196
    %s199 = sphi 0, %s198
    %s213 = sphi 0, %s199
    %s219 = sphi 0, %s221
    %s222 = sphi 0, %s219
    %s223 = sphi 0, %s222
    %s239 = sphi 0, %s223
  $region4: #{tpu_custom_call.1} parent=0 // loop_header_branch
    %18 = sbr.rel (%p16) target = $region8
  $region5: #{tpu_custom_call.1} parent=0 // loop_body
    %s20 = ssub.s32 %s15, 1
    %s21 = ssub.s32 %s15, 2
    %s22 = sadd.s32 %s15, 1
    %s23 = ssub.s32 %s15, %s22
    %p24 = scmp.eq.s32.totalorder %s23, 0
    %s26 = sadd.s32 %s25, 1
    %s27 = scalar_select %p24, %s25, %s26
    %p30 = pneg %p24
    %p31 = scmp.eq.s32.totalorder %s15, 1
    %p32 = por %p30, %p31
    %p33 = scmp.ne.s32.totalorder %s25, %s28
    %p34 = scmp.eq.s32.totalorder %s15, 0
    %p35 = por %p33, %p34
    %p36 = scmp.ne.s32.totalorder %s25, %s28
    %p37 = scmp.eq.s32.totalorder %s20, 1
    %p38 = por %p36, %p37
    %p39 = scmp.ne.s32.totalorder %s28, %s29
    %p40 = scmp.eq.s32.totalorder %s20, 0
    %p41 = por %p39, %p40
    %p42 = scmp.ne.s32.totalorder %s28, %s29
    %p43 = scmp.eq.s32.totalorder %s21, 1
    %p44 = por %p42, %p43
    %p46 = scmp.ne.s32.totalorder %s29, %s45
    %p47 = scmp.eq.s32.totalorder %s21, 0
    %p48 = por %p46, %p47
    %s50 = sadd.s32 %s49, 1
    %p53 = scmp.eq.s32.totalorder %s15, 1
    %p54 = scmp.ne.s32.totalorder %s49, %s51
    %p55 = scmp.eq.s32.totalorder %s15, 0
    %p56 = por %p54, %p55
    %p57 = scmp.ne.s32.totalorder %s49, %s51
    %p58 = scmp.eq.s32.totalorder %s20, 1
    %p59 = por %p57, %p58
    %p60 = scmp.ne.s32.totalorder %s51, %s52
    %p61 = scmp.eq.s32.totalorder %s20, 0
    %p62 = por %p60, %p61
    %p63 = scmp.ne.s32.totalorder %s51, %s52
    %p64 = scmp.eq.s32.totalorder %s21, 1
    %p65 = por %p63, %p64
    %p67 = scmp.ne.s32.totalorder %s52, %s66
    %p68 = scmp.eq.s32.totalorder %s21, 0
    %p69 = por %p67, %p68
    %s71 = sadd.s32 %s70, 1
    %p74 = scmp.eq.s32.totalorder %s15, 1
    %p75 = scmp.ne.s32.totalorder %s70, %s72
    %p76 = scmp.eq.s32.totalorder %s15, 0
    %p77 = por %p75, %p76
    %p78 = scmp.ne.s32.totalorder %s70, %s72
    %p79 = scmp.eq.s32.totalorder %s20, 1
    %p80 = por %p78, %p79
    %p81 = scmp.ne.s32.totalorder %s72, %s73
    %p82 = scmp.eq.s32.totalorder %s20, 0
    %p83 = por %p81, %p82
    %p84 = scmp.ne.s32.totalorder %s72, %s73
    %p85 = scmp.eq.s32.totalorder %s21, 1
    %p86 = por %p84, %p85
    %p88 = scmp.ne.s32.totalorder %s73, %s87
    %p89 = scmp.eq.s32.totalorder %s21, 0
    %p90 = por %p88, %p89
    %s92 = sadd.s32 %s91, 1
    %p95 = scmp.eq.s32.totalorder %s15, 1
    %p96 = scmp.ne.s32.totalorder %s91, %s93
    %p97 = scmp.eq.s32.totalorder %s15, 0
    %p98 = por %p96, %p97
    %p99 = scmp.ne.s32.totalorder %s91, %s93
    %p100 = scmp.eq.s32.totalorder %s20, 1
    %p101 = por %p99, %p100
    %p102 = scmp.ne.s32.totalorder %s93, %s94
    %p103 = scmp.eq.s32.totalorder %s20, 0
    %p104 = por %p102, %p103
    %p105 = scmp.ne.s32.totalorder %s93, %s94
    %p106 = scmp.eq.s32.totalorder %s21, 1
    %p107 = por %p105, %p106
    %p109 = scmp.ne.s32.totalorder %s94, %s108
    %p110 = scmp.eq.s32.totalorder %s21, 0
    %p111 = por %p109, %p110
    %s113 = sadd.s32 %s112, 1
    %p116 = scmp.eq.s32.totalorder %s15, 1
    %p117 = scmp.ne.s32.totalorder %s112, %s114
    %p118 = scmp.eq.s32.totalorder %s15, 0
    %p119 = por %p117, %p118
    %p120 = scmp.ne.s32.totalorder %s112, %s114
    %p121 = scmp.eq.s32.totalorder %s20, 1
    %p122 = por %p120, %p121
    %p123 = scmp.ne.s32.totalorder %s114, %s115
    %p124 = scmp.eq.s32.totalorder %s20, 0
    %p125 = por %p123, %p124
    %p126 = scmp.ne.s32.totalorder %s114, %s115
    %p127 = scmp.eq.s32.totalorder %s21, 1
    %p128 = por %p126, %p127
    %p130 = scmp.ne.s32.totalorder %s115, %s129
    %p131 = scmp.eq.s32.totalorder %s21, 0
    %p132 = por %p130, %p131
    %s134 = sadd.s32 %s133, 1
    %p137 = scmp.eq.s32.totalorder %s15, 1
    %p138 = scmp.ne.s32.totalorder %s133, %s135
    %p139 = scmp.eq.s32.totalorder %s15, 0
    %p140 = por %p138, %p139
    %p141 = scmp.ne.s32.totalorder %s133, %s135
    %p142 = scmp.eq.s32.totalorder %s20, 1
    %p143 = por %p141, %p142
    %p144 = scmp.ne.s32.totalorder %s135, %s136
    %p145 = scmp.eq.s32.totalorder %s20, 0
    %p146 = por %p144, %p145
    %p147 = scmp.ne.s32.totalorder %s135, %s136
    %p148 = scmp.eq.s32.totalorder %s21, 1
    %p149 = por %p147, %p148
    %p151 = scmp.ne.s32.totalorder %s136, %s150
    %p152 = scmp.eq.s32.totalorder %s21, 0
    %p153 = por %p151, %p152
    %s155 = sadd.s32 %s154, 1
    %p158 = scmp.eq.s32.totalorder %s15, 1
    %p159 = scmp.ne.s32.totalorder %s154, %s156
    %p160 = scmp.eq.s32.totalorder %s15, 0
    %p161 = por %p159, %p160
    %p162 = scmp.ne.s32.totalorder %s154, %s156
    %p163 = scmp.eq.s32.totalorder %s20, 1
    %p164 = por %p162, %p163
    %p165 = scmp.ne.s32.totalorder %s156, %s157
    %p166 = scmp.eq.s32.totalorder %s20, 0
    %p167 = por %p165, %p166
    %p168 = scmp.ne.s32.totalorder %s156, %s157
    %p169 = scmp.eq.s32.totalorder %s21, 1
    %p170 = por %p168, %p169
    %p172 = scmp.ne.s32.totalorder %s157, %s171
    %p173 = scmp.eq.s32.totalorder %s21, 0
    %p174 = por %p172, %p173
    %s176 = sadd.s32 %s175, 1
    %p179 = scmp.eq.s32.totalorder %s15, 1
    %p180 = scmp.ne.s32.totalorder %s175, %s177
    %p181 = scmp.eq.s32.totalorder %s15, 0
    %p182 = por %p180, %p181
    %p183 = scmp.ne.s32.totalorder %s175, %s177
    %p184 = scmp.eq.s32.totalorder %s20, 1
    %p185 = por %p183, %p184
    %p186 = scmp.ne.s32.totalorder %s177, %s178
    %p187 = scmp.eq.s32.totalorder %s20, 0
    %p188 = por %p186, %p187
    %p189 = scmp.ne.s32.totalorder %s177, %s178
    %p190 = scmp.eq.s32.totalorder %s21, 1
    %p191 = por %p189, %p190
    %p193 = scmp.ne.s32.totalorder %s178, %s192
    %p194 = scmp.eq.s32.totalorder %s21, 0
    %p195 = por %p193, %p194
    %s197 = sadd.s32 %s196, 1
    %p200 = scmp.eq.s32.totalorder %s15, 1
    %p201 = scmp.ne.s32.totalorder %s196, %s198
    %p202 = scmp.eq.s32.totalorder %s15, 0
    %p203 = por %p201, %p202
    %p204 = scmp.ne.s32.totalorder %s196, %s198
    %p205 = scmp.eq.s32.totalorder %s20, 1
    %p206 = por %p204, %p205
    %p207 = scmp.ne.s32.totalorder %s198, %s199
    %p208 = scmp.eq.s32.totalorder %s20, 0
    %p209 = por %p207, %p208
    %p210 = scmp.ne.s32.totalorder %s198, %s199
    %p211 = scmp.eq.s32.totalorder %s21, 1
    %p212 = por %p210, %p211
    %p214 = scmp.ne.s32.totalorder %s199, %s213
    %p215 = scmp.eq.s32.totalorder %s21, 0
    %p216 = por %p214, %p215
    %s217 = ssub.s32 %s15, %s22
    %p218 = scmp.eq.s32.totalorder %s217, 0
    %s220 = sadd.s32 %s219, 1
    %s221 = scalar_select %p218, %s219, %s220
    %p224 = pneg %p218
    %p225 = scmp.eq.s32.totalorder %s15, 1
    %p226 = por %p224, %p225
    %p227 = scmp.ne.s32.totalorder %s219, %s222
    %p228 = scmp.eq.s32.totalorder %s15, 0
    %p229 = por %p227, %p228
    %p230 = scmp.ne.s32.totalorder %s219, %s222
    %p231 = scmp.eq.s32.totalorder %s20, 1
    %p232 = por %p230, %p231
    %p233 = scmp.ne.s32.totalorder %s222, %s223
    %p234 = scmp.eq.s32.totalorder %s20, 0
    %p235 = por %p233, %p234
    %p236 = scmp.ne.s32.totalorder %s222, %s223
    %p237 = scmp.eq.s32.totalorder %s21, 1
    %p238 = por %p236, %p237
    %p240 = scmp.ne.s32.totalorder %s223, %s239
    %p241 = scmp.eq.s32.totalorder %s21, 0
    %p242 = por %p240, %p241
    %p243 = scmp.le.s32.totalorder 1, %s15
    %p244 = scmp.lt.s32.totalorder %s15, 3
    %p245 = pnand %p243, %p244
    %p246 = pneg %p245
    // Predicated region
    $region9: #{tpu_custom_call.1} parent=5 // pred_check
      _
    $region10: #{tpu_custom_call.1} parent=5 // pred_check_branch
      %248 = sbr.rel (%p245) target = $region12
    $region11: #{tpu_custom_call.1} parent=5 // pred_region
      %s249 = ssub.s32 %s15, 1
      // Predicated region
      $region13: #{tpu_custom_call.1} parent=11 // pred_check
        %p250 = pneg %p62
      $region14: #{tpu_custom_call.1} parent=11 // pred_check_branch
        %252 = sbr.rel (%p250) target = $region16
      $region15: #{tpu_custom_call.1} parent=11 // pred_region
        _
      $region16: #{tpu_custom_call.1} parent=11 // pred_fallthru
        _
      // Predicated region
      $region17: #{tpu_custom_call.1} parent=11 // pred_check
        %p253 = pneg %p83
      $region18: #{tpu_custom_call.1} parent=11 // pred_check_branch
        %255 = sbr.rel (%p253) target = $region20
      $region19: #{tpu_custom_call.1} parent=11 // pred_region
        _
      $region20: #{tpu_custom_call.1} parent=11 // pred_fallthru
        _
      // Predicated region
      $region21: #{tpu_custom_call.1} parent=11 // pred_check
        %p256 = pneg %p104
      $region22: #{tpu_custom_call.1} parent=11 // pred_check_branch
        %258 = sbr.rel (%p256) target = $region24
      $region23: #{tpu_custom_call.1} parent=11 // pred_region
        _
      $region24: #{tpu_custom_call.1} parent=11 // pred_fallthru
        _
      // Predicated region
      $region25: #{tpu_custom_call.1} parent=11 // pred_check
        %p259 = pneg %p125
      $region26: #{tpu_custom_call.1} parent=11 // pred_check_branch
        %261 = sbr.rel (%p259) target = $region28
      $region27: #{tpu_custom_call.1} parent=11 // pred_region
        _
      $region28: #{tpu_custom_call.1} parent=11 // pred_fallthru
        _
      // Predicated region
      $region29: #{tpu_custom_call.1} parent=11 // pred_check
        %p262 = pneg %p146
      $region30: #{tpu_custom_call.1} parent=11 // pred_check_branch
        %264 = sbr.rel (%p262) target = $region32
      $region31: #{tpu_custom_call.1} parent=11 // pred_region
        _
      $region32: #{tpu_custom_call.1} parent=11 // pred_fallthru
        _
      // Predicated region
      $region33: #{tpu_custom_call.1} parent=11 // pred_check
        %p265 = pneg %p167
      $region34: #{tpu_custom_call.1} parent=11 // pred_check_branch
        %267 = sbr.rel (%p265) target = $region36
      $region35: #{tpu_custom_call.1} parent=11 // pred_region
        _
      $region36: #{tpu_custom_call.1} parent=11 // pred_fallthru
        _
      // Predicated region
      $region37: #{tpu_custom_call.1} parent=11 // pred_check
        %p268 = pneg %p188
      $region38: #{tpu_custom_call.1} parent=11 // pred_check_branch
        %270 = sbr.rel (%p268) target = $region40
      $region39: #{tpu_custom_call.1} parent=11 // pred_region
        _
      $region40: #{tpu_custom_call.1} parent=11 // pred_fallthru
        _
      // Predicated region
      $region41: #{tpu_custom_call.1} parent=11 // pred_check
        %p271 = pneg %p209
      $region42: #{tpu_custom_call.1} parent=11 // pred_check_branch
        %273 = sbr.rel (%p271) target = $region44
      $region43: #{tpu_custom_call.1} parent=11 // pred_region
        _
      $region44: #{tpu_custom_call.1} parent=11 // pred_fallthru
        _
    $region12: #{tpu_custom_call.1} parent=5 // pred_fallthru
      _
    %p274 = scmp.lt.s32.totalorder %s15, 2
    // Predicated region
    $region45: #{tpu_custom_call.1} parent=5 // pred_check
      %p275 = pneg %p274
    $region46: #{tpu_custom_call.1} parent=5 // pred_check_branch
      %277 = sbr.rel (%p275) target = $region48
    $region47: #{tpu_custom_call.1} parent=5 // pred_region
      // Predicated region
      $region49: #{tpu_custom_call.1} parent=47 // pred_check
        %p278 = pneg %p35
      $region50: #{tpu_custom_call.1} parent=47 // pred_check_branch
        %280 = sbr.rel (%p278) target = $region52
      $region51: #{tpu_custom_call.1} parent=47 // pred_region
        %p281 = scmp.lt.s32.totalorder %s15, 1
        %s282 = scalar_select %p281, %s15, 1
        %s283 = smul.addr %s282, 32
        %s284 = smul.addr %s283, 8
        %s285 = scalar_lea.vmem %s0, %s284
      $region52: #{tpu_custom_call.1} parent=47 // pred_fallthru
        _
    $region48: #{tpu_custom_call.1} parent=5 // pred_fallthru
      _
    %p286 = scmp.le.s32.totalorder 1, %s15
    %p287 = scmp.lt.s32.totalorder %s15, 3
    %p288 = pnand %p286, %p287
    %p289 = pneg %p288
    // Predicated region
    $region53: #{tpu_custom_call.1} parent=5 // pred_check
      _
    $region54: #{tpu_custom_call.1} parent=5 // pred_check_branch
      %291 = sbr.rel (%p288) target = $region56
    $region55: #{tpu_custom_call.1} parent=5 // pred_region
      %s292 = ssub.s32 %s15, 1
      %p293 = scmp.lt.s32.totalorder %s20, 1
      %s294 = scalar_select %p293, %s20, 1
      %s295 = smul.addr %s294, 32
      %s296 = smul.addr %s295, 8
      %s297 = scalar_lea.vmem %s0, %s296
      %p298 = pneg %p41
      %p299 = pneg %p38
      %p300 = pneg %p62
      %p301 = pneg %p59
      %p302 = pneg %p83
      %p303 = pneg %p80
      %p304 = pneg %p104
      %p305 = pneg %p101
      %p306 = pneg %p125
      %p307 = pneg %p122
      %p308 = pneg %p146
      %p309 = pneg %p143
      %p310 = pneg %p167
      %p311 = pneg %p164
      %p312 = pneg %p188
      %p313 = pneg %p185
      %p314 = pneg %p209
      %p315 = pneg %p206
      %p316 = pneg %p235
      %p317 = pneg %p232
      %p318 = scmp.lt.s32.totalorder %s20, 1
      %s319 = scalar_select %p318, %s20, 1
      %s320 = smul.addr %s319, 32
      %s321 = smul.addr %s320, 8
      %s322 = scalar_lea.vmem %s9, %s321
      %p323 = scmp.lt.s32.totalorder %s20, 1
      %s324 = scalar_select %p323, %s20, 1
      %s325 = smul.addr %s324, 32
      %s326 = smul.addr %s325, 8
      %s327 = scalar_lea.vmem %s0, %s326
      %p328 = scmp.lt.s32.totalorder %s20, 1
      %s329 = scalar_select %p328, %s20, 1
      %s330 = smul.addr %s329, 32
      %s331 = smul.addr %s330, 8
      %s332 = scalar_lea.vmem %s9, %s331
      %v333 = vld [vmem:[%s327] sm:$0xff]
      %v334 = vld [vmem:[%s327 + $0x8] sm:$0xff]
      %v335 = vld [vmem:[%s327 + $0x10] sm:$0xff]
      %v336 = vld [vmem:[%s327 + $0x18] sm:$0xff]
      %v337 = vld [vmem:[%s327 + $0x20] sm:$0xff]
      %v338 = vld [vmem:[%s327 + $0x28] sm:$0xff]
      %v339 = vld [vmem:[%s327 + $0x30] sm:$0xff]
      %v340 = vld [vmem:[%s327 + $0x38] sm:$0xff]
      %v341 = vld [vmem:[%s327 + $0x40] sm:$0xff]
      %v342 = vld [vmem:[%s327 + $0x48] sm:$0xff]
      %v343 = vld [vmem:[%s327 + $0x50] sm:$0xff]
      %v344 = vld [vmem:[%s327 + $0x58] sm:$0xff]
      %v345 = vld [vmem:[%s327 + $0x60] sm:$0xff]
      %v346 = vld [vmem:[%s327 + $0x68] sm:$0xff]
      %v347 = vld [vmem:[%s327 + $0x70] sm:$0xff]
      %v348 = vld [vmem:[%s327 + $0x78] sm:$0xff]
      %v349 = vld [vmem:[%s327 + $0x80] sm:$0xff]
      %v350 = vld [vmem:[%s327 + $0x88] sm:$0xff]
      %v351 = vld [vmem:[%s327 + $0x90] sm:$0xff]
      %v352 = vld [vmem:[%s327 + $0x98] sm:$0xff]
      %v353 = vld [vmem:[%s327 + $0xa0] sm:$0xff]
      %v354 = vld [vmem:[%s327 + $0xa8] sm:$0xff]
      %v355 = vld [vmem:[%s327 + $0xb0] sm:$0xff]
      %v356 = vld [vmem:[%s327 + $0xb8] sm:$0xff]
      %v357 = vld [vmem:[%s327 + $0xc0] sm:$0xff]
      %v358 = vld [vmem:[%s327 + $0xc8] sm:$0xff]
      %v359 = vld [vmem:[%s327 + $0xd0] sm:$0xff]
      %v360 = vld [vmem:[%s327 + $0xd8] sm:$0xff]
      %v361 = vld [vmem:[%s327 + $0xe0] sm:$0xff]
      %v362 = vld [vmem:[%s327 + $0xe8] sm:$0xff]
      %v363 = vld [vmem:[%s327 + $0xf0] sm:$0xff]
      %v364 = vld [vmem:[%s327 + $0xf8] sm:$0xff]
      %vm365 = vcmask 261120
      %366 = vst.msk [vmem:[#allocation2] sm:$0xff] %vm365, 0.0
      %367 = vst.msk [vmem:[#allocation2 + $0x8] sm:$0xff] %vm365, 0.0
      %368 = vst.msk [vmem:[#allocation2 + $0x10] sm:$0xff] %vm365, 0.0
      %369 = vst.msk [vmem:[#allocation2 + $0x118] sm:$0xff] %vm365, 0.0
      %370 = vst.msk [vmem:[#allocation2 + $0x120] sm:$0xff] %vm365, 0.0
      %371 = vst.msk [vmem:[#allocation2 + $0x128] sm:$0xff] %vm365, 0.0
      %v372 = vlaneseq
      %v373 = vshrl.u32 %v372, 7
      %v374 = vadd.s32 %v373, 8
      %v375 = vadd.s32 %v373, 16
      %v376 = vadd.s32 %v373, 24
      %v377 = vadd.s32 %v373, 32
      %v378 = vadd.s32 %v373, 40
      %v379 = vadd.s32 %v373, 48
      %v380 = vadd.s32 %v373, 56
      %v381 = vadd.s32 %v373, 64
      %v382 = vadd.s32 %v373, 72
      %v383 = vadd.s32 %v373, 80
      %v384 = vadd.s32 %v373, 88
      %v385 = vadd.s32 %v373, 96
      %v386 = vadd.s32 %v373, 104
      %v387 = vadd.s32 %v373, 112
      %v388 = vadd.s32 %v373, 120
      %v389 = vadd.s32 %v373, 128
      %v390 = vadd.s32 %v373, 136
      %v391 = vadd.s32 %v373, 144
      %v392 = vadd.s32 %v373, 152
      %v393 = vadd.s32 %v373, 160
      %v394 = vadd.s32 %v373, 168
      %v395 = vadd.s32 %v373, 176
      %v396 = vadd.s32 %v373, 184
      %v397 = vadd.s32 %v373, 192
      %v398 = vadd.s32 %v373, 200
      %v399 = vadd.s32 %v373, 208
      %v400 = vadd.s32 %v373, 216
      %v401 = vadd.s32 %v373, 224
      %v402 = vadd.s32 %v373, 232
      %v403 = vadd.s32 %v373, 240
      %v404 = vadd.s32 %v373, 248
      %vm405 = vcmp.lt.s32.totalorder %v373, 0
      %v406 = vsub.s32 0, %v373
      %v407 = vsel %vm405, %v406, %v373
      %v408 = vshrl.u32 %v407, 4
      %v409 = vand.u32 %v407, 15
      %v410 = vsub.s32 0, %v409
      %v411 = vsel %vm405, %v410, %v409
      %vm412 = vcmp.lt.s32.totalorder %v374, 0
      %v413 = vsub.s32 0, %v374
      %v414 = vsel %vm412, %v413, %v374
      %v415 = vshrl.u32 %v414, 4
      %v416 = vand.u32 %v414, 15
      %v417 = vsub.s32 0, %v416
      %v418 = vsel %vm412, %v417, %v416
      %vm419 = vcmp.lt.s32.totalorder %v375, 0
      %v420 = vsub.s32 0, %v375
      %v421 = vsel %vm419, %v420, %v375
      %v422 = vshrl.u32 %v421, 4
      %v423 = vand.u32 %v421, 15
      %v424 = vsub.s32 0, %v423
      %v425 = vsel %vm419, %v424, %v423
      %vm426 = vcmp.lt.s32.totalorder %v376, 0
      %v427 = vsub.s32 0, %v376
      %v428 = vsel %vm426, %v427, %v376
      %v429 = vshrl.u32 %v428, 4
      %v430 = vand.u32 %v428, 15
      %v431 = vsub.s32 0, %v430
      %v432 = vsel %vm426, %v431, %v430
      %vm433 = vcmp.lt.s32.totalorder %v377, 0
      %v434 = vsub.s32 0, %v377
      %v435 = vsel %vm433, %v434, %v377
      %v436 = vshrl.u32 %v435, 4
      %v437 = vand.u32 %v435, 15
      %v438 = vsub.s32 0, %v437
      %v439 = vsel %vm433, %v438, %v437
      %vm440 = vcmp.lt.s32.totalorder %v378, 0
      %v441 = vsub.s32 0, %v378
      %v442 = vsel %vm440, %v441, %v378
      %v443 = vshrl.u32 %v442, 4
      %v444 = vand.u32 %v442, 15
      %v445 = vsub.s32 0, %v444
      %v446 = vsel %vm440, %v445, %v444
      %vm447 = vcmp.lt.s32.totalorder %v379, 0
      %v448 = vsub.s32 0, %v379
      %v449 = vsel %vm447, %v448, %v379
      %v450 = vshrl.u32 %v449, 4
      %v451 = vand.u32 %v449, 15
      %v452 = vsub.s32 0, %v451
      %v453 = vsel %vm447, %v452, %v451
      %vm454 = vcmp.lt.s32.totalorder %v380, 0
      %v455 = vsub.s32 0, %v380
      %v456 = vsel %vm454, %v455, %v380
      %v457 = vshrl.u32 %v456, 4
      %v458 = vand.u32 %v456, 15
      %v459 = vsub.s32 0, %v458
      %v460 = vsel %vm454, %v459, %v458
      %vm461 = vcmp.lt.s32.totalorder %v381, 0
      %v462 = vsub.s32 0, %v381
      %v463 = vsel %vm461, %v462, %v381
      %v464 = vshrl.u32 %v463, 4
      %v465 = vand.u32 %v463, 15
      %v466 = vsub.s32 0, %v465
      %v467 = vsel %vm461, %v466, %v465
      %vm468 = vcmp.lt.s32.totalorder %v382, 0
      %v469 = vsub.s32 0, %v382
      %v470 = vsel %vm468, %v469, %v382
      %v471 = vshrl.u32 %v470, 4
      %v472 = vand.u32 %v470, 15
      %v473 = vsub.s32 0, %v472
      %v474 = vsel %vm468, %v473, %v472
      %vm475 = vcmp.lt.s32.totalorder %v383, 0
      %v476 = vsub.s32 0, %v383
      %v477 = vsel %vm475, %v476, %v383
      %v478 = vshrl.u32 %v477, 4
      %v479 = vand.u32 %v477, 15
      %v480 = vsub.s32 0, %v479
      %v481 = vsel %vm475, %v480, %v479
      %vm482 = vcmp.lt.s32.totalorder %v384, 0
      %v483 = vsub.s32 0, %v384
      %v484 = vsel %vm482, %v483, %v384
      %v485 = vshrl.u32 %v484, 4
      %v486 = vand.u32 %v484, 15
      %v487 = vsub.s32 0, %v486
      %v488 = vsel %vm482, %v487, %v486
      %vm489 = vcmp.lt.s32.totalorder %v385, 0
      %v490 = vsub.s32 0, %v385
      %v491 = vsel %vm489, %v490, %v385
      %v492 = vshrl.u32 %v491, 4
      %v493 = vand.u32 %v491, 15
      %v494 = vsub.s32 0, %v493
      %v495 = vsel %vm489, %v494, %v493
      %vm496 = vcmp.lt.s32.totalorder %v386, 0
      %v497 = vsub.s32 0, %v386
      %v498 = vsel %vm496, %v497, %v386
      %v499 = vshrl.u32 %v498, 4
      %v500 = vand.u32 %v498, 15
      %v501 = vsub.s32 0, %v500
      %v502 = vsel %vm496, %v501, %v500
      %vm503 = vcmp.lt.s32.totalorder %v387, 0
      %v504 = vsub.s32 0, %v387
      %v505 = vsel %vm503, %v504, %v387
      %v506 = vshrl.u32 %v505, 4
      %v507 = vand.u32 %v505, 15
      %v508 = vsub.s32 0, %v507
      %v509 = vsel %vm503, %v508, %v507
      %vm510 = vcmp.lt.s32.totalorder %v388, 0
      %v511 = vsub.s32 0, %v388
      %v512 = vsel %vm510, %v511, %v388
      %v513 = vshrl.u32 %v512, 4
      %v514 = vand.u32 %v512, 15
      %v515 = vsub.s32 0, %v514
      %v516 = vsel %vm510, %v515, %v514
      %vm517 = vcmp.lt.s32.totalorder %v389, 0
      %v518 = vsub.s32 0, %v389
      %v519 = vsel %vm517, %v518, %v389
      %v520 = vshrl.u32 %v519, 4
      %v521 = vand.u32 %v519, 15
      %v522 = vsub.s32 0, %v521
      %v523 = vsel %vm517, %v522, %v521
      %vm524 = vcmp.lt.s32.totalorder %v390, 0
      %v525 = vsub.s32 0, %v390
      %v526 = vsel %vm524, %v525, %v390
      %v527 = vshrl.u32 %v526, 4
      %v528 = vand.u32 %v526, 15
      %v529 = vsub.s32 0, %v528
      %v530 = vsel %vm524, %v529, %v528
      %vm531 = vcmp.lt.s32.totalorder %v391, 0
      %v532 = vsub.s32 0, %v391
      %v533 = vsel %vm531, %v532, %v391
      %v534 = vshrl.u32 %v533, 4
      %v535 = vand.u32 %v533, 15
      %v536 = vsub.s32 0, %v535
      %v537 = vsel %vm531, %v536, %v535
      %vm538 = vcmp.lt.s32.totalorder %v392, 0
      %v539 = vsub.s32 0, %v392
      %v540 = vsel %vm538, %v539, %v392
      %v541 = vshrl.u32 %v540, 4
      %v542 = vand.u32 %v540, 15
      %v543 = vsub.s32 0, %v542
      %v544 = vsel %vm538, %v543, %v542
      %vm545 = vcmp.lt.s32.totalorder %v393, 0
      %v546 = vsub.s32 0, %v393
      %v547 = vsel %vm545, %v546, %v393
      %v548 = vshrl.u32 %v547, 4
      %v549 = vand.u32 %v547, 15
      %v550 = vsub.s32 0, %v549
      %v551 = vsel %vm545, %v550, %v549
      %vm552 = vcmp.lt.s32.totalorder %v394, 0
      %v553 = vsub.s32 0, %v394
      %v554 = vsel %vm552, %v553, %v394
      %v555 = vshrl.u32 %v554, 4
      %v556 = vand.u32 %v554, 15
      %v557 = vsub.s32 0, %v556
      %v558 = vsel %vm552, %v557, %v556
      %vm559 = vcmp.lt.s32.totalorder %v395, 0
      %v560 = vsub.s32 0, %v395
      %v561 = vsel %vm559, %v560, %v395
      %v562 = vshrl.u32 %v561, 4
      %v563 = vand.u32 %v561, 15
      %v564 = vsub.s32 0, %v563
      %v565 = vsel %vm559, %v564, %v563
      %vm566 = vcmp.lt.s32.totalorder %v396, 0
      %v567 = vsub.s32 0, %v396
      %v568 = vsel %vm566, %v567, %v396
      %v569 = vshrl.u32 %v568, 4
      %v570 = vand.u32 %v568, 15
      %v571 = vsub.s32 0, %v570
      %v572 = vsel %vm566, %v571, %v570
      %vm573 = vcmp.lt.s32.totalorder %v397, 0
      %v574 = vsub.s32 0, %v397
      %v575 = vsel %vm573, %v574, %v397
      %v576 = vshrl.u32 %v575, 4
      %v577 = vand.u32 %v575, 15
      %v578 = vsub.s32 0, %v577
      %v579 = vsel %vm573, %v578, %v577
      %vm580 = vcmp.lt.s32.totalorder %v398, 0
      %v581 = vsub.s32 0, %v398
      %v582 = vsel %vm580, %v581, %v398
      %v583 = vshrl.u32 %v582, 4
      %v584 = vand.u32 %v582, 15
      %v585 = vsub.s32 0, %v584
      %v586 = vsel %vm580, %v585, %v584
      %vm587 = vcmp.lt.s32.totalorder %v399, 0
      %v588 = vsub.s32 0, %v399
      %v589 = vsel %vm587, %v588, %v399
      %v590 = vshrl.u32 %v589, 4
      %v591 = vand.u32 %v589, 15
      %v592 = vsub.s32 0, %v591
      %v593 = vsel %vm587, %v592, %v591
      %vm594 = vcmp.lt.s32.totalorder %v400, 0
      %v595 = vsub.s32 0, %v400
      %v596 = vsel %vm594, %v595, %v400
      %v597 = vshrl.u32 %v596, 4
      %v598 = vand.u32 %v596, 15
      %v599 = vsub.s32 0, %v598
      %v600 = vsel %vm594, %v599, %v598
      %vm601 = vcmp.lt.s32.totalorder %v401, 0
      %v602 = vsub.s32 0, %v401
      %v603 = vsel %vm601, %v602, %v401
      %v604 = vshrl.u32 %v603, 4
      %v605 = vand.u32 %v603, 15
      %v606 = vsub.s32 0, %v605
      %v607 = vsel %vm601, %v606, %v605
      %vm608 = vcmp.lt.s32.totalorder %v402, 0
      %v609 = vsub.s32 0, %v402
      %v610 = vsel %vm608, %v609, %v402
      %v611 = vshrl.u32 %v610, 4
      %v612 = vand.u32 %v610, 15
      %v613 = vsub.s32 0, %v612
      %v614 = vsel %vm608, %v613, %v612
      %vm615 = vcmp.lt.s32.totalorder %v403, 0
      %v616 = vsub.s32 0, %v403
      %v617 = vsel %vm615, %v616, %v403
      %v618 = vshrl.u32 %v617, 4
      %v619 = vand.u32 %v617, 15
      %v620 = vsub.s32 0, %v619
      %v621 = vsel %vm615, %v620, %v619
      %vm622 = vcmp.lt.s32.totalorder %v404, 0
      %v623 = vsub.s32 0, %v404
      %v624 = vsel %vm622, %v623, %v404
      %v625 = vshrl.u32 %v624, 4
      %v626 = vand.u32 %v624, 15
      %v627 = vsub.s32 0, %v626
      %v628 = vsel %vm622, %v627, %v626
      %vm629 = vcmp.gt.s32.totalorder %v411, 0
      %vm630 = vcmp.gt.s32.totalorder %v418, 0
      %vm631 = vcmp.gt.s32.totalorder %v425, 0
      %vm632 = vcmp.gt.s32.totalorder %v432, 0
      %vm633 = vcmp.gt.s32.totalorder %v439, 0
      %vm634 = vcmp.gt.s32.totalorder %v446, 0
      %vm635 = vcmp.gt.s32.totalorder %v453, 0
      %vm636 = vcmp.gt.s32.totalorder %v460, 0
      %vm637 = vcmp.gt.s32.totalorder %v467, 0
      %vm638 = vcmp.gt.s32.totalorder %v474, 0
      %vm639 = vcmp.gt.s32.totalorder %v481, 0
      %vm640 = vcmp.gt.s32.totalorder %v488, 0
      %vm641 = vcmp.gt.s32.totalorder %v495, 0
      %vm642 = vcmp.gt.s32.totalorder %v502, 0
      %vm643 = vcmp.gt.s32.totalorder %v509, 0
      %vm644 = vcmp.gt.s32.totalorder %v516, 0
      %vm645 = vcmp.gt.s32.totalorder %v523, 0
      %vm646 = vcmp.gt.s32.totalorder %v530, 0
      %vm647 = vcmp.gt.s32.totalorder %v537, 0
      %vm648 = vcmp.gt.s32.totalorder %v544, 0
      %vm649 = vcmp.gt.s32.totalorder %v551, 0
      %vm650 = vcmp.gt.s32.totalorder %v558, 0
      %vm651 = vcmp.gt.s32.totalorder %v565, 0
      %vm652 = vcmp.gt.s32.totalorder %v572, 0
      %vm653 = vcmp.gt.s32.totalorder %v579, 0
      %vm654 = vcmp.gt.s32.totalorder %v586, 0
      %vm655 = vcmp.gt.s32.totalorder %v593, 0
      %vm656 = vcmp.gt.s32.totalorder %v600, 0
      %vm657 = vcmp.gt.s32.totalorder %v607, 0
      %vm658 = vcmp.gt.s32.totalorder %v614, 0
      %vm659 = vcmp.gt.s32.totalorder %v621, 0
      %vm660 = vcmp.gt.s32.totalorder %v628, 0
      %vm661 = vcmp.lt.s32.totalorder %v411, 15
      %vm662 = vcmp.lt.s32.totalorder %v418, 15
      %vm663 = vcmp.lt.s32.totalorder %v425, 15
      %vm664 = vcmp.lt.s32.totalorder %v432, 15
      %vm665 = vcmp.lt.s32.totalorder %v439, 15
      %vm666 = vcmp.lt.s32.totalorder %v446, 15
      %vm667 = vcmp.lt.s32.totalorder %v453, 15
      %vm668 = vcmp.lt.s32.totalorder %v460, 15
      %vm669 = vcmp.lt.s32.totalorder %v467, 15
      %vm670 = vcmp.lt.s32.totalorder %v474, 15
      %vm671 = vcmp.lt.s32.totalorder %v481, 15
      %vm672 = vcmp.lt.s32.totalorder %v488, 15
      %vm673 = vcmp.lt.s32.totalorder %v495, 15
      %vm674 = vcmp.lt.s32.totalorder %v502, 15
      %vm675 = vcmp.lt.s32.totalorder %v509, 15
      %vm676 = vcmp.lt.s32.totalorder %v516, 15
      %vm677 = vcmp.lt.s32.totalorder %v523, 15
      %vm678 = vcmp.lt.s32.totalorder %v530, 15
      %vm679 = vcmp.lt.s32.totalorder %v537, 15
      %vm680 = vcmp.lt.s32.totalorder %v544, 15
      %vm681 = vcmp.lt.s32.totalorder %v551, 15
      %vm682 = vcmp.lt.s32.totalorder %v558, 15
      %vm683 = vcmp.lt.s32.totalorder %v565, 15
      %vm684 = vcmp.lt.s32.totalorder %v572, 15
      %vm685 = vcmp.lt.s32.totalorder %v579, 15
      %vm686 = vcmp.lt.s32.totalorder %v586, 15
      %vm687 = vcmp.lt.s32.totalorder %v593, 15
      %vm688 = vcmp.lt.s32.totalorder %v600, 15
      %vm689 = vcmp.lt.s32.totalorder %v607, 15
      %vm690 = vcmp.lt.s32.totalorder %v614, 15
      %vm691 = vcmp.lt.s32.totalorder %v621, 15
      %vm692 = vcmp.lt.s32.totalorder %v628, 15
      %693 = vst.msk [vmem:[#allocation2 + $0x18] sm:$0xff] %vm365, %v333
      %694 = vst.msk [vmem:[#allocation2 + $0x20] sm:$0xff] %vm365, %v334
      %695 = vst.msk [vmem:[#allocation2 + $0x28] sm:$0xff] %vm365, %v335
      %696 = vst.msk [vmem:[#allocation2 + $0x30] sm:$0xff] %vm365, %v336
      %697 = vst.msk [vmem:[#allocation2 + $0x38] sm:$0xff] %vm365, %v337
      %698 = vst.msk [vmem:[#allocation2 + $0x40] sm:$0xff] %vm365, %v338
      %699 = vst.msk [vmem:[#allocation2 + $0x48] sm:$0xff] %vm365, %v339
      %700 = vst.msk [vmem:[#allocation2 + $0x50] sm:$0xff] %vm365, %v340
      %701 = vst.msk [vmem:[#allocation2 + $0x58] sm:$0xff] %vm365, %v341
      %702 = vst.msk [vmem:[#allocation2 + $0x60] sm:$0xff] %vm365, %v342
      %703 = vst.msk [vmem:[#allocation2 + $0x68] sm:$0xff] %vm365, %v343
      %704 = vst.msk [vmem:[#allocation2 + $0x70] sm:$0xff] %vm365, %v344
      %705 = vst.msk [vmem:[#allocation2 + $0x78] sm:$0xff] %vm365, %v345
      %706 = vst.msk [vmem:[#allocation2 + $0x80] sm:$0xff] %vm365, %v346
      %707 = vst.msk [vmem:[#allocation2 + $0x88] sm:$0xff] %vm365, %v347
      %708 = vst.msk [vmem:[#allocation2 + $0x90] sm:$0xff] %vm365, %v348
      %709 = vst.msk [vmem:[#allocation2 + $0x98] sm:$0xff] %vm365, %v349
      %710 = vst.msk [vmem:[#allocation2 + $0xa0] sm:$0xff] %vm365, %v350
      %711 = vst.msk [vmem:[#allocation2 + $0xa8] sm:$0xff] %vm365, %v351
      %712 = vst.msk [vmem:[#allocation2 + $0xb0] sm:$0xff] %vm365, %v352
      %713 = vst.msk [vmem:[#allocation2 + $0xb8] sm:$0xff] %vm365, %v353
      %714 = vst.msk [vmem:[#allocation2 + $0xc0] sm:$0xff] %vm365, %v354
      %715 = vst.msk [vmem:[#allocation2 + $0xc8] sm:$0xff] %vm365, %v355
      %716 = vst.msk [vmem:[#allocation2 + $0xd0] sm:$0xff] %vm365, %v356
      %717 = vst.msk [vmem:[#allocation2 + $0xd8] sm:$0xff] %vm365, %v357
      %718 = vst.msk [vmem:[#allocation2 + $0xe0] sm:$0xff] %vm365, %v358
      %719 = vst.msk [vmem:[#allocation2 + $0xe8] sm:$0xff] %vm365, %v359
      %720 = vst.msk [vmem:[#allocation2 + $0xf0] sm:$0xff] %vm365, %v360
      %721 = vst.msk [vmem:[#allocation2 + $0xf8] sm:$0xff] %vm365, %v361
      %722 = vst.msk [vmem:[#allocation2 + $0x100] sm:$0xff] %vm365, %v362
      %723 = vst.msk [vmem:[#allocation2 + $0x108] sm:$0xff] %vm365, %v363
      %724 = vst.msk [vmem:[#allocation2 + $0x110] sm:$0xff] %vm365, %v364
      %v725 = vld [vmem:[#allocation2 + $0x7] sm:$0xff]
      %v726 = vld [vmem:[#allocation2 + $0xf] sm:$0xff]
      %v727 = vld [vmem:[#allocation2 + $0x17] sm:$0xff]
      %v728 = vld [vmem:[#allocation2 + $0x1f] sm:$0xff]
      %v729 = vld [vmem:[#allocation2 + $0x27] sm:$0xff]
      %v730 = vld [vmem:[#allocation2 + $0x2f] sm:$0xff]
      %v731 = vld [vmem:[#allocation2 + $0x37] sm:$0xff]
      %v732 = vld [vmem:[#allocation2 + $0x3f] sm:$0xff]
      %v733 = vld [vmem:[#allocation2 + $0x47] sm:$0xff]
      %v734 = vld [vmem:[#allocation2 + $0x4f] sm:$0xff]
      %v735 = vld [vmem:[#allocation2 + $0x57] sm:$0xff]
      %v736 = vld [vmem:[#allocation2 + $0x5f] sm:$0xff]
      %v737 = vld [vmem:[#allocation2 + $0x67] sm:$0xff]
      %v738 = vld [vmem:[#allocation2 + $0x6f] sm:$0xff]
      %v739 = vld [vmem:[#allocation2 + $0x77] sm:$0xff]
      %v740 = vld [vmem:[#allocation2 + $0x7f] sm:$0xff]
      %v741 = vld [vmem:[#allocation2 + $0x87] sm:$0xff]
      %v742 = vld [vmem:[#allocation2 + $0x8f] sm:$0xff]
      %v743 = vld [vmem:[#allocation2 + $0x97] sm:$0xff]
      %v744 = vld [vmem:[#allocation2 + $0x9f] sm:$0xff]
      %v745 = vld [vmem:[#allocation2 + $0xa7] sm:$0xff]
      %v746 = vld [vmem:[#allocation2 + $0xaf] sm:$0xff]
      %v747 = vld [vmem:[#allocation2 + $0xb7] sm:$0xff]
      %v748 = vld [vmem:[#allocation2 + $0xbf] sm:$0xff]
      %v749 = vld [vmem:[#allocation2 + $0xc7] sm:$0xff]
      %v750 = vld [vmem:[#allocation2 + $0xcf] sm:$0xff]
      %v751 = vld [vmem:[#allocation2 + $0xd7] sm:$0xff]
      %v752 = vld [vmem:[#allocation2 + $0xdf] sm:$0xff]
      %v753 = vld [vmem:[#allocation2 + $0xe7] sm:$0xff]
      %v754 = vld [vmem:[#allocation2 + $0xef] sm:$0xff]
      %v755 = vld [vmem:[#allocation2 + $0xf7] sm:$0xff]
      %v756 = vld [vmem:[#allocation2 + $0xff] sm:$0xff]
      %v757 = vsel %vm629, 1, 0
      %v758 = vsel %vm630, 1, 0
      %v759 = vsel %vm631, 1, 0
      %v760 = vsel %vm632, 1, 0
      %v761 = vsel %vm633, 1, 0
      %v762 = vsel %vm634, 1, 0
      %v763 = vsel %vm635, 1, 0
      %v764 = vsel %vm636, 1, 0
      %v765 = vsel %vm637, 1, 0
      %v766 = vsel %vm638, 1, 0
      %v767 = vsel %vm639, 1, 0
      %v768 = vsel %vm640, 1, 0
      %v769 = vsel %vm641, 1, 0
      %v770 = vsel %vm642, 1, 0
      %v771 = vsel %vm643, 1, 0
      %v772 = vsel %vm644, 1, 0
      %v773 = vsel %vm645, 1, 0
      %v774 = vsel %vm646, 1, 0
      %v775 = vsel %vm647, 1, 0
      %v776 = vsel %vm648, 1, 0
      %v777 = vsel %vm649, 1, 0
      %v778 = vsel %vm650, 1, 0
      %v779 = vsel %vm651, 1, 0
      %v780 = vsel %vm652, 1, 0
      %v781 = vsel %vm653, 1, 0
      %v782 = vsel %vm654, 1, 0
      %v783 = vsel %vm655, 1, 0
      %v784 = vsel %vm656, 1, 0
      %v785 = vsel %vm657, 1, 0
      %v786 = vsel %vm658, 1, 0
      %v787 = vsel %vm659, 1, 0
      %v788 = vsel %vm660, 1, 0
      %vm789 = vcmp.eq.s32.totalorder %v757, 1
      %vm790 = vcmp.eq.s32.totalorder %v758, 1
      %vm791 = vcmp.eq.s32.totalorder %v759, 1
      %vm792 = vcmp.eq.s32.totalorder %v760, 1
      %vm793 = vcmp.eq.s32.totalorder %v761, 1
      %vm794 = vcmp.eq.s32.totalorder %v762, 1
      %vm795 = vcmp.eq.s32.totalorder %v763, 1
      %vm796 = vcmp.eq.s32.totalorder %v764, 1
      %vm797 = vcmp.eq.s32.totalorder %v765, 1
      %vm798 = vcmp.eq.s32.totalorder %v766, 1
      %vm799 = vcmp.eq.s32.totalorder %v767, 1
      %vm800 = vcmp.eq.s32.totalorder %v768, 1
      %vm801 = vcmp.eq.s32.totalorder %v769, 1
      %vm802 = vcmp.eq.s32.totalorder %v770, 1
      %vm803 = vcmp.eq.s32.totalorder %v771, 1
      %vm804 = vcmp.eq.s32.totalorder %v772, 1
      %vm805 = vcmp.eq.s32.totalorder %v773, 1
      %vm806 = vcmp.eq.s32.totalorder %v774, 1
      %vm807 = vcmp.eq.s32.totalorder %v775, 1
      %vm808 = vcmp.eq.s32.totalorder %v776, 1
      %vm809 = vcmp.eq.s32.totalorder %v777, 1
      %vm810 = vcmp.eq.s32.totalorder %v778, 1
      %vm811 = vcmp.eq.s32.totalorder %v779, 1
      %vm812 = vcmp.eq.s32.totalorder %v780, 1
      %vm813 = vcmp.eq.s32.totalorder %v781, 1
      %vm814 = vcmp.eq.s32.totalorder %v782, 1
      %vm815 = vcmp.eq.s32.totalorder %v783, 1
      %vm816 = vcmp.eq.s32.totalorder %v784, 1
      %vm817 = vcmp.eq.s32.totalorder %v785, 1
      %vm818 = vcmp.eq.s32.totalorder %v786, 1
      %vm819 = vcmp.eq.s32.totalorder %v787, 1
      %vm820 = vcmp.eq.s32.totalorder %v788, 1
      %v821 = vsel %vm789, %v725, 0.0
      %v822 = vsel %vm790, %v726, 0.0
      %v823 = vsel %vm791, %v727, 0.0
      %v824 = vsel %vm792, %v728, 0.0
      %v825 = vsel %vm793, %v729, 0.0
      %v826 = vsel %vm794, %v730, 0.0
      %v827 = vsel %vm795, %v731, 0.0
      %v828 = vsel %vm796, %v732, 0.0
      %v829 = vsel %vm797, %v733, 0.0
      %v830 = vsel %vm798, %v734, 0.0
      %v831 = vsel %vm799, %v735, 0.0
      %v832 = vsel %vm800, %v736, 0.0
      %v833 = vsel %vm801, %v737, 0.0
      %v834 = vsel %vm802, %v738, 0.0
      %v835 = vsel %vm803, %v739, 0.0
      %v836 = vsel %vm804, %v740, 0.0
      %v837 = vsel %vm805, %v741, 0.0
      %v838 = vsel %vm806, %v742, 0.0
      %v839 = vsel %vm807, %v743, 0.0
      %v840 = vsel %vm808, %v744, 0.0
      %v841 = vsel %vm809, %v745, 0.0
      %v842 = vsel %vm810, %v746, 0.0
      %v843 = vsel %vm811, %v747, 0.0
      %v844 = vsel %vm812, %v748, 0.0
      %v845 = vsel %vm813, %v749, 0.0
      %v846 = vsel %vm814, %v750, 0.0
      %v847 = vsel %vm815, %v751, 0.0
      %v848 = vsel %vm816, %v752, 0.0
      %v849 = vsel %vm817, %v753, 0.0
      %v850 = vsel %vm818, %v754, 0.0
      %v851 = vsel %vm819, %v755, 0.0
      %v852 = vsel %vm820, %v756, 0.0
      %853 = vst.msk [vmem:[#allocation3] sm:$0xff] %vm365, %v821
      %854 = vst.msk [vmem:[#allocation3 + $0x18] sm:$0xff] %vm365, %v822
      %855 = vst.msk [vmem:[#allocation3 + $0x30] sm:$0xff] %vm365, %v823
      %856 = vst.msk [vmem:[#allocation3 + $0x48] sm:$0xff] %vm365, %v824
      %857 = vst.msk [vmem:[#allocation3 + $0x60] sm:$0xff] %vm365, %v825
      %858 = vst.msk [vmem:[#allocation3 + $0x78] sm:$0xff] %vm365, %v826
      %859 = vst.msk [vmem:[#allocation3 + $0x90] sm:$0xff] %vm365, %v827
      %860 = vst.msk [vmem:[#allocation3 + $0xa8] sm:$0xff] %vm365, %v828
      %861 = vst.msk [vmem:[#allocation3 + $0xc0] sm:$0xff] %vm365, %v829
      %862 = vst.msk [vmem:[#allocation3 + $0xd8] sm:$0xff] %vm365, %v830
      %863 = vst.msk [vmem:[#allocation3 + $0xf0] sm:$0xff] %vm365, %v831
      %864 = vst.msk [vmem:[#allocation3 + $0x108] sm:$0xff] %vm365, %v832
      %865 = vst.msk [vmem:[#allocation3 + $0x120] sm:$0xff] %vm365, %v833
      %866 = vst.msk [vmem:[#allocation3 + $0x138] sm:$0xff] %vm365, %v834
      %867 = vst.msk [vmem:[#allocation3 + $0x150] sm:$0xff] %vm365, %v835
      %868 = vst.msk [vmem:[#allocation3 + $0x168] sm:$0xff] %vm365, %v836
      %869 = vst.msk [vmem:[#allocation3 + $0x180] sm:$0xff] %vm365, %v837
      %870 = vst.msk [vmem:[#allocation3 + $0x198] sm:$0xff] %vm365, %v838
      %871 = vst.msk [vmem:[#allocation3 + $0x1b0] sm:$0xff] %vm365, %v839
      %872 = vst.msk [vmem:[#allocation3 + $0x1c8] sm:$0xff] %vm365, %v840
      %873 = vst.msk [vmem:[#allocation3 + $0x1e0] sm:$0xff] %vm365, %v841
      %874 = vst.msk [vmem:[#allocation3 + $0x1f8] sm:$0xff] %vm365, %v842
      %875 = vst.msk [vmem:[#allocation3 + $0x210] sm:$0xff] %vm365, %v843
      %876 = vst.msk [vmem:[#allocation3 + $0x228] sm:$0xff] %vm365, %v844
      %877 = vst.msk [vmem:[#allocation3 + $0x240] sm:$0xff] %vm365, %v845
      %878 = vst.msk [vmem:[#allocation3 + $0x258] sm:$0xff] %vm365, %v846
      %879 = vst.msk [vmem:[#allocation3 + $0x270] sm:$0xff] %vm365, %v847
      %880 = vst.msk [vmem:[#allocation3 + $0x288] sm:$0xff] %vm365, %v848
      %881 = vst.msk [vmem:[#allocation3 + $0x2a0] sm:$0xff] %vm365, %v849
      %882 = vst.msk [vmem:[#allocation3 + $0x2b8] sm:$0xff] %vm365, %v850
      %883 = vst.msk [vmem:[#allocation3 + $0x2d0] sm:$0xff] %vm365, %v851
      %884 = vst.msk [vmem:[#allocation3 + $0x2e8] sm:$0xff] %vm365, %v852
      %v885 = vld [vmem:[#allocation2 + $0x8] sm:$0xff]
      %v886 = vld [vmem:[#allocation2 + $0x10] sm:$0xff]
      %v887 = vld [vmem:[#allocation2 + $0x18] sm:$0xff]
      %v888 = vld [vmem:[#allocation2 + $0x20] sm:$0xff]
      %v889 = vld [vmem:[#allocation2 + $0x28] sm:$0xff]
      %v890 = vld [vmem:[#allocation2 + $0x30] sm:$0xff]
      %v891 = vld [vmem:[#allocation2 + $0x38] sm:$0xff]
      %v892 = vld [vmem:[#allocation2 + $0x40] sm:$0xff]
      %v893 = vld [vmem:[#allocation2 + $0x48] sm:$0xff]
      %v894 = vld [vmem:[#allocation2 + $0x50] sm:$0xff]
      %v895 = vld [vmem:[#allocation2 + $0x58] sm:$0xff]
      %v896 = vld [vmem:[#allocation2 + $0x60] sm:$0xff]
      %v897 = vld [vmem:[#allocation2 + $0x68] sm:$0xff]
      %v898 = vld [vmem:[#allocation2 + $0x70] sm:$0xff]
      %v899 = vld [vmem:[#allocation2 + $0x78] sm:$0xff]
      %v900 = vld [vmem:[#allocation2 + $0x80] sm:$0xff]
      %v901 = vld [vmem:[#allocation2 + $0x88] sm:$0xff]
      %v902 = vld [vmem:[#allocation2 + $0x90] sm:$0xff]
      %v903 = vld [vmem:[#allocation2 + $0x98] sm:$0xff]
      %v904 = vld [vmem:[#allocation2 + $0xa0] sm:$0xff]
      %v905 = vld [vmem:[#allocation2 + $0xa8] sm:$0xff]
      %v906 = vld [vmem:[#allocation2 + $0xb0] sm:$0xff]
      %v907 = vld [vmem:[#allocation2 + $0xb8] sm:$0xff]
      %v908 = vld [vmem:[#allocation2 + $0xc0] sm:$0xff]
      %v909 = vld [vmem:[#allocation2 + $0xc8] sm:$0xff]
      %v910 = vld [vmem:[#allocation2 + $0xd0] sm:$0xff]
      %v911 = vld [vmem:[#allocation2 + $0xd8] sm:$0xff]
      %v912 = vld [vmem:[#allocation2 + $0xe0] sm:$0xff]
      %v913 = vld [vmem:[#allocation2 + $0xe8] sm:$0xff]
      %v914 = vld [vmem:[#allocation2 + $0xf0] sm:$0xff]
      %v915 = vld [vmem:[#allocation2 + $0xf8] sm:$0xff]
      %v916 = vld [vmem:[#allocation2 + $0x100] sm:$0xff]
      %949 = vrot.lane.b32.xlu0 %v885, 32
      %v950 = vpop.permute.xlu0 %949
      %951 = vrot.lane.b32.xlu0 %v886, 32
      %v952 = vpop.permute.xlu0 %951
      %953 = vrot.lane.b32.xlu0 %v887, 32
      %v954 = vpop.permute.xlu0 %953
      %955 = vrot.lane.b32.xlu0 %v888, 32
      %v956 = vpop.permute.xlu0 %955
      %957 = vrot.lane.b32.xlu0 %v889, 32
      %v958 = vpop.permute.xlu0 %957
      %959 = vrot.lane.b32.xlu0 %v890, 32
      %v960 = vpop.permute.xlu0 %959
      %961 = vrot.lane.b32.xlu0 %v891, 32
      %v962 = vpop.permute.xlu0 %961
      %963 = vrot.lane.b32.xlu0 %v892, 32
      %v964 = vpop.permute.xlu0 %963
      %965 = vrot.lane.b32.xlu0 %v893, 32
      %v966 = vpop.permute.xlu0 %965
      %967 = vrot.lane.b32.xlu0 %v894, 32
      %v968 = vpop.permute.xlu0 %967
      %969 = vrot.lane.b32.xlu0 %v895, 32
      %v970 = vpop.permute.xlu0 %969
      %971 = vrot.lane.b32.xlu0 %v896, 32
      %v972 = vpop.permute.xlu0 %971
      %973 = vrot.lane.b32.xlu0 %v897, 32
      %v974 = vpop.permute.xlu0 %973
      %975 = vrot.lane.b32.xlu0 %v898, 32
      %v976 = vpop.permute.xlu0 %975
      %977 = vrot.lane.b32.xlu0 %v899, 32
      %v978 = vpop.permute.xlu0 %977
      %979 = vrot.lane.b32.xlu0 %v900, 32
      %v980 = vpop.permute.xlu0 %979
      %981 = vrot.lane.b32.xlu0 %v901, 32
      %v982 = vpop.permute.xlu0 %981
      %983 = vrot.lane.b32.xlu0 %v902, 32
      %v984 = vpop.permute.xlu0 %983
      %985 = vrot.lane.b32.xlu0 %v903, 32
      %v986 = vpop.permute.xlu0 %985
      %987 = vrot.lane.b32.xlu0 %v904, 32
      %v988 = vpop.permute.xlu0 %987
      %989 = vrot.lane.b32.xlu0 %v905, 32
      %v990 = vpop.permute.xlu0 %989
      %991 = vrot.lane.b32.xlu0 %v906, 32
      %v992 = vpop.permute.xlu0 %991
      %993 = vrot.lane.b32.xlu0 %v907, 32
      %v994 = vpop.permute.xlu0 %993
      %995 = vrot.lane.b32.xlu0 %v908, 32
      %v996 = vpop.permute.xlu0 %995
      %997 = vrot.lane.b32.xlu0 %v909, 32
      %v998 = vpop.permute.xlu0 %997
      %999 = vrot.lane.b32.xlu0 %v910, 32
      %v1000 = vpop.permute.xlu0 %999
      %1001 = vrot.lane.b32.xlu0 %v911, 32
      %v1002 = vpop.permute.xlu0 %1001
      %1003 = vrot.lane.b32.xlu0 %v912, 32
      %v1004 = vpop.permute.xlu0 %1003
      %1005 = vrot.lane.b32.xlu0 %v913, 32
      %v1006 = vpop.permute.xlu0 %1005
      %1007 = vrot.lane.b32.xlu0 %v914, 32
      %v1008 = vpop.permute.xlu0 %1007
      %1009 = vrot.lane.b32.xlu0 %v915, 32
      %v1010 = vpop.permute.xlu0 %1009
      %1011 = vrot.lane.b32.xlu0 %v916, 32
      %v1012 = vpop.permute.xlu0 %1011
      %vm1045 = vcmask 523520
      %1046 = vst.msk [vmem:[#allocation3] sm:$0xff] %vm1045, %v950
      %1047 = vst.msk [vmem:[#allocation3 + $0x18] sm:$0xff] %vm1045, %v952
      %1048 = vst.msk [vmem:[#allocation3 + $0x30] sm:$0xff] %vm1045, %v954
      %1049 = vst.msk [vmem:[#allocation3 + $0x48] sm:$0xff] %vm1045, %v956
      %1050 = vst.msk [vmem:[#allocation3 + $0x60] sm:$0xff] %vm1045, %v958
      %1051 = vst.msk [vmem:[#allocation3 + $0x78] sm:$0xff] %vm1045, %v960
      %1052 = vst.msk [vmem:[#allocation3 + $0x90] sm:$0xff] %vm1045, %v962
      %1053 = vst.msk [vmem:[#allocation3 + $0xa8] sm:$0xff] %vm1045, %v964
      %1054 = vst.msk [vmem:[#allocation3 + $0xc0] sm:$0xff] %vm1045, %v966
      %1055 = vst.msk [vmem:[#allocation3 + $0xd8] sm:$0xff] %vm1045, %v968
      %1056 = vst.msk [vmem:[#allocation3 + $0xf0] sm:$0xff] %vm1045, %v970
      %1057 = vst.msk [vmem:[#allocation3 + $0x108] sm:$0xff] %vm1045, %v972
      %1058 = vst.msk [vmem:[#allocation3 + $0x120] sm:$0xff] %vm1045, %v974
      %1059 = vst.msk [vmem:[#allocation3 + $0x138] sm:$0xff] %vm1045, %v976
      %1060 = vst.msk [vmem:[#allocation3 + $0x150] sm:$0xff] %vm1045, %v978
      %1061 = vst.msk [vmem:[#allocation3 + $0x168] sm:$0xff] %vm1045, %v980
      %1062 = vst.msk [vmem:[#allocation3 + $0x180] sm:$0xff] %vm1045, %v982
      %1063 = vst.msk [vmem:[#allocation3 + $0x198] sm:$0xff] %vm1045, %v984
      %1064 = vst.msk [vmem:[#allocation3 + $0x1b0] sm:$0xff] %vm1045, %v986
      %1065 = vst.msk [vmem:[#allocation3 + $0x1c8] sm:$0xff] %vm1045, %v988
      %1066 = vst.msk [vmem:[#allocation3 + $0x1e0] sm:$0xff] %vm1045, %v990
      %1067 = vst.msk [vmem:[#allocation3 + $0x1f8] sm:$0xff] %vm1045, %v992
      %1068 = vst.msk [vmem:[#allocation3 + $0x210] sm:$0xff] %vm1045, %v994
      %1069 = vst.msk [vmem:[#allocation3 + $0x228] sm:$0xff] %vm1045, %v996
      %1070 = vst.msk [vmem:[#allocation3 + $0x240] sm:$0xff] %vm1045, %v998
      %1071 = vst.msk [vmem:[#allocation3 + $0x258] sm:$0xff] %vm1045, %v1000
      %1072 = vst.msk [vmem:[#allocation3 + $0x270] sm:$0xff] %vm1045, %v1002
      %1073 = vst.msk [vmem:[#allocation3 + $0x288] sm:$0xff] %vm1045, %v1004
      %1074 = vst.msk [vmem:[#allocation3 + $0x2a0] sm:$0xff] %vm1045, %v1006
      %1075 = vst.msk [vmem:[#allocation3 + $0x2b8] sm:$0xff] %vm1045, %v1008
      %1076 = vst.msk [vmem:[#allocation3 + $0x2d0] sm:$0xff] %vm1045, %v1010
      %1077 = vst.msk [vmem:[#allocation3 + $0x2e8] sm:$0xff] %vm1045, %v1012
      %v1078 = vld [vmem:[#allocation2 + $0x9] sm:$0xff]
      %v1079 = vld [vmem:[#allocation2 + $0x11] sm:$0xff]
      %v1080 = vld [vmem:[#allocation2 + $0x19] sm:$0xff]
      %v1081 = vld [vmem:[#allocation2 + $0x21] sm:$0xff]
      %v1082 = vld [vmem:[#allocation2 + $0x29] sm:$0xff]
      %v1083 = vld [vmem:[#allocation2 + $0x31] sm:$0xff]
      %v1084 = vld [vmem:[#allocation2 + $0x39] sm:$0xff]
      %v1085 = vld [vmem:[#allocation2 + $0x41] sm:$0xff]
      %v1086 = vld [vmem:[#allocation2 + $0x49] sm:$0xff]
      %v1087 = vld [vmem:[#allocation2 + $0x51] sm:$0xff]
      %v1088 = vld [vmem:[#allocation2 + $0x59] sm:$0xff]
      %v1089 = vld [vmem:[#allocation2 + $0x61] sm:$0xff]
      %v1090 = vld [vmem:[#allocation2 + $0x69] sm:$0xff]
      %v1091 = vld [vmem:[#allocation2 + $0x71] sm:$0xff]
      %v1092 = vld [vmem:[#allocation2 + $0x79] sm:$0xff]
      %v1093 = vld [vmem:[#allocation2 + $0x81] sm:$0xff]
      %v1094 = vld [vmem:[#allocation2 + $0x89] sm:$0xff]
      %v1095 = vld [vmem:[#allocation2 + $0x91] sm:$0xff]
      %v1096 = vld [vmem:[#allocation2 + $0x99] sm:$0xff]
      %v1097 = vld [vmem:[#allocation2 + $0xa1] sm:$0xff]
      %v1098 = vld [vmem:[#allocation2 + $0xa9] sm:$0xff]
      %v1099 = vld [vmem:[#allocation2 + $0xb1] sm:$0xff]
      %v1100 = vld [vmem:[#allocation2 + $0xb9] sm:$0xff]
      %v1101 = vld [vmem:[#allocation2 + $0xc1] sm:$0xff]
      %v1102 = vld [vmem:[#allocation2 + $0xc9] sm:$0xff]
      %v1103 = vld [vmem:[#allocation2 + $0xd1] sm:$0xff]
      %v1104 = vld [vmem:[#allocation2 + $0xd9] sm:$0xff]
      %v1105 = vld [vmem:[#allocation2 + $0xe1] sm:$0xff]
      %v1106 = vld [vmem:[#allocation2 + $0xe9] sm:$0xff]
      %v1107 = vld [vmem:[#allocation2 + $0xf1] sm:$0xff]
      %v1108 = vld [vmem:[#allocation2 + $0xf9] sm:$0xff]
      %v1109 = vld [vmem:[#allocation2 + $0x101] sm:$0xff]
      %v1110 = vsel %vm661, 1, 0
      %v1111 = vsel %vm662, 1, 0
      %v1112 = vsel %vm663, 1, 0
      %v1113 = vsel %vm664, 1, 0
      %v1114 = vsel %vm665, 1, 0
      %v1115 = vsel %vm666, 1, 0
      %v1116 = vsel %vm667, 1, 0
      %v1117 = vsel %vm668, 1, 0
      %v1118 = vsel %vm669, 1, 0
      %v1119 = vsel %vm670, 1, 0
      %v1120 = vsel %vm671, 1, 0
      %v1121 = vsel %vm672, 1, 0
      %v1122 = vsel %vm673, 1, 0
      %v1123 = vsel %vm674, 1, 0
      %v1124 = vsel %vm675, 1, 0
      %v1125 = vsel %vm676, 1, 0
      %v1126 = vsel %vm677, 1, 0
      %v1127 = vsel %vm678, 1, 0
      %v1128 = vsel %vm679, 1, 0
      %v1129 = vsel %vm680, 1, 0
      %v1130 = vsel %vm681, 1, 0
      %v1131 = vsel %vm682, 1, 0
      %v1132 = vsel %vm683, 1, 0
      %v1133 = vsel %vm684, 1, 0
      %v1134 = vsel %vm685, 1, 0
      %v1135 = vsel %vm686, 1, 0
      %v1136 = vsel %vm687, 1, 0
      %v1137 = vsel %vm688, 1, 0
      %v1138 = vsel %vm689, 1, 0
      %v1139 = vsel %vm690, 1, 0
      %v1140 = vsel %vm691, 1, 0
      %v1141 = vsel %vm692, 1, 0
      %vm1142 = vcmp.eq.s32.totalorder %v1110, 1
      %vm1143 = vcmp.eq.s32.totalorder %v1111, 1
      %vm1144 = vcmp.eq.s32.totalorder %v1112, 1
      %vm1145 = vcmp.eq.s32.totalorder %v1113, 1
      %vm1146 = vcmp.eq.s32.totalorder %v1114, 1
      %vm1147 = vcmp.eq.s32.totalorder %v1115, 1
      %vm1148 = vcmp.eq.s32.totalorder %v1116, 1
      %vm1149 = vcmp.eq.s32.totalorder %v1117, 1
      %vm1150 = vcmp.eq.s32.totalorder %v1118, 1
      %vm1151 = vcmp.eq.s32.totalorder %v1119, 1
      %vm1152 = vcmp.eq.s32.totalorder %v1120, 1
      %vm1153 = vcmp.eq.s32.totalorder %v1121, 1
      %vm1154 = vcmp.eq.s32.totalorder %v1122, 1
      %vm1155 = vcmp.eq.s32.totalorder %v1123, 1
      %vm1156 = vcmp.eq.s32.totalorder %v1124, 1
      %vm1157 = vcmp.eq.s32.totalorder %v1125, 1
      %vm1158 = vcmp.eq.s32.totalorder %v1126, 1
      %vm1159 = vcmp.eq.s32.totalorder %v1127, 1
      %vm1160 = vcmp.eq.s32.totalorder %v1128, 1
      %vm1161 = vcmp.eq.s32.totalorder %v1129, 1
      %vm1162 = vcmp.eq.s32.totalorder %v1130, 1
      %vm1163 = vcmp.eq.s32.totalorder %v1131, 1
      %vm1164 = vcmp.eq.s32.totalorder %v1132, 1
      %vm1165 = vcmp.eq.s32.totalorder %v1133, 1
      %vm1166 = vcmp.eq.s32.totalorder %v1134, 1
      %vm1167 = vcmp.eq.s32.totalorder %v1135, 1
      %vm1168 = vcmp.eq.s32.totalorder %v1136, 1
      %vm1169 = vcmp.eq.s32.totalorder %v1137, 1
      %vm1170 = vcmp.eq.s32.totalorder %v1138, 1
      %vm1171 = vcmp.eq.s32.totalorder %v1139, 1
      %vm1172 = vcmp.eq.s32.totalorder %v1140, 1
      %vm1173 = vcmp.eq.s32.totalorder %v1141, 1
      %v1174 = vsel %vm1142, %v1078, 0.0
      %v1175 = vsel %vm1143, %v1079, 0.0
      %v1176 = vsel %vm1144, %v1080, 0.0
      %v1177 = vsel %vm1145, %v1081, 0.0
      %v1178 = vsel %vm1146, %v1082, 0.0
      %v1179 = vsel %vm1147, %v1083, 0.0
      %v1180 = vsel %vm1148, %v1084, 0.0
      %v1181 = vsel %vm1149, %v1085, 0.0
      %v1182 = vsel %vm1150, %v1086, 0.0
      %v1183 = vsel %vm1151, %v1087, 0.0
      %v1184 = vsel %vm1152, %v1088, 0.0
      %v1185 = vsel %vm1153, %v1089, 0.0
      %v1186 = vsel %vm1154, %v1090, 0.0
      %v1187 = vsel %vm1155, %v1091, 0.0
      %v1188 = vsel %vm1156, %v1092, 0.0
      %v1189 = vsel %vm1157, %v1093, 0.0
      %v1190 = vsel %vm1158, %v1094, 0.0
      %v1191 = vsel %vm1159, %v1095, 0.0
      %v1192 = vsel %vm1160, %v1096, 0.0
      %v1193 = vsel %vm1161, %v1097, 0.0
      %v1194 = vsel %vm1162, %v1098, 0.0
      %v1195 = vsel %vm1163, %v1099, 0.0
      %v1196 = vsel %vm1164, %v1100, 0.0
      %v1197 = vsel %vm1165, %v1101, 0.0
      %v1198 = vsel %vm1166, %v1102, 0.0
      %v1199 = vsel %vm1167, %v1103, 0.0
      %v1200 = vsel %vm1168, %v1104, 0.0
      %v1201 = vsel %vm1169, %v1105, 0.0
      %v1202 = vsel %vm1170, %v1106, 0.0
      %v1203 = vsel %vm1171, %v1107, 0.0
      %v1204 = vsel %vm1172, %v1108, 0.0
      %v1205 = vsel %vm1173, %v1109, 0.0
      %1238 = vrot.lane.b32.xlu0 %v1174, 64
      %v1239 = vpop.permute.xlu0 %1238
      %1240 = vrot.lane.b32.xlu0 %v1175, 64
      %v1241 = vpop.permute.xlu0 %1240
      %1242 = vrot.lane.b32.xlu0 %v1176, 64
      %v1243 = vpop.permute.xlu0 %1242
      %1244 = vrot.lane.b32.xlu0 %v1177, 64
      %v1245 = vpop.permute.xlu0 %1244
      %1246 = vrot.lane.b32.xlu0 %v1178, 64
      %v1247 = vpop.permute.xlu0 %1246
      %1248 = vrot.lane.b32.xlu0 %v1179, 64
      %v1249 = vpop.permute.xlu0 %1248
      %1250 = vrot.lane.b32.xlu0 %v1180, 64
      %v1251 = vpop.permute.xlu0 %1250
      %1252 = vrot.lane.b32.xlu0 %v1181, 64
      %v1253 = vpop.permute.xlu0 %1252
      %1254 = vrot.lane.b32.xlu0 %v1182, 64
      %v1255 = vpop.permute.xlu0 %1254
      %1256 = vrot.lane.b32.xlu0 %v1183, 64
      %v1257 = vpop.permute.xlu0 %1256
      %1258 = vrot.lane.b32.xlu0 %v1184, 64
      %v1259 = vpop.permute.xlu0 %1258
      %1260 = vrot.lane.b32.xlu0 %v1185, 64
      %v1261 = vpop.permute.xlu0 %1260
      %1262 = vrot.lane.b32.xlu0 %v1186, 64
      %v1263 = vpop.permute.xlu0 %1262
      %1264 = vrot.lane.b32.xlu0 %v1187, 64
      %v1265 = vpop.permute.xlu0 %1264
      %1266 = vrot.lane.b32.xlu0 %v1188, 64
      %v1267 = vpop.permute.xlu0 %1266
      %1268 = vrot.lane.b32.xlu0 %v1189, 64
      %v1269 = vpop.permute.xlu0 %1268
      %1270 = vrot.lane.b32.xlu0 %v1190, 64
      %v1271 = vpop.permute.xlu0 %1270
      %1272 = vrot.lane.b32.xlu0 %v1191, 64
      %v1273 = vpop.permute.xlu0 %1272
      %1274 = vrot.lane.b32.xlu0 %v1192, 64
      %v1275 = vpop.permute.xlu0 %1274
      %1276 = vrot.lane.b32.xlu0 %v1193, 64
      %v1277 = vpop.permute.xlu0 %1276
      %1278 = vrot.lane.b32.xlu0 %v1194, 64
      %v1279 = vpop.permute.xlu0 %1278
      %1280 = vrot.lane.b32.xlu0 %v1195, 64
      %v1281 = vpop.permute.xlu0 %1280
      %1282 = vrot.lane.b32.xlu0 %v1196, 64
      %v1283 = vpop.permute.xlu0 %1282
      %1284 = vrot.lane.b32.xlu0 %v1197, 64
      %v1285 = vpop.permute.xlu0 %1284
      %1286 = vrot.lane.b32.xlu0 %v1198, 64
      %v1287 = vpop.permute.xlu0 %1286
      %1288 = vrot.lane.b32.xlu0 %v1199, 64
      %v1289 = vpop.permute.xlu0 %1288
      %1290 = vrot.lane.b32.xlu0 %v1200, 64
      %v1291 = vpop.permute.xlu0 %1290
      %1292 = vrot.lane.b32.xlu0 %v1201, 64
      %v1293 = vpop.permute.xlu0 %1292
      %1294 = vrot.lane.b32.xlu0 %v1202, 64
      %v1295 = vpop.permute.xlu0 %1294
      %1296 = vrot.lane.b32.xlu0 %v1203, 64
      %v1297 = vpop.permute.xlu0 %1296
      %1298 = vrot.lane.b32.xlu0 %v1204, 64
      %v1299 = vpop.permute.xlu0 %1298
      %1300 = vrot.lane.b32.xlu0 %v1205, 64
      %v1301 = vpop.permute.xlu0 %1300
      %vm1334 = vcmask 785920
      %1335 = vst.msk [vmem:[#allocation3] sm:$0xff] %vm1334, %v1239
      %1336 = vst.msk [vmem:[#allocation3 + $0x18] sm:$0xff] %vm1334, %v1241
      %1337 = vst.msk [vmem:[#allocation3 + $0x30] sm:$0xff] %vm1334, %v1243
      %1338 = vst.msk [vmem:[#allocation3 + $0x48] sm:$0xff] %vm1334, %v1245
      %1339 = vst.msk [vmem:[#allocation3 + $0x60] sm:$0xff] %vm1334, %v1247
      %1340 = vst.msk [vmem:[#allocation3 + $0x78] sm:$0xff] %vm1334, %v1249
      %1341 = vst.msk [vmem:[#allocation3 + $0x90] sm:$0xff] %vm1334, %v1251
      %1342 = vst.msk [vmem:[#allocation3 + $0xa8] sm:$0xff] %vm1334, %v1253
      %1343 = vst.msk [vmem:[#allocation3 + $0xc0] sm:$0xff] %vm1334, %v1255
      %1344 = vst.msk [vmem:[#allocation3 + $0xd8] sm:$0xff] %vm1334, %v1257
      %1345 = vst.msk [vmem:[#allocation3 + $0xf0] sm:$0xff] %vm1334, %v1259
      %1346 = vst.msk [vmem:[#allocation3 + $0x108] sm:$0xff] %vm1334, %v1261
      %1347 = vst.msk [vmem:[#allocation3 + $0x120] sm:$0xff] %vm1334, %v1263
      %1348 = vst.msk [vmem:[#allocation3 + $0x138] sm:$0xff] %vm1334, %v1265
      %1349 = vst.msk [vmem:[#allocation3 + $0x150] sm:$0xff] %vm1334, %v1267
      %1350 = vst.msk [vmem:[#allocation3 + $0x168] sm:$0xff] %vm1334, %v1269
      %1351 = vst.msk [vmem:[#allocation3 + $0x180] sm:$0xff] %vm1334, %v1271
      %1352 = vst.msk [vmem:[#allocation3 + $0x198] sm:$0xff] %vm1334, %v1273
      %1353 = vst.msk [vmem:[#allocation3 + $0x1b0] sm:$0xff] %vm1334, %v1275
      %1354 = vst.msk [vmem:[#allocation3 + $0x1c8] sm:$0xff] %vm1334, %v1277
      %1355 = vst.msk [vmem:[#allocation3 + $0x1e0] sm:$0xff] %vm1334, %v1279
      %1356 = vst.msk [vmem:[#allocation3 + $0x1f8] sm:$0xff] %vm1334, %v1281
      %1357 = vst.msk [vmem:[#allocation3 + $0x210] sm:$0xff] %vm1334, %v1283
      %1358 = vst.msk [vmem:[#allocation3 + $0x228] sm:$0xff] %vm1334, %v1285
      %1359 = vst.msk [vmem:[#allocation3 + $0x240] sm:$0xff] %vm1334, %v1287
      %1360 = vst.msk [vmem:[#allocation3 + $0x258] sm:$0xff] %vm1334, %v1289
      %1361 = vst.msk [vmem:[#allocation3 + $0x270] sm:$0xff] %vm1334, %v1291
      %1362 = vst.msk [vmem:[#allocation3 + $0x288] sm:$0xff] %vm1334, %v1293
      %1363 = vst.msk [vmem:[#allocation3 + $0x2a0] sm:$0xff] %vm1334, %v1295
      %1364 = vst.msk [vmem:[#allocation3 + $0x2b8] sm:$0xff] %vm1334, %v1297
      %1365 = vst.msk [vmem:[#allocation3 + $0x2d0] sm:$0xff] %vm1334, %v1299
      %1366 = vst.msk [vmem:[#allocation3 + $0x2e8] sm:$0xff] %vm1334, %v1301
      %v1367 = vld [vmem:[#allocation2 + $0x17] sm:$0xff]
      %v1368 = vld [vmem:[#allocation2 + $0x1f] sm:$0xff]
      %v1369 = vld [vmem:[#allocation2 + $0x27] sm:$0xff]
      %v1370 = vld [vmem:[#allocation2 + $0x2f] sm:$0xff]
      %v1371 = vld [vmem:[#allocation2 + $0x37] sm:$0xff]
      %v1372 = vld [vmem:[#allocation2 + $0x3f] sm:$0xff]
      %v1373 = vld [vmem:[#allocation2 + $0x47] sm:$0xff]
      %v1374 = vld [vmem:[#allocation2 + $0x4f] sm:$0xff]
      %v1375 = vld [vmem:[#allocation2 + $0x57] sm:$0xff]
      %v1376 = vld [vmem:[#allocation2 + $0x5f] sm:$0xff]
      %v1377 = vld [vmem:[#allocation2 + $0x67] sm:$0xff]
      %v1378 = vld [vmem:[#allocation2 + $0x6f] sm:$0xff]
      %v1379 = vld [vmem:[#allocation2 + $0x77] sm:$0xff]
      %v1380 = vld [vmem:[#allocation2 + $0x7f] sm:$0xff]
      %v1381 = vld [vmem:[#allocation2 + $0x87] sm:$0xff]
      %v1382 = vld [vmem:[#allocation2 + $0x8f] sm:$0xff]
      %v1383 = vld [vmem:[#allocation2 + $0x97] sm:$0xff]
      %v1384 = vld [vmem:[#allocation2 + $0x9f] sm:$0xff]
      %v1385 = vld [vmem:[#allocation2 + $0xa7] sm:$0xff]
      %v1386 = vld [vmem:[#allocation2 + $0xaf] sm:$0xff]
      %v1387 = vld [vmem:[#allocation2 + $0xb7] sm:$0xff]
      %v1388 = vld [vmem:[#allocation2 + $0xbf] sm:$0xff]
      %v1389 = vld [vmem:[#allocation2 + $0xc7] sm:$0xff]
      %v1390 = vld [vmem:[#allocation2 + $0xcf] sm:$0xff]
      %v1391 = vld [vmem:[#allocation2 + $0xd7] sm:$0xff]
      %v1392 = vld [vmem:[#allocation2 + $0xdf] sm:$0xff]
      %v1393 = vld [vmem:[#allocation2 + $0xe7] sm:$0xff]
      %v1394 = vld [vmem:[#allocation2 + $0xef] sm:$0xff]
      %v1395 = vld [vmem:[#allocation2 + $0xf7] sm:$0xff]
      %v1396 = vld [vmem:[#allocation2 + $0xff] sm:$0xff]
      %v1397 = vld [vmem:[#allocation2 + $0x107] sm:$0xff]
      %v1398 = vld [vmem:[#allocation2 + $0x10f] sm:$0xff]
      %v1399 = vsel %vm789, %v1367, 0.0
      %v1400 = vsel %vm790, %v1368, 0.0
      %v1401 = vsel %vm791, %v1369, 0.0
      %v1402 = vsel %vm792, %v1370, 0.0
      %v1403 = vsel %vm793, %v1371, 0.0
      %v1404 = vsel %vm794, %v1372, 0.0
      %v1405 = vsel %vm795, %v1373, 0.0
      %v1406 = vsel %vm796, %v1374, 0.0
      %v1407 = vsel %vm797, %v1375, 0.0
      %v1408 = vsel %vm798, %v1376, 0.0
      %v1409 = vsel %vm799, %v1377, 0.0
      %v1410 = vsel %vm800, %v1378, 0.0
      %v1411 = vsel %vm801, %v1379, 0.0
      %v1412 = vsel %vm802, %v1380, 0.0
      %v1413 = vsel %vm803, %v1381, 0.0
      %v1414 = vsel %vm804, %v1382, 0.0
      %v1415 = vsel %vm805, %v1383, 0.0
      %v1416 = vsel %vm806, %v1384, 0.0
      %v1417 = vsel %vm807, %v1385, 0.0
      %v1418 = vsel %vm808, %v1386, 0.0
      %v1419 = vsel %vm809, %v1387, 0.0
      %v1420 = vsel %vm810, %v1388, 0.0
      %v1421 = vsel %vm811, %v1389, 0.0
      %v1422 = vsel %vm812, %v1390, 0.0
      %v1423 = vsel %vm813, %v1391, 0.0
      %v1424 = vsel %vm814, %v1392, 0.0
      %v1425 = vsel %vm815, %v1393, 0.0
      %v1426 = vsel %vm816, %v1394, 0.0
      %v1427 = vsel %vm817, %v1395, 0.0
      %v1428 = vsel %vm818, %v1396, 0.0
      %v1429 = vsel %vm819, %v1397, 0.0
      %v1430 = vsel %vm820, %v1398, 0.0
      %1463 = vrot.lane.b32.xlu0 %v1399, 96
      %v1464 = vpop.permute.xlu0 %1463
      %1465 = vrot.lane.b32.xlu0 %v1400, 96
      %v1466 = vpop.permute.xlu0 %1465
      %1467 = vrot.lane.b32.xlu0 %v1401, 96
      %v1468 = vpop.permute.xlu0 %1467
      %1469 = vrot.lane.b32.xlu0 %v1402, 96
      %v1470 = vpop.permute.xlu0 %1469
      %1471 = vrot.lane.b32.xlu0 %v1403, 96
      %v1472 = vpop.permute.xlu0 %1471
      %1473 = vrot.lane.b32.xlu0 %v1404, 96
      %v1474 = vpop.permute.xlu0 %1473
      %1475 = vrot.lane.b32.xlu0 %v1405, 96
      %v1476 = vpop.permute.xlu0 %1475
      %1477 = vrot.lane.b32.xlu0 %v1406, 96
      %v1478 = vpop.permute.xlu0 %1477
      %1479 = vrot.lane.b32.xlu0 %v1407, 96
      %v1480 = vpop.permute.xlu0 %1479
      %1481 = vrot.lane.b32.xlu0 %v1408, 96
      %v1482 = vpop.permute.xlu0 %1481
      %1483 = vrot.lane.b32.xlu0 %v1409, 96
      %v1484 = vpop.permute.xlu0 %1483
      %1485 = vrot.lane.b32.xlu0 %v1410, 96
      %v1486 = vpop.permute.xlu0 %1485
      %1487 = vrot.lane.b32.xlu0 %v1411, 96
      %v1488 = vpop.permute.xlu0 %1487
      %1489 = vrot.lane.b32.xlu0 %v1412, 96
      %v1490 = vpop.permute.xlu0 %1489
      %1491 = vrot.lane.b32.xlu0 %v1413, 96
      %v1492 = vpop.permute.xlu0 %1491
      %1493 = vrot.lane.b32.xlu0 %v1414, 96
      %v1494 = vpop.permute.xlu0 %1493
      %1495 = vrot.lane.b32.xlu0 %v1415, 96
      %v1496 = vpop.permute.xlu0 %1495
      %1497 = vrot.lane.b32.xlu0 %v1416, 96
      %v1498 = vpop.permute.xlu0 %1497
      %1499 = vrot.lane.b32.xlu0 %v1417, 96
      %v1500 = vpop.permute.xlu0 %1499
      %1501 = vrot.lane.b32.xlu0 %v1418, 96
      %v1502 = vpop.permute.xlu0 %1501
      %1503 = vrot.lane.b32.xlu0 %v1419, 96
      %v1504 = vpop.permute.xlu0 %1503
      %1505 = vrot.lane.b32.xlu0 %v1420, 96
      %v1506 = vpop.permute.xlu0 %1505
      %1507 = vrot.lane.b32.xlu0 %v1421, 96
      %v1508 = vpop.permute.xlu0 %1507
      %1509 = vrot.lane.b32.xlu0 %v1422, 96
      %v1510 = vpop.permute.xlu0 %1509
      %1511 = vrot.lane.b32.xlu0 %v1423, 96
      %v1512 = vpop.permute.xlu0 %1511
      %1513 = vrot.lane.b32.xlu0 %v1424, 96
      %v1514 = vpop.permute.xlu0 %1513
      %1515 = vrot.lane.b32.xlu0 %v1425, 96
      %v1516 = vpop.permute.xlu0 %1515
      %1517 = vrot.lane.b32.xlu0 %v1426, 96
      %v1518 = vpop.permute.xlu0 %1517
      %1519 = vrot.lane.b32.xlu0 %v1427, 96
      %v1520 = vpop.permute.xlu0 %1519
      %1521 = vrot.lane.b32.xlu0 %v1428, 96
      %v1522 = vpop.permute.xlu0 %1521
      %1523 = vrot.lane.b32.xlu0 %v1429, 96
      %v1524 = vpop.permute.xlu0 %1523
      %1525 = vrot.lane.b32.xlu0 %v1430, 96
      %v1526 = vpop.permute.xlu0 %1525
      %vm1559 = vcmask 1048320
      %1560 = vst.msk [vmem:[#allocation3] sm:$0xff] %vm1559, %v1464
      %1561 = vst.msk [vmem:[#allocation3 + $0x18] sm:$0xff] %vm1559, %v1466
      %1562 = vst.msk [vmem:[#allocation3 + $0x30] sm:$0xff] %vm1559, %v1468
      %1563 = vst.msk [vmem:[#allocation3 + $0x48] sm:$0xff] %vm1559, %v1470
      %1564 = vst.msk [vmem:[#allocation3 + $0x60] sm:$0xff] %vm1559, %v1472
      %1565 = vst.msk [vmem:[#allocation3 + $0x78] sm:$0xff] %vm1559, %v1474
      %1566 = vst.msk [vmem:[#allocation3 + $0x90] sm:$0xff] %vm1559, %v1476
      %1567 = vst.msk [vmem:[#allocation3 + $0xa8] sm:$0xff] %vm1559, %v1478
      %1568 = vst.msk [vmem:[#allocation3 + $0xc0] sm:$0xff] %vm1559, %v1480
      %1569 = vst.msk [vmem:[#allocation3 + $0xd8] sm:$0xff] %vm1559, %v1482
      %1570 = vst.msk [vmem:[#allocation3 + $0xf0] sm:$0xff] %vm1559, %v1484
      %1571 = vst.msk [vmem:[#allocation3 + $0x108] sm:$0xff] %vm1559, %v1486
      %1572 = vst.msk [vmem:[#allocation3 + $0x120] sm:$0xff] %vm1559, %v1488
      %1573 = vst.msk [vmem:[#allocation3 + $0x138] sm:$0xff] %vm1559, %v1490
      %1574 = vst.msk [vmem:[#allocation3 + $0x150] sm:$0xff] %vm1559, %v1492
      %1575 = vst.msk [vmem:[#allocation3 + $0x168] sm:$0xff] %vm1559, %v1494
      %1576 = vst.msk [vmem:[#allocation3 + $0x180] sm:$0xff] %vm1559, %v1496
      %1577 = vst.msk [vmem:[#allocation3 + $0x198] sm:$0xff] %vm1559, %v1498
      %1578 = vst.msk [vmem:[#allocation3 + $0x1b0] sm:$0xff] %vm1559, %v1500
      %1579 = vst.msk [vmem:[#allocation3 + $0x1c8] sm:$0xff] %vm1559, %v1502
      %1580 = vst.msk [vmem:[#allocation3 + $0x1e0] sm:$0xff] %vm1559, %v1504
      %1581 = vst.msk [vmem:[#allocation3 + $0x1f8] sm:$0xff] %vm1559, %v1506
      %1582 = vst.msk [vmem:[#allocation3 + $0x210] sm:$0xff] %vm1559, %v1508
      %1583 = vst.msk [vmem:[#allocation3 + $0x228] sm:$0xff] %vm1559, %v1510
      %1584 = vst.msk [vmem:[#allocation3 + $0x240] sm:$0xff] %vm1559, %v1512
      %1585 = vst.msk [vmem:[#allocation3 + $0x258] sm:$0xff] %vm1559, %v1514
      %1586 = vst.msk [vmem:[#allocation3 + $0x270] sm:$0xff] %vm1559, %v1516
      %1587 = vst.msk [vmem:[#allocation3 + $0x288] sm:$0xff] %vm1559, %v1518
      %1588 = vst.msk [vmem:[#allocation3 + $0x2a0] sm:$0xff] %vm1559, %v1520
      %1589 = vst.msk [vmem:[#allocation3 + $0x2b8] sm:$0xff] %vm1559, %v1522
      %1590 = vst.msk [vmem:[#allocation3 + $0x2d0] sm:$0xff] %vm1559, %v1524
      %1591 = vst.msk [vmem:[#allocation3 + $0x2e8] sm:$0xff] %vm1559, %v1526
      %v1592 = vld [vmem:[#allocation2 + $0x18] sm:$0xff]
      %v1593 = vld [vmem:[#allocation2 + $0x20] sm:$0xff]
      %v1594 = vld [vmem:[#allocation2 + $0x28] sm:$0xff]
      %v1595 = vld [vmem:[#allocation2 + $0x30] sm:$0xff]
      %v1596 = vld [vmem:[#allocation2 + $0x38] sm:$0xff]
      %v1597 = vld [vmem:[#allocation2 + $0x40] sm:$0xff]
      %v1598 = vld [vmem:[#allocation2 + $0x48] sm:$0xff]
      %v1599 = vld [vmem:[#allocation2 + $0x50] sm:$0xff]
      %v1600 = vld [vmem:[#allocation2 + $0x58] sm:$0xff]
      %v1601 = vld [vmem:[#allocation2 + $0x60] sm:$0xff]
      %v1602 = vld [vmem:[#allocation2 + $0x68] sm:$0xff]
      %v1603 = vld [vmem:[#allocation2 + $0x70] sm:$0xff]
      %v1604 = vld [vmem:[#allocation2 + $0x78] sm:$0xff]
      %v1605 = vld [vmem:[#allocation2 + $0x80] sm:$0xff]
      %v1606 = vld [vmem:[#allocation2 + $0x88] sm:$0xff]
      %v1607 = vld [vmem:[#allocation2 + $0x90] sm:$0xff]
      %v1608 = vld [vmem:[#allocation2 + $0x98] sm:$0xff]
      %v1609 = vld [vmem:[#allocation2 + $0xa0] sm:$0xff]
      %v1610 = vld [vmem:[#allocation2 + $0xa8] sm:$0xff]
      %v1611 = vld [vmem:[#allocation2 + $0xb0] sm:$0xff]
      %v1612 = vld [vmem:[#allocation2 + $0xb8] sm:$0xff]
      %v1613 = vld [vmem:[#allocation2 + $0xc0] sm:$0xff]
      %v1614 = vld [vmem:[#allocation2 + $0xc8] sm:$0xff]
      %v1615 = vld [vmem:[#allocation2 + $0xd0] sm:$0xff]
      %v1616 = vld [vmem:[#allocation2 + $0xd8] sm:$0xff]
      %v1617 = vld [vmem:[#allocation2 + $0xe0] sm:$0xff]
      %v1618 = vld [vmem:[#allocation2 + $0xe8] sm:$0xff]
      %v1619 = vld [vmem:[#allocation2 + $0xf0] sm:$0xff]
      %v1620 = vld [vmem:[#allocation2 + $0xf8] sm:$0xff]
      %v1621 = vld [vmem:[#allocation2 + $0x100] sm:$0xff]
      %v1622 = vld [vmem:[#allocation2 + $0x108] sm:$0xff]
      %v1623 = vld [vmem:[#allocation2 + $0x110] sm:$0xff]
      %1624 = vst.msk [vmem:[#allocation3 + $0x8] sm:$0xff] %vm365, %v1592
      %1625 = vst.msk [vmem:[#allocation3 + $0x20] sm:$0xff] %vm365, %v1593
      %1626 = vst.msk [vmem:[#allocation3 + $0x38] sm:$0xff] %vm365, %v1594
      %1627 = vst.msk [vmem:[#allocation3 + $0x50] sm:$0xff] %vm365, %v1595
      %1628 = vst.msk [vmem:[#allocation3 + $0x68] sm:$0xff] %vm365, %v1596
      %1629 = vst.msk [vmem:[#allocation3 + $0x80] sm:$0xff] %vm365, %v1597
      %1630 = vst.msk [vmem:[#allocation3 + $0x98] sm:$0xff] %vm365, %v1598
      %1631 = vst.msk [vmem:[#allocation3 + $0xb0] sm:$0xff] %vm365, %v1599
      %1632 = vst.msk [vmem:[#allocation3 + $0xc8] sm:$0xff] %vm365, %v1600
      %1633 = vst.msk [vmem:[#allocation3 + $0xe0] sm:$0xff] %vm365, %v1601
      %1634 = vst.msk [vmem:[#allocation3 + $0xf8] sm:$0xff] %vm365, %v1602
      %1635 = vst.msk [vmem:[#allocation3 + $0x110] sm:$0xff] %vm365, %v1603
      %1636 = vst.msk [vmem:[#allocation3 + $0x128] sm:$0xff] %vm365, %v1604
      %1637 = vst.msk [vmem:[#allocation3 + $0x140] sm:$0xff] %vm365, %v1605
      %1638 = vst.msk [vmem:[#allocation3 + $0x158] sm:$0xff] %vm365, %v1606
      %1639 = vst.msk [vmem:[#allocation3 + $0x170] sm:$0xff] %vm365, %v1607
      %1640 = vst.msk [vmem:[#allocation3 + $0x188] sm:$0xff] %vm365, %v1608
      %1641 = vst.msk [vmem:[#allocation3 + $0x1a0] sm:$0xff] %vm365, %v1609
      %1642 = vst.msk [vmem:[#allocation3 + $0x1b8] sm:$0xff] %vm365, %v1610
      %1643 = vst.msk [vmem:[#allocation3 + $0x1d0] sm:$0xff] %vm365, %v1611
      %1644 = vst.msk [vmem:[#allocation3 + $0x1e8] sm:$0xff] %vm365, %v1612
      %1645 = vst.msk [vmem:[#allocation3 + $0x200] sm:$0xff] %vm365, %v1613
      %1646 = vst.msk [vmem:[#allocation3 + $0x218] sm:$0xff] %vm365, %v1614
      %1647 = vst.msk [vmem:[#allocation3 + $0x230] sm:$0xff] %vm365, %v1615
      %1648 = vst.msk [vmem:[#allocation3 + $0x248] sm:$0xff] %vm365, %v1616
      %1649 = vst.msk [vmem:[#allocation3 + $0x260] sm:$0xff] %vm365, %v1617
      %1650 = vst.msk [vmem:[#allocation3 + $0x278] sm:$0xff] %vm365, %v1618
      %1651 = vst.msk [vmem:[#allocation3 + $0x290] sm:$0xff] %vm365, %v1619
      %1652 = vst.msk [vmem:[#allocation3 + $0x2a8] sm:$0xff] %vm365, %v1620
      %1653 = vst.msk [vmem:[#allocation3 + $0x2c0] sm:$0xff] %vm365, %v1621
      %1654 = vst.msk [vmem:[#allocation3 + $0x2d8] sm:$0xff] %vm365, %v1622
      %1655 = vst.msk [vmem:[#allocation3 + $0x2f0] sm:$0xff] %vm365, %v1623
      %v1656 = vld [vmem:[#allocation2 + $0x19] sm:$0xff]
      %v1657 = vld [vmem:[#allocation2 + $0x21] sm:$0xff]
      %v1658 = vld [vmem:[#allocation2 + $0x29] sm:$0xff]
      %v1659 = vld [vmem:[#allocation2 + $0x31] sm:$0xff]
      %v1660 = vld [vmem:[#allocation2 + $0x39] sm:$0xff]
      %v1661 = vld [vmem:[#allocation2 + $0x41] sm:$0xff]
      %v1662 = vld [vmem:[#allocation2 + $0x49] sm:$0xff]
      %v1663 = vld [vmem:[#allocation2 + $0x51] sm:$0xff]
      %v1664 = vld [vmem:[#allocation2 + $0x59] sm:$0xff]
      %v1665 = vld [vmem:[#allocation2 + $0x61] sm:$0xff]
      %v1666 = vld [vmem:[#allocation2 + $0x69] sm:$0xff]
      %v1667 = vld [vmem:[#allocation2 + $0x71] sm:$0xff]
      %v1668 = vld [vmem:[#allocation2 + $0x79] sm:$0xff]
      %v1669 = vld [vmem:[#allocation2 + $0x81] sm:$0xff]
      %v1670 = vld [vmem:[#allocation2 + $0x89] sm:$0xff]
      %v1671 = vld [vmem:[#allocation2 + $0x91] sm:$0xff]
      %v1672 = vld [vmem:[#allocation2 + $0x99] sm:$0xff]
      %v1673 = vld [vmem:[#allocation2 + $0xa1] sm:$0xff]
      %v1674 = vld [vmem:[#allocation2 + $0xa9] sm:$0xff]
      %v1675 = vld [vmem:[#allocation2 + $0xb1] sm:$0xff]
      %v1676 = vld [vmem:[#allocation2 + $0xb9] sm:$0xff]
      %v1677 = vld [vmem:[#allocation2 + $0xc1] sm:$0xff]
      %v1678 = vld [vmem:[#allocation2 + $0xc9] sm:$0xff]
      %v1679 = vld [vmem:[#allocation2 + $0xd1] sm:$0xff]
      %v1680 = vld [vmem:[#allocation2 + $0xd9] sm:$0xff]
      %v1681 = vld [vmem:[#allocation2 + $0xe1] sm:$0xff]
      %v1682 = vld [vmem:[#allocation2 + $0xe9] sm:$0xff]
      %v1683 = vld [vmem:[#allocation2 + $0xf1] sm:$0xff]
      %v1684 = vld [vmem:[#allocation2 + $0xf9] sm:$0xff]
      %v1685 = vld [vmem:[#allocation2 + $0x101] sm:$0xff]
      %v1686 = vld [vmem:[#allocation2 + $0x109] sm:$0xff]
      %v1687 = vld [vmem:[#allocation2 + $0x111] sm:$0xff]
      %v1688 = vsel %vm1142, %v1656, 0.0
      %v1689 = vsel %vm1143, %v1657, 0.0
      %v1690 = vsel %vm1144, %v1658, 0.0
      %v1691 = vsel %vm1145, %v1659, 0.0
      %v1692 = vsel %vm1146, %v1660, 0.0
      %v1693 = vsel %vm1147, %v1661, 0.0
      %v1694 = vsel %vm1148, %v1662, 0.0
      %v1695 = vsel %vm1149, %v1663, 0.0
      %v1696 = vsel %vm1150, %v1664, 0.0
      %v1697 = vsel %vm1151, %v1665, 0.0
      %v1698 = vsel %vm1152, %v1666, 0.0
      %v1699 = vsel %vm1153, %v1667, 0.0
      %v1700 = vsel %vm1154, %v1668, 0.0
      %v1701 = vsel %vm1155, %v1669, 0.0
      %v1702 = vsel %vm1156, %v1670, 0.0
      %v1703 = vsel %vm1157, %v1671, 0.0
      %v1704 = vsel %vm1158, %v1672, 0.0
      %v1705 = vsel %vm1159, %v1673, 0.0
      %v1706 = vsel %vm1160, %v1674, 0.0
      %v1707 = vsel %vm1161, %v1675, 0.0
      %v1708 = vsel %vm1162, %v1676, 0.0
      %v1709 = vsel %vm1163, %v1677, 0.0
      %v1710 = vsel %vm1164, %v1678, 0.0
      %v1711 = vsel %vm1165, %v1679, 0.0
      %v1712 = vsel %vm1166, %v1680, 0.0
      %v1713 = vsel %vm1167, %v1681, 0.0
      %v1714 = vsel %vm1168, %v1682, 0.0
      %v1715 = vsel %vm1169, %v1683, 0.0
      %v1716 = vsel %vm1170, %v1684, 0.0
      %v1717 = vsel %vm1171, %v1685, 0.0
      %v1718 = vsel %vm1172, %v1686, 0.0
      %v1719 = vsel %vm1173, %v1687, 0.0
      %1752 = vrot.lane.b32.xlu0 %v1688, 32
      %v1753 = vpop.permute.xlu0 %1752
      %1754 = vrot.lane.b32.xlu0 %v1689, 32
      %v1755 = vpop.permute.xlu0 %1754
      %1756 = vrot.lane.b32.xlu0 %v1690, 32
      %v1757 = vpop.permute.xlu0 %1756
      %1758 = vrot.lane.b32.xlu0 %v1691, 32
      %v1759 = vpop.permute.xlu0 %1758
      %1760 = vrot.lane.b32.xlu0 %v1692, 32
      %v1761 = vpop.permute.xlu0 %1760
      %1762 = vrot.lane.b32.xlu0 %v1693, 32
      %v1763 = vpop.permute.xlu0 %1762
      %1764 = vrot.lane.b32.xlu0 %v1694, 32
      %v1765 = vpop.permute.xlu0 %1764
      %1766 = vrot.lane.b32.xlu0 %v1695, 32
      %v1767 = vpop.permute.xlu0 %1766
      %1768 = vrot.lane.b32.xlu0 %v1696, 32
      %v1769 = vpop.permute.xlu0 %1768
      %1770 = vrot.lane.b32.xlu0 %v1697, 32
      %v1771 = vpop.permute.xlu0 %1770
      %1772 = vrot.lane.b32.xlu0 %v1698, 32
      %v1773 = vpop.permute.xlu0 %1772
      %1774 = vrot.lane.b32.xlu0 %v1699, 32
      %v1775 = vpop.permute.xlu0 %1774
      %1776 = vrot.lane.b32.xlu0 %v1700, 32
      %v1777 = vpop.permute.xlu0 %1776
      %1778 = vrot.lane.b32.xlu0 %v1701, 32
      %v1779 = vpop.permute.xlu0 %1778
      %1780 = vrot.lane.b32.xlu0 %v1702, 32
      %v1781 = vpop.permute.xlu0 %1780
      %1782 = vrot.lane.b32.xlu0 %v1703, 32
      %v1783 = vpop.permute.xlu0 %1782
      %1784 = vrot.lane.b32.xlu0 %v1704, 32
      %v1785 = vpop.permute.xlu0 %1784
      %1786 = vrot.lane.b32.xlu0 %v1705, 32
      %v1787 = vpop.permute.xlu0 %1786
      %1788 = vrot.lane.b32.xlu0 %v1706, 32
      %v1789 = vpop.permute.xlu0 %1788
      %1790 = vrot.lane.b32.xlu0 %v1707, 32
      %v1791 = vpop.permute.xlu0 %1790
      %1792 = vrot.lane.b32.xlu0 %v1708, 32
      %v1793 = vpop.permute.xlu0 %1792
      %1794 = vrot.lane.b32.xlu0 %v1709, 32
      %v1795 = vpop.permute.xlu0 %1794
      %1796 = vrot.lane.b32.xlu0 %v1710, 32
      %v1797 = vpop.permute.xlu0 %1796
      %1798 = vrot.lane.b32.xlu0 %v1711, 32
      %v1799 = vpop.permute.xlu0 %1798
      %1800 = vrot.lane.b32.xlu0 %v1712, 32
      %v1801 = vpop.permute.xlu0 %1800
      %1802 = vrot.lane.b32.xlu0 %v1713, 32
      %v1803 = vpop.permute.xlu0 %1802
      %1804 = vrot.lane.b32.xlu0 %v1714, 32
      %v1805 = vpop.permute.xlu0 %1804
      %1806 = vrot.lane.b32.xlu0 %v1715, 32
      %v1807 = vpop.permute.xlu0 %1806
      %1808 = vrot.lane.b32.xlu0 %v1716, 32
      %v1809 = vpop.permute.xlu0 %1808
      %1810 = vrot.lane.b32.xlu0 %v1717, 32
      %v1811 = vpop.permute.xlu0 %1810
      %1812 = vrot.lane.b32.xlu0 %v1718, 32
      %v1813 = vpop.permute.xlu0 %1812
      %1814 = vrot.lane.b32.xlu0 %v1719, 32
      %v1815 = vpop.permute.xlu0 %1814
      %1848 = vst.msk [vmem:[#allocation3 + $0x8] sm:$0xff] %vm1045, %v1753
      %1849 = vst.msk [vmem:[#allocation3 + $0x20] sm:$0xff] %vm1045, %v1755
      %1850 = vst.msk [vmem:[#allocation3 + $0x38] sm:$0xff] %vm1045, %v1757
      %1851 = vst.msk [vmem:[#allocation3 + $0x50] sm:$0xff] %vm1045, %v1759
      %1852 = vst.msk [vmem:[#allocation3 + $0x68] sm:$0xff] %vm1045, %v1761
      %1853 = vst.msk [vmem:[#allocation3 + $0x80] sm:$0xff] %vm1045, %v1763
      %1854 = vst.msk [vmem:[#allocation3 + $0x98] sm:$0xff] %vm1045, %v1765
      %1855 = vst.msk [vmem:[#allocation3 + $0xb0] sm:$0xff] %vm1045, %v1767
      %1856 = vst.msk [vmem:[#allocation3 + $0xc8] sm:$0xff] %vm1045, %v1769
      %1857 = vst.msk [vmem:[#allocation3 + $0xe0] sm:$0xff] %vm1045, %v1771
      %1858 = vst.msk [vmem:[#allocation3 + $0xf8] sm:$0xff] %vm1045, %v1773
      %1859 = vst.msk [vmem:[#allocation3 + $0x110] sm:$0xff] %vm1045, %v1775
      %1860 = vst.msk [vmem:[#allocation3 + $0x128] sm:$0xff] %vm1045, %v1777
      %1861 = vst.msk [vmem:[#allocation3 + $0x140] sm:$0xff] %vm1045, %v1779
      %1862 = vst.msk [vmem:[#allocation3 + $0x158] sm:$0xff] %vm1045, %v1781
      %1863 = vst.msk [vmem:[#allocation3 + $0x170] sm:$0xff] %vm1045, %v1783
      %1864 = vst.msk [vmem:[#allocation3 + $0x188] sm:$0xff] %vm1045, %v1785
      %1865 = vst.msk [vmem:[#allocation3 + $0x1a0] sm:$0xff] %vm1045, %v1787
      %1866 = vst.msk [vmem:[#allocation3 + $0x1b8] sm:$0xff] %vm1045, %v1789
      %1867 = vst.msk [vmem:[#allocation3 + $0x1d0] sm:$0xff] %vm1045, %v1791
      %1868 = vst.msk [vmem:[#allocation3 + $0x1e8] sm:$0xff] %vm1045, %v1793
      %1869 = vst.msk [vmem:[#allocation3 + $0x200] sm:$0xff] %vm1045, %v1795
      %1870 = vst.msk [vmem:[#allocation3 + $0x218] sm:$0xff] %vm1045, %v1797
      %1871 = vst.msk [vmem:[#allocation3 + $0x230] sm:$0xff] %vm1045, %v1799
      %1872 = vst.msk [vmem:[#allocation3 + $0x248] sm:$0xff] %vm1045, %v1801
      %1873 = vst.msk [vmem:[#allocation3 + $0x260] sm:$0xff] %vm1045, %v1803
      %1874 = vst.msk [vmem:[#allocation3 + $0x278] sm:$0xff] %vm1045, %v1805
      %1875 = vst.msk [vmem:[#allocation3 + $0x290] sm:$0xff] %vm1045, %v1807
      %1876 = vst.msk [vmem:[#allocation3 + $0x2a8] sm:$0xff] %vm1045, %v1809
      %1877 = vst.msk [vmem:[#allocation3 + $0x2c0] sm:$0xff] %vm1045, %v1811
      %1878 = vst.msk [vmem:[#allocation3 + $0x2d8] sm:$0xff] %vm1045, %v1813
      %1879 = vst.msk [vmem:[#allocation3 + $0x2f0] sm:$0xff] %vm1045, %v1815
      %v1880 = vld [vmem:[#allocation2 + $0x27] sm:$0xff]
      %v1881 = vld [vmem:[#allocation2 + $0x2f] sm:$0xff]
      %v1882 = vld [vmem:[#allocation2 + $0x37] sm:$0xff]
      %v1883 = vld [vmem:[#allocation2 + $0x3f] sm:$0xff]
      %v1884 = vld [vmem:[#allocation2 + $0x47] sm:$0xff]
      %v1885 = vld [vmem:[#allocation2 + $0x4f] sm:$0xff]
      %v1886 = vld [vmem:[#allocation2 + $0x57] sm:$0xff]
      %v1887 = vld [vmem:[#allocation2 + $0x5f] sm:$0xff]
      %v1888 = vld [vmem:[#allocation2 + $0x67] sm:$0xff]
      %v1889 = vld [vmem:[#allocation2 + $0x6f] sm:$0xff]
      %v1890 = vld [vmem:[#allocation2 + $0x77] sm:$0xff]
      %v1891 = vld [vmem:[#allocation2 + $0x7f] sm:$0xff]
      %v1892 = vld [vmem:[#allocation2 + $0x87] sm:$0xff]
      %v1893 = vld [vmem:[#allocation2 + $0x8f] sm:$0xff]
      %v1894 = vld [vmem:[#allocation2 + $0x97] sm:$0xff]
      %v1895 = vld [vmem:[#allocation2 + $0x9f] sm:$0xff]
      %v1896 = vld [vmem:[#allocation2 + $0xa7] sm:$0xff]
      %v1897 = vld [vmem:[#allocation2 + $0xaf] sm:$0xff]
      %v1898 = vld [vmem:[#allocation2 + $0xb7] sm:$0xff]
      %v1899 = vld [vmem:[#allocation2 + $0xbf] sm:$0xff]
      %v1900 = vld [vmem:[#allocation2 + $0xc7] sm:$0xff]
      %v1901 = vld [vmem:[#allocation2 + $0xcf] sm:$0xff]
      %v1902 = vld [vmem:[#allocation2 + $0xd7] sm:$0xff]
      %v1903 = vld [vmem:[#allocation2 + $0xdf] sm:$0xff]
      %v1904 = vld [vmem:[#allocation2 + $0xe7] sm:$0xff]
      %v1905 = vld [vmem:[#allocation2 + $0xef] sm:$0xff]
      %v1906 = vld [vmem:[#allocation2 + $0xf7] sm:$0xff]
      %v1907 = vld [vmem:[#allocation2 + $0xff] sm:$0xff]
      %v1908 = vld [vmem:[#allocation2 + $0x107] sm:$0xff]
      %v1909 = vld [vmem:[#allocation2 + $0x10f] sm:$0xff]
      %v1910 = vld [vmem:[#allocation2 + $0x117] sm:$0xff]
      %v1911 = vld [vmem:[#allocation2 + $0x11f] sm:$0xff]
      %v1912 = vsel %vm789, %v1880, 0.0
      %v1913 = vsel %vm790, %v1881, 0.0
      %v1914 = vsel %vm791, %v1882, 0.0
      %v1915 = vsel %vm792, %v1883, 0.0
      %v1916 = vsel %vm793, %v1884, 0.0
      %v1917 = vsel %vm794, %v1885, 0.0
      %v1918 = vsel %vm795, %v1886, 0.0
      %v1919 = vsel %vm796, %v1887, 0.0
      %v1920 = vsel %vm797, %v1888, 0.0
      %v1921 = vsel %vm798, %v1889, 0.0
      %v1922 = vsel %vm799, %v1890, 0.0
      %v1923 = vsel %vm800, %v1891, 0.0
      %v1924 = vsel %vm801, %v1892, 0.0
      %v1925 = vsel %vm802, %v1893, 0.0
      %v1926 = vsel %vm803, %v1894, 0.0
      %v1927 = vsel %vm804, %v1895, 0.0
      %v1928 = vsel %vm805, %v1896, 0.0
      %v1929 = vsel %vm806, %v1897, 0.0
      %v1930 = vsel %vm807, %v1898, 0.0
      %v1931 = vsel %vm808, %v1899, 0.0
      %v1932 = vsel %vm809, %v1900, 0.0
      %v1933 = vsel %vm810, %v1901, 0.0
      %v1934 = vsel %vm811, %v1902, 0.0
      %v1935 = vsel %vm812, %v1903, 0.0
      %v1936 = vsel %vm813, %v1904, 0.0
      %v1937 = vsel %vm814, %v1905, 0.0
      %v1938 = vsel %vm815, %v1906, 0.0
      %v1939 = vsel %vm816, %v1907, 0.0
      %v1940 = vsel %vm817, %v1908, 0.0
      %v1941 = vsel %vm818, %v1909, 0.0
      %v1942 = vsel %vm819, %v1910, 0.0
      %v1943 = vsel %vm820, %v1911, 0.0
      %1976 = vrot.lane.b32.xlu0 %v1912, 64
      %v1977 = vpop.permute.xlu0 %1976
      %1978 = vrot.lane.b32.xlu0 %v1913, 64
      %v1979 = vpop.permute.xlu0 %1978
      %1980 = vrot.lane.b32.xlu0 %v1914, 64
      %v1981 = vpop.permute.xlu0 %1980
      %1982 = vrot.lane.b32.xlu0 %v1915, 64
      %v1983 = vpop.permute.xlu0 %1982
      %1984 = vrot.lane.b32.xlu0 %v1916, 64
      %v1985 = vpop.permute.xlu0 %1984
      %1986 = vrot.lane.b32.xlu0 %v1917, 64
      %v1987 = vpop.permute.xlu0 %1986
      %1988 = vrot.lane.b32.xlu0 %v1918, 64
      %v1989 = vpop.permute.xlu0 %1988
      %1990 = vrot.lane.b32.xlu0 %v1919, 64
      %v1991 = vpop.permute.xlu0 %1990
      %1992 = vrot.lane.b32.xlu0 %v1920, 64
      %v1993 = vpop.permute.xlu0 %1992
      %1994 = vrot.lane.b32.xlu0 %v1921, 64
      %v1995 = vpop.permute.xlu0 %1994
      %1996 = vrot.lane.b32.xlu0 %v1922, 64
      %v1997 = vpop.permute.xlu0 %1996
      %1998 = vrot.lane.b32.xlu0 %v1923, 64
      %v1999 = vpop.permute.xlu0 %1998
      %2000 = vrot.lane.b32.xlu0 %v1924, 64
      %v2001 = vpop.permute.xlu0 %2000
      %2002 = vrot.lane.b32.xlu0 %v1925, 64
      %v2003 = vpop.permute.xlu0 %2002
      %2004 = vrot.lane.b32.xlu0 %v1926, 64
      %v2005 = vpop.permute.xlu0 %2004
      %2006 = vrot.lane.b32.xlu0 %v1927, 64
      %v2007 = vpop.permute.xlu0 %2006
      %2008 = vrot.lane.b32.xlu0 %v1928, 64
      %v2009 = vpop.permute.xlu0 %2008
      %2010 = vrot.lane.b32.xlu0 %v1929, 64
      %v2011 = vpop.permute.xlu0 %2010
      %2012 = vrot.lane.b32.xlu0 %v1930, 64
      %v2013 = vpop.permute.xlu0 %2012
      %2014 = vrot.lane.b32.xlu0 %v1931, 64
      %v2015 = vpop.permute.xlu0 %2014
      %2016 = vrot.lane.b32.xlu0 %v1932, 64
      %v2017 = vpop.permute.xlu0 %2016
      %2018 = vrot.lane.b32.xlu0 %v1933, 64
      %v2019 = vpop.permute.xlu0 %2018
      %2020 = vrot.lane.b32.xlu0 %v1934, 64
      %v2021 = vpop.permute.xlu0 %2020
      %2022 = vrot.lane.b32.xlu0 %v1935, 64
      %v2023 = vpop.permute.xlu0 %2022
      %2024 = vrot.lane.b32.xlu0 %v1936, 64
      %v2025 = vpop.permute.xlu0 %2024
      %2026 = vrot.lane.b32.xlu0 %v1937, 64
      %v2027 = vpop.permute.xlu0 %2026
      %2028 = vrot.lane.b32.xlu0 %v1938, 64
      %v2029 = vpop.permute.xlu0 %2028
      %2030 = vrot.lane.b32.xlu0 %v1939, 64
      %v2031 = vpop.permute.xlu0 %2030
      %2032 = vrot.lane.b32.xlu0 %v1940, 64
      %v2033 = vpop.permute.xlu0 %2032
      %2034 = vrot.lane.b32.xlu0 %v1941, 64
      %v2035 = vpop.permute.xlu0 %2034
      %2036 = vrot.lane.b32.xlu0 %v1942, 64
      %v2037 = vpop.permute.xlu0 %2036
      %2038 = vrot.lane.b32.xlu0 %v1943, 64
      %v2039 = vpop.permute.xlu0 %2038
      %2072 = vst.msk [vmem:[#allocation3 + $0x8] sm:$0xff] %vm1334, %v1977
      %2073 = vst.msk [vmem:[#allocation3 + $0x20] sm:$0xff] %vm1334, %v1979
      %2074 = vst.msk [vmem:[#allocation3 + $0x38] sm:$0xff] %vm1334, %v1981
      %2075 = vst.msk [vmem:[#allocation3 + $0x50] sm:$0xff] %vm1334, %v1983
      %2076 = vst.msk [vmem:[#allocation3 + $0x68] sm:$0xff] %vm1334, %v1985
      %2077 = vst.msk [vmem:[#allocation3 + $0x80] sm:$0xff] %vm1334, %v1987
      %2078 = vst.msk [vmem:[#allocation3 + $0x98] sm:$0xff] %vm1334, %v1989
      %2079 = vst.msk [vmem:[#allocation3 + $0xb0] sm:$0xff] %vm1334, %v1991
      %2080 = vst.msk [vmem:[#allocation3 + $0xc8] sm:$0xff] %vm1334, %v1993
      %2081 = vst.msk [vmem:[#allocation3 + $0xe0] sm:$0xff] %vm1334, %v1995
      %2082 = vst.msk [vmem:[#allocation3 + $0xf8] sm:$0xff] %vm1334, %v1997
      %2083 = vst.msk [vmem:[#allocation3 + $0x110] sm:$0xff] %vm1334, %v1999
      %2084 = vst.msk [vmem:[#allocation3 + $0x128] sm:$0xff] %vm1334, %v2001
      %2085 = vst.msk [vmem:[#allocation3 + $0x140] sm:$0xff] %vm1334, %v2003
      %2086 = vst.msk [vmem:[#allocation3 + $0x158] sm:$0xff] %vm1334, %v2005
      %2087 = vst.msk [vmem:[#allocation3 + $0x170] sm:$0xff] %vm1334, %v2007
      %2088 = vst.msk [vmem:[#allocation3 + $0x188] sm:$0xff] %vm1334, %v2009
      %2089 = vst.msk [vmem:[#allocation3 + $0x1a0] sm:$0xff] %vm1334, %v2011
      %2090 = vst.msk [vmem:[#allocation3 + $0x1b8] sm:$0xff] %vm1334, %v2013
      %2091 = vst.msk [vmem:[#allocation3 + $0x1d0] sm:$0xff] %vm1334, %v2015
      %2092 = vst.msk [vmem:[#allocation3 + $0x1e8] sm:$0xff] %vm1334, %v2017
      %2093 = vst.msk [vmem:[#allocation3 + $0x200] sm:$0xff] %vm1334, %v2019
      %2094 = vst.msk [vmem:[#allocation3 + $0x218] sm:$0xff] %vm1334, %v2021
      %2095 = vst.msk [vmem:[#allocation3 + $0x230] sm:$0xff] %vm1334, %v2023
      %2096 = vst.msk [vmem:[#allocation3 + $0x248] sm:$0xff] %vm1334, %v2025
      %2097 = vst.msk [vmem:[#allocation3 + $0x260] sm:$0xff] %vm1334, %v2027
      %2098 = vst.msk [vmem:[#allocation3 + $0x278] sm:$0xff] %vm1334, %v2029
      %2099 = vst.msk [vmem:[#allocation3 + $0x290] sm:$0xff] %vm1334, %v2031
      %2100 = vst.msk [vmem:[#allocation3 + $0x2a8] sm:$0xff] %vm1334, %v2033
      %2101 = vst.msk [vmem:[#allocation3 + $0x2c0] sm:$0xff] %vm1334, %v2035
      %2102 = vst.msk [vmem:[#allocation3 + $0x2d8] sm:$0xff] %vm1334, %v2037
      %2103 = vst.msk [vmem:[#allocation3 + $0x2f0] sm:$0xff] %vm1334, %v2039
      %v2104 = vld [vmem:[#allocation2 + $0x28] sm:$0xff]
      %v2105 = vld [vmem:[#allocation2 + $0x30] sm:$0xff]
      %v2106 = vld [vmem:[#allocation2 + $0x38] sm:$0xff]
      %v2107 = vld [vmem:[#allocation2 + $0x40] sm:$0xff]
      %v2108 = vld [vmem:[#allocation2 + $0x48] sm:$0xff]
      %v2109 = vld [vmem:[#allocation2 + $0x50] sm:$0xff]
      %v2110 = vld [vmem:[#allocation2 + $0x58] sm:$0xff]
      %v2111 = vld [vmem:[#allocation2 + $0x60] sm:$0xff]
      %v2112 = vld [vmem:[#allocation2 + $0x68] sm:$0xff]
      %v2113 = vld [vmem:[#allocation2 + $0x70] sm:$0xff]
      %v2114 = vld [vmem:[#allocation2 + $0x78] sm:$0xff]
      %v2115 = vld [vmem:[#allocation2 + $0x80] sm:$0xff]
      %v2116 = vld [vmem:[#allocation2 + $0x88] sm:$0xff]
      %v2117 = vld [vmem:[#allocation2 + $0x90] sm:$0xff]
      %v2118 = vld [vmem:[#allocation2 + $0x98] sm:$0xff]
      %v2119 = vld [vmem:[#allocation2 + $0xa0] sm:$0xff]
      %v2120 = vld [vmem:[#allocation2 + $0xa8] sm:$0xff]
      %v2121 = vld [vmem:[#allocation2 + $0xb0] sm:$0xff]
      %v2122 = vld [vmem:[#allocation2 + $0xb8] sm:$0xff]
      %v2123 = vld [vmem:[#allocation2 + $0xc0] sm:$0xff]
      %v2124 = vld [vmem:[#allocation2 + $0xc8] sm:$0xff]
      %v2125 = vld [vmem:[#allocation2 + $0xd0] sm:$0xff]
      %v2126 = vld [vmem:[#allocation2 + $0xd8] sm:$0xff]
      %v2127 = vld [vmem:[#allocation2 + $0xe0] sm:$0xff]
      %v2128 = vld [vmem:[#allocation2 + $0xe8] sm:$0xff]
      %v2129 = vld [vmem:[#allocation2 + $0xf0] sm:$0xff]
      %v2130 = vld [vmem:[#allocation2 + $0xf8] sm:$0xff]
      %v2131 = vld [vmem:[#allocation2 + $0x100] sm:$0xff]
      %v2132 = vld [vmem:[#allocation2 + $0x108] sm:$0xff]
      %v2133 = vld [vmem:[#allocation2 + $0x110] sm:$0xff]
      %v2134 = vld [vmem:[#allocation2 + $0x118] sm:$0xff]
      %v2135 = vld [vmem:[#allocation2 + $0x120] sm:$0xff]
      %2168 = vrot.lane.b32.xlu0 %v2104, 96
      %v2169 = vpop.permute.xlu0 %2168
      %2170 = vrot.lane.b32.xlu0 %v2105, 96
      %v2171 = vpop.permute.xlu0 %2170
      %2172 = vrot.lane.b32.xlu0 %v2106, 96
      %v2173 = vpop.permute.xlu0 %2172
      %2174 = vrot.lane.b32.xlu0 %v2107, 96
      %v2175 = vpop.permute.xlu0 %2174
      %2176 = vrot.lane.b32.xlu0 %v2108, 96
      %v2177 = vpop.permute.xlu0 %2176
      %2178 = vrot.lane.b32.xlu0 %v2109, 96
      %v2179 = vpop.permute.xlu0 %2178
      %2180 = vrot.lane.b32.xlu0 %v2110, 96
      %v2181 = vpop.permute.xlu0 %2180
      %2182 = vrot.lane.b32.xlu0 %v2111, 96
      %v2183 = vpop.permute.xlu0 %2182
      %2184 = vrot.lane.b32.xlu0 %v2112, 96
      %v2185 = vpop.permute.xlu0 %2184
      %2186 = vrot.lane.b32.xlu0 %v2113, 96
      %v2187 = vpop.permute.xlu0 %2186
      %2188 = vrot.lane.b32.xlu0 %v2114, 96
      %v2189 = vpop.permute.xlu0 %2188
      %2190 = vrot.lane.b32.xlu0 %v2115, 96
      %v2191 = vpop.permute.xlu0 %2190
      %2192 = vrot.lane.b32.xlu0 %v2116, 96
      %v2193 = vpop.permute.xlu0 %2192
      %2194 = vrot.lane.b32.xlu0 %v2117, 96
      %v2195 = vpop.permute.xlu0 %2194
      %2196 = vrot.lane.b32.xlu0 %v2118, 96
      %v2197 = vpop.permute.xlu0 %2196
      %2198 = vrot.lane.b32.xlu0 %v2119, 96
      %v2199 = vpop.permute.xlu0 %2198
      %2200 = vrot.lane.b32.xlu0 %v2120, 96
      %v2201 = vpop.permute.xlu0 %2200
      %2202 = vrot.lane.b32.xlu0 %v2121, 96
      %v2203 = vpop.permute.xlu0 %2202
      %2204 = vrot.lane.b32.xlu0 %v2122, 96
      %v2205 = vpop.permute.xlu0 %2204
      %2206 = vrot.lane.b32.xlu0 %v2123, 96
      %v2207 = vpop.permute.xlu0 %2206
      %2208 = vrot.lane.b32.xlu0 %v2124, 96
      %v2209 = vpop.permute.xlu0 %2208
      %2210 = vrot.lane.b32.xlu0 %v2125, 96
      %v2211 = vpop.permute.xlu0 %2210
      %2212 = vrot.lane.b32.xlu0 %v2126, 96
      %v2213 = vpop.permute.xlu0 %2212
      %2214 = vrot.lane.b32.xlu0 %v2127, 96
      %v2215 = vpop.permute.xlu0 %2214
      %2216 = vrot.lane.b32.xlu0 %v2128, 96
      %v2217 = vpop.permute.xlu0 %2216
      %2218 = vrot.lane.b32.xlu0 %v2129, 96
      %v2219 = vpop.permute.xlu0 %2218
      %2220 = vrot.lane.b32.xlu0 %v2130, 96
      %v2221 = vpop.permute.xlu0 %2220
      %2222 = vrot.lane.b32.xlu0 %v2131, 96
      %v2223 = vpop.permute.xlu0 %2222
      %2224 = vrot.lane.b32.xlu0 %v2132, 96
      %v2225 = vpop.permute.xlu0 %2224
      %2226 = vrot.lane.b32.xlu0 %v2133, 96
      %v2227 = vpop.permute.xlu0 %2226
      %2228 = vrot.lane.b32.xlu0 %v2134, 96
      %v2229 = vpop.permute.xlu0 %2228
      %2230 = vrot.lane.b32.xlu0 %v2135, 96
      %v2231 = vpop.permute.xlu0 %2230
      %2264 = vst.msk [vmem:[#allocation3 + $0x8] sm:$0xff] %vm1559, %v2169
      %2265 = vst.msk [vmem:[#allocation3 + $0x20] sm:$0xff] %vm1559, %v2171
      %2266 = vst.msk [vmem:[#allocation3 + $0x38] sm:$0xff] %vm1559, %v2173
      %2267 = vst.msk [vmem:[#allocation3 + $0x50] sm:$0xff] %vm1559, %v2175
      %2268 = vst.msk [vmem:[#allocation3 + $0x68] sm:$0xff] %vm1559, %v2177
      %2269 = vst.msk [vmem:[#allocation3 + $0x80] sm:$0xff] %vm1559, %v2179
      %2270 = vst.msk [vmem:[#allocation3 + $0x98] sm:$0xff] %vm1559, %v2181
      %2271 = vst.msk [vmem:[#allocation3 + $0xb0] sm:$0xff] %vm1559, %v2183
      %2272 = vst.msk [vmem:[#allocation3 + $0xc8] sm:$0xff] %vm1559, %v2185
      %2273 = vst.msk [vmem:[#allocation3 + $0xe0] sm:$0xff] %vm1559, %v2187
      %2274 = vst.msk [vmem:[#allocation3 + $0xf8] sm:$0xff] %vm1559, %v2189
      %2275 = vst.msk [vmem:[#allocation3 + $0x110] sm:$0xff] %vm1559, %v2191
      %2276 = vst.msk [vmem:[#allocation3 + $0x128] sm:$0xff] %vm1559, %v2193
      %2277 = vst.msk [vmem:[#allocation3 + $0x140] sm:$0xff] %vm1559, %v2195
      %2278 = vst.msk [vmem:[#allocation3 + $0x158] sm:$0xff] %vm1559, %v2197
      %2279 = vst.msk [vmem:[#allocation3 + $0x170] sm:$0xff] %vm1559, %v2199
      %2280 = vst.msk [vmem:[#allocation3 + $0x188] sm:$0xff] %vm1559, %v2201
      %2281 = vst.msk [vmem:[#allocation3 + $0x1a0] sm:$0xff] %vm1559, %v2203
      %2282 = vst.msk [vmem:[#allocation3 + $0x1b8] sm:$0xff] %vm1559, %v2205
      %2283 = vst.msk [vmem:[#allocation3 + $0x1d0] sm:$0xff] %vm1559, %v2207
      %2284 = vst.msk [vmem:[#allocation3 + $0x1e8] sm:$0xff] %vm1559, %v2209
      %2285 = vst.msk [vmem:[#allocation3 + $0x200] sm:$0xff] %vm1559, %v2211
      %2286 = vst.msk [vmem:[#allocation3 + $0x218] sm:$0xff] %vm1559, %v2213
      %2287 = vst.msk [vmem:[#allocation3 + $0x230] sm:$0xff] %vm1559, %v2215
      %2288 = vst.msk [vmem:[#allocation3 + $0x248] sm:$0xff] %vm1559, %v2217
      %2289 = vst.msk [vmem:[#allocation3 + $0x260] sm:$0xff] %vm1559, %v2219
      %2290 = vst.msk [vmem:[#allocation3 + $0x278] sm:$0xff] %vm1559, %v2221
      %2291 = vst.msk [vmem:[#allocation3 + $0x290] sm:$0xff] %vm1559, %v2223
      %2292 = vst.msk [vmem:[#allocation3 + $0x2a8] sm:$0xff] %vm1559, %v2225
      %2293 = vst.msk [vmem:[#allocation3 + $0x2c0] sm:$0xff] %vm1559, %v2227
      %2294 = vst.msk [vmem:[#allocation3 + $0x2d8] sm:$0xff] %vm1559, %v2229
      %2295 = vst.msk [vmem:[#allocation3 + $0x2f0] sm:$0xff] %vm1559, %v2231
      %v2296 = vld [vmem:[#allocation2 + $0x29] sm:$0xff]
      %v2297 = vld [vmem:[#allocation2 + $0x31] sm:$0xff]
      %v2298 = vld [vmem:[#allocation2 + $0x39] sm:$0xff]
      %v2299 = vld [vmem:[#allocation2 + $0x41] sm:$0xff]
      %v2300 = vld [vmem:[#allocation2 + $0x49] sm:$0xff]
      %v2301 = vld [vmem:[#allocation2 + $0x51] sm:$0xff]
      %v2302 = vld [vmem:[#allocation2 + $0x59] sm:$0xff]
      %v2303 = vld [vmem:[#allocation2 + $0x61] sm:$0xff]
      %v2304 = vld [vmem:[#allocation2 + $0x69] sm:$0xff]
      %v2305 = vld [vmem:[#allocation2 + $0x71] sm:$0xff]
      %v2306 = vld [vmem:[#allocation2 + $0x79] sm:$0xff]
      %v2307 = vld [vmem:[#allocation2 + $0x81] sm:$0xff]
      %v2308 = vld [vmem:[#allocation2 + $0x89] sm:$0xff]
      %v2309 = vld [vmem:[#allocation2 + $0x91] sm:$0xff]
      %v2310 = vld [vmem:[#allocation2 + $0x99] sm:$0xff]
      %v2311 = vld [vmem:[#allocation2 + $0xa1] sm:$0xff]
      %v2312 = vld [vmem:[#allocation2 + $0xa9] sm:$0xff]
      %v2313 = vld [vmem:[#allocation2 + $0xb1] sm:$0xff]
      %v2314 = vld [vmem:[#allocation2 + $0xb9] sm:$0xff]
      %v2315 = vld [vmem:[#allocation2 + $0xc1] sm:$0xff]
      %v2316 = vld [vmem:[#allocation2 + $0xc9] sm:$0xff]
      %v2317 = vld [vmem:[#allocation2 + $0xd1] sm:$0xff]
      %v2318 = vld [vmem:[#allocation2 + $0xd9] sm:$0xff]
      %v2319 = vld [vmem:[#allocation2 + $0xe1] sm:$0xff]
      %v2320 = vld [vmem:[#allocation2 + $0xe9] sm:$0xff]
      %v2321 = vld [vmem:[#allocation2 + $0xf1] sm:$0xff]
      %v2322 = vld [vmem:[#allocation2 + $0xf9] sm:$0xff]
      %v2323 = vld [vmem:[#allocation2 + $0x101] sm:$0xff]
      %v2324 = vld [vmem:[#allocation2 + $0x109] sm:$0xff]
      %v2325 = vld [vmem:[#allocation2 + $0x111] sm:$0xff]
      %v2326 = vld [vmem:[#allocation2 + $0x119] sm:$0xff]
      %v2327 = vld [vmem:[#allocation2 + $0x121] sm:$0xff]
      %v2328 = vsel %vm1142, %v2296, 0.0
      %v2329 = vsel %vm1143, %v2297, 0.0
      %v2330 = vsel %vm1144, %v2298, 0.0
      %v2331 = vsel %vm1145, %v2299, 0.0
      %v2332 = vsel %vm1146, %v2300, 0.0
      %v2333 = vsel %vm1147, %v2301, 0.0
      %v2334 = vsel %vm1148, %v2302, 0.0
      %v2335 = vsel %vm1149, %v2303, 0.0
      %v2336 = vsel %vm1150, %v2304, 0.0
      %v2337 = vsel %vm1151, %v2305, 0.0
      %v2338 = vsel %vm1152, %v2306, 0.0
      %v2339 = vsel %vm1153, %v2307, 0.0
      %v2340 = vsel %vm1154, %v2308, 0.0
      %v2341 = vsel %vm1155, %v2309, 0.0
      %v2342 = vsel %vm1156, %v2310, 0.0
      %v2343 = vsel %vm1157, %v2311, 0.0
      %v2344 = vsel %vm1158, %v2312, 0.0
      %v2345 = vsel %vm1159, %v2313, 0.0
      %v2346 = vsel %vm1160, %v2314, 0.0
      %v2347 = vsel %vm1161, %v2315, 0.0
      %v2348 = vsel %vm1162, %v2316, 0.0
      %v2349 = vsel %vm1163, %v2317, 0.0
      %v2350 = vsel %vm1164, %v2318, 0.0
      %v2351 = vsel %vm1165, %v2319, 0.0
      %v2352 = vsel %vm1166, %v2320, 0.0
      %v2353 = vsel %vm1167, %v2321, 0.0
      %v2354 = vsel %vm1168, %v2322, 0.0
      %v2355 = vsel %vm1169, %v2323, 0.0
      %v2356 = vsel %vm1170, %v2324, 0.0
      %v2357 = vsel %vm1171, %v2325, 0.0
      %v2358 = vsel %vm1172, %v2326, 0.0
      %v2359 = vsel %vm1173, %v2327, 0.0
      %2360 = vst.msk [vmem:[#allocation3 + $0x10] sm:$0xff] %vm365, %v2328
      %2361 = vst.msk [vmem:[#allocation3 + $0x28] sm:$0xff] %vm365, %v2329
      %2362 = vst.msk [vmem:[#allocation3 + $0x40] sm:$0xff] %vm365, %v2330
      %2363 = vst.msk [vmem:[#allocation3 + $0x58] sm:$0xff] %vm365, %v2331
      %2364 = vst.msk [vmem:[#allocation3 + $0x70] sm:$0xff] %vm365, %v2332
      %2365 = vst.msk [vmem:[#allocation3 + $0x88] sm:$0xff] %vm365, %v2333
      %2366 = vst.msk [vmem:[#allocation3 + $0xa0] sm:$0xff] %vm365, %v2334
      %2367 = vst.msk [vmem:[#allocation3 + $0xb8] sm:$0xff] %vm365, %v2335
      %2368 = vst.msk [vmem:[#allocation3 + $0xd0] sm:$0xff] %vm365, %v2336
      %2369 = vst.msk [vmem:[#allocation3 + $0xe8] sm:$0xff] %vm365, %v2337
      %2370 = vst.msk [vmem:[#allocation3 + $0x100] sm:$0xff] %vm365, %v2338
      %2371 = vst.msk [vmem:[#allocation3 + $0x118] sm:$0xff] %vm365, %v2339
      %2372 = vst.msk [vmem:[#allocation3 + $0x130] sm:$0xff] %vm365, %v2340
      %2373 = vst.msk [vmem:[#allocation3 + $0x148] sm:$0xff] %vm365, %v2341
      %2374 = vst.msk [vmem:[#allocation3 + $0x160] sm:$0xff] %vm365, %v2342
      %2375 = vst.msk [vmem:[#allocation3 + $0x178] sm:$0xff] %vm365, %v2343
      %2376 = vst.msk [vmem:[#allocation3 + $0x190] sm:$0xff] %vm365, %v2344
      %2377 = vst.msk [vmem:[#allocation3 + $0x1a8] sm:$0xff] %vm365, %v2345
      %2378 = vst.msk [vmem:[#allocation3 + $0x1c0] sm:$0xff] %vm365, %v2346
      %2379 = vst.msk [vmem:[#allocation3 + $0x1d8] sm:$0xff] %vm365, %v2347
      %2380 = vst.msk [vmem:[#allocation3 + $0x1f0] sm:$0xff] %vm365, %v2348
      %2381 = vst.msk [vmem:[#allocation3 + $0x208] sm:$0xff] %vm365, %v2349
      %2382 = vst.msk [vmem:[#allocation3 + $0x220] sm:$0xff] %vm365, %v2350
      %2383 = vst.msk [vmem:[#allocation3 + $0x238] sm:$0xff] %vm365, %v2351
      %2384 = vst.msk [vmem:[#allocation3 + $0x250] sm:$0xff] %vm365, %v2352
      %2385 = vst.msk [vmem:[#allocation3 + $0x268] sm:$0xff] %vm365, %v2353
      %2386 = vst.msk [vmem:[#allocation3 + $0x280] sm:$0xff] %vm365, %v2354
      %2387 = vst.msk [vmem:[#allocation3 + $0x298] sm:$0xff] %vm365, %v2355
      %2388 = vst.msk [vmem:[#allocation3 + $0x2b0] sm:$0xff] %vm365, %v2356
      %2389 = vst.msk [vmem:[#allocation3 + $0x2c8] sm:$0xff] %vm365, %v2357
      %2390 = vst.msk [vmem:[#allocation3 + $0x2e0] sm:$0xff] %vm365, %v2358
      %2391 = vst.msk [vmem:[#allocation3 + $0x2f8] sm:$0xff] %vm365, %v2359
      %v2392 = vld [vmem:[#allocation3] sm:$0xff]
      %v2393 = vld [vmem:[#allocation3 + $0x8] sm:$0xff]
      %v2394 = vld [vmem:[#allocation3 + $0x10] sm:$0xff]
      %v2395 = vld [vmem:[#allocation3 + $0x18] sm:$0xff]
      %v2396 = vld [vmem:[#allocation3 + $0x20] sm:$0xff]
      %v2397 = vld [vmem:[#allocation3 + $0x28] sm:$0xff]
      %v2398 = vld [vmem:[#allocation3 + $0x30] sm:$0xff]
      %v2399 = vld [vmem:[#allocation3 + $0x38] sm:$0xff]
      %v2400 = vld [vmem:[#allocation3 + $0x40] sm:$0xff]
      %v2401 = vld [vmem:[#allocation3 + $0x48] sm:$0xff]
      %v2402 = vld [vmem:[#allocation3 + $0x50] sm:$0xff]
      %v2403 = vld [vmem:[#allocation3 + $0x58] sm:$0xff]
      %v2404 = vld [vmem:[#allocation3 + $0x60] sm:$0xff]
      %v2405 = vld [vmem:[#allocation3 + $0x68] sm:$0xff]
      %v2406 = vld [vmem:[#allocation3 + $0x70] sm:$0xff]
      %v2407 = vld [vmem:[#allocation3 + $0x78] sm:$0xff]
      %v2408 = vld [vmem:[#allocation3 + $0x80] sm:$0xff]
      %v2409 = vld [vmem:[#allocation3 + $0x88] sm:$0xff]
      %v2410 = vld [vmem:[#allocation3 + $0x90] sm:$0xff]
      %v2411 = vld [vmem:[#allocation3 + $0x98] sm:$0xff]
      %v2412 = vld [vmem:[#allocation3 + $0xa0] sm:$0xff]
      %v2413 = vld [vmem:[#allocation3 + $0xa8] sm:$0xff]
      %v2414 = vld [vmem:[#allocation3 + $0xb0] sm:$0xff]
      %v2415 = vld [vmem:[#allocation3 + $0xb8] sm:$0xff]
      %v2416 = vld [vmem:[#allocation3 + $0xc0] sm:$0xff]
      %v2417 = vld [vmem:[#allocation3 + $0xc8] sm:$0xff]
      %v2418 = vld [vmem:[#allocation3 + $0xd0] sm:$0xff]
      %v2419 = vld [vmem:[#allocation3 + $0xd8] sm:$0xff]
      %v2420 = vld [vmem:[#allocation3 + $0xe0] sm:$0xff]
      %v2421 = vld [vmem:[#allocation3 + $0xe8] sm:$0xff]
      %v2422 = vld [vmem:[#allocation3 + $0xf0] sm:$0xff]
      %v2423 = vld [vmem:[#allocation3 + $0xf8] sm:$0xff]
      %v2424 = vld [vmem:[#allocation3 + $0x100] sm:$0xff]
      %v2425 = vld [vmem:[#allocation3 + $0x108] sm:$0xff]
      %v2426 = vld [vmem:[#allocation3 + $0x110] sm:$0xff]
      %v2427 = vld [vmem:[#allocation3 + $0x118] sm:$0xff]
      %v2428 = vld [vmem:[#allocation3 + $0x120] sm:$0xff]
      %v2429 = vld [vmem:[#allocation3 + $0x128] sm:$0xff]
      %v2430 = vld [vmem:[#allocation3 + $0x130] sm:$0xff]
      %v2431 = vld [vmem:[#allocation3 + $0x138] sm:$0xff]
      %v2432 = vld [vmem:[#allocation3 + $0x140] sm:$0xff]
      %v2433 = vld [vmem:[#allocation3 + $0x148] sm:$0xff]
      %v2434 = vld [vmem:[#allocation3 + $0x150] sm:$0xff]
      %v2435 = vld [vmem:[#allocation3 + $0x158] sm:$0xff]
      %v2436 = vld [vmem:[#allocation3 + $0x160] sm:$0xff]
      %v2437 = vld [vmem:[#allocation3 + $0x168] sm:$0xff]
      %v2438 = vld [vmem:[#allocation3 + $0x170] sm:$0xff]
      %v2439 = vld [vmem:[#allocation3 + $0x178] sm:$0xff]
      %v2440 = vld [vmem:[#allocation3 + $0x180] sm:$0xff]
      %v2441 = vld [vmem:[#allocation3 + $0x188] sm:$0xff]
      %v2442 = vld [vmem:[#allocation3 + $0x190] sm:$0xff]
      %v2443 = vld [vmem:[#allocation3 + $0x198] sm:$0xff]
      %v2444 = vld [vmem:[#allocation3 + $0x1a0] sm:$0xff]
      %v2445 = vld [vmem:[#allocation3 + $0x1a8] sm:$0xff]
      %v2446 = vld [vmem:[#allocation3 + $0x1b0] sm:$0xff]
      %v2447 = vld [vmem:[#allocation3 + $0x1b8] sm:$0xff]
      %v2448 = vld [vmem:[#allocation3 + $0x1c0] sm:$0xff]
      %v2449 = vld [vmem:[#allocation3 + $0x1c8] sm:$0xff]
      %v2450 = vld [vmem:[#allocation3 + $0x1d0] sm:$0xff]
      %v2451 = vld [vmem:[#allocation3 + $0x1d8] sm:$0xff]
      %v2452 = vld [vmem:[#allocation3 + $0x1e0] sm:$0xff]
      %v2453 = vld [vmem:[#allocation3 + $0x1e8] sm:$0xff]
      %v2454 = vld [vmem:[#allocation3 + $0x1f0] sm:$0xff]
      %v2455 = vld [vmem:[#allocation3 + $0x1f8] sm:$0xff]
      %v2456 = vld [vmem:[#allocation3 + $0x200] sm:$0xff]
      %v2457 = vld [vmem:[#allocation3 + $0x208] sm:$0xff]
      %v2458 = vld [vmem:[#allocation3 + $0x210] sm:$0xff]
      %v2459 = vld [vmem:[#allocation3 + $0x218] sm:$0xff]
      %v2460 = vld [vmem:[#allocation3 + $0x220] sm:$0xff]
      %v2461 = vld [vmem:[#allocation3 + $0x228] sm:$0xff]
      %v2462 = vld [vmem:[#allocation3 + $0x230] sm:$0xff]
      %v2463 = vld [vmem:[#allocation3 + $0x238] sm:$0xff]
      %v2464 = vld [vmem:[#allocation3 + $0x240] sm:$0xff]
      %v2465 = vld [vmem:[#allocation3 + $0x248] sm:$0xff]
      %v2466 = vld [vmem:[#allocation3 + $0x250] sm:$0xff]
      %v2467 = vld [vmem:[#allocation3 + $0x258] sm:$0xff]
      %v2468 = vld [vmem:[#allocation3 + $0x260] sm:$0xff]
      %v2469 = vld [vmem:[#allocation3 + $0x268] sm:$0xff]
      %v2470 = vld [vmem:[#allocation3 + $0x270] sm:$0xff]
      %v2471 = vld [vmem:[#allocation3 + $0x278] sm:$0xff]
      %v2472 = vld [vmem:[#allocation3 + $0x280] sm:$0xff]
      %v2473 = vld [vmem:[#allocation3 + $0x288] sm:$0xff]
      %v2474 = vld [vmem:[#allocation3 + $0x290] sm:$0xff]
      %v2475 = vld [vmem:[#allocation3 + $0x298] sm:$0xff]
      %v2476 = vld [vmem:[#allocation3 + $0x2a0] sm:$0xff]
      %v2477 = vld [vmem:[#allocation3 + $0x2a8] sm:$0xff]
      %v2478 = vld [vmem:[#allocation3 + $0x2b0] sm:$0xff]
      %v2479 = vld [vmem:[#allocation3 + $0x2b8] sm:$0xff]
      %v2480 = vld [vmem:[#allocation3 + $0x2c0] sm:$0xff]
      %v2481 = vld [vmem:[#allocation3 + $0x2c8] sm:$0xff]
      %v2482 = vld [vmem:[#allocation3 + $0x2d0] sm:$0xff]
      %v2483 = vld [vmem:[#allocation3 + $0x2d8] sm:$0xff]
      %v2484 = vld [vmem:[#allocation3 + $0x2e0] sm:$0xff]
      %v2485 = vld [vmem:[#allocation3 + $0x2e8] sm:$0xff]
      %v2486 = vld [vmem:[#allocation3 + $0x2f0] sm:$0xff]
      %v2487 = vld [vmem:[#allocation3 + $0x2f8] sm:$0xff]
      %v2488 = vld [vmem:[%s1] sm:$0xff]
      %v2489 = vld [vmem:[%s1 + $0x8] sm:$0xff]
      %v2490 = vld [vmem:[%s1 + $0x10] sm:$0xff]
      %v2491 = vld [vmem:[%s1 + $0x18] sm:$0xff]
      %v2492 = vld [vmem:[%s1 + $0x20] sm:$0xff]
      %v2493 = vld [vmem:[%s1 + $0x28] sm:$0xff]
      %v2494 = vld [vmem:[%s1 + $0x30] sm:$0xff]
      %v2495 = vld [vmem:[%s1 + $0x38] sm:$0xff]
      %v2496 = vld [vmem:[%s1 + $0x40] sm:$0xff]
      %v2497 = vld [vmem:[%s1 + $0x48] sm:$0xff]
      %v2498 = vld [vmem:[%s1 + $0x50] sm:$0xff]
      %v2499 = vld [vmem:[%s1 + $0x58] sm:$0xff]
      %v2500 = vld [vmem:[%s1 + $0x60] sm:$0xff]
      %v2501 = vld [vmem:[%s1 + $0x68] sm:$0xff]
      %v2502 = vld [vmem:[%s1 + $0x70] sm:$0xff]
      %v2503 = vld [vmem:[%s1 + $0x78] sm:$0xff]
      %v2504 = vld [vmem:[%s1 + $0x80] sm:$0xff]
      %v2505 = vld [vmem:[%s1 + $0x88] sm:$0xff]
      %v2506 = vld [vmem:[%s1 + $0x90] sm:$0xff]
      %v2507 = vld [vmem:[%s1 + $0x98] sm:$0xff]
      %v2508 = vld [vmem:[%s1 + $0xa0] sm:$0xff]
      %v2509 = vld [vmem:[%s1 + $0xa8] sm:$0xff]
      %v2510 = vld [vmem:[%s1 + $0xb0] sm:$0xff]
      %v2511 = vld [vmem:[%s1 + $0xb8] sm:$0xff]
      %v2512 = vld [vmem:[%s1 + $0xc0] sm:$0xff]
      %v2513 = vld [vmem:[%s1 + $0xc8] sm:$0xff]
      %v2514 = vld [vmem:[%s1 + $0xd0] sm:$0xff]
      %v2515 = vld [vmem:[%s1 + $0xd8] sm:$0xff]
      %v2516 = vld [vmem:[%s1 + $0xe0] sm:$0xff]
      %v2517 = vld [vmem:[%s1 + $0xe8] sm:$0xff]
      %v2518 = vld [vmem:[%s1 + $0xf0] sm:$0xff]
      %v2519 = vld [vmem:[%s1 + $0xf8] sm:$0xff]
      %v2520 = vld [vmem:[%s1 + $0x100] sm:$0xff]
      %v2521 = vld [vmem:[%s1 + $0x108] sm:$0xff]
      %v2522 = vld [vmem:[%s1 + $0x110] sm:$0xff]
      %v2523 = vld [vmem:[%s1 + $0x118] sm:$0xff]
      %v2524 = vld [vmem:[%s2] sm:$0x1]
      %v2526 = vlaneseq
      %v2527 = vshrl.u32 %v2526, 7
      %v2528 = vsub.s32 0, %v2527
      %v2529 = vrot.slane %v2524, %v2528
      %v2532 = vsel %vm365, %v2394, 0
      %v2535 = vsel %vm365, %v2397, 0
      %v2538 = vsel %vm365, %v2400, 0
      %v2541 = vsel %vm365, %v2403, 0
      %v2544 = vsel %vm365, %v2406, 0
      %v2547 = vsel %vm365, %v2409, 0
      %v2550 = vsel %vm365, %v2412, 0
      %v2553 = vsel %vm365, %v2415, 0
      %v2556 = vsel %vm365, %v2418, 0
      %v2559 = vsel %vm365, %v2421, 0
      %v2562 = vsel %vm365, %v2424, 0
      %v2565 = vsel %vm365, %v2427, 0
      %v2568 = vsel %vm365, %v2430, 0
      %v2571 = vsel %vm365, %v2433, 0
      %v2574 = vsel %vm365, %v2436, 0
      %v2577 = vsel %vm365, %v2439, 0
      %v2580 = vsel %vm365, %v2442, 0
      %v2583 = vsel %vm365, %v2445, 0
      %v2586 = vsel %vm365, %v2448, 0
      %v2589 = vsel %vm365, %v2451, 0
      %v2592 = vsel %vm365, %v2454, 0
      %v2595 = vsel %vm365, %v2457, 0
      %v2598 = vsel %vm365, %v2460, 0
      %v2601 = vsel %vm365, %v2463, 0
      %v2604 = vsel %vm365, %v2466, 0
      %v2607 = vsel %vm365, %v2469, 0
      %v2610 = vsel %vm365, %v2472, 0
      %v2613 = vsel %vm365, %v2475, 0
      %v2616 = vsel %vm365, %v2478, 0
      %v2619 = vsel %vm365, %v2481, 0
      %v2622 = vsel %vm365, %v2484, 0
      %v2625 = vsel %vm365, %v2487, 0
      %2627 = vmatprep.subr.mxu0 0.0
      %2628 = vmatpush1.msra.mxu0 %v2503
      %2629 = vmatprep.subr.mxu0 0.0
      %2630 = vmatpush1.msra.mxu0 %v2502
      %2631 = vmatprep.subr.mxu0 0.0
      %2632 = vmatpush1.msra.mxu0 %v2501
      %2633 = vmatprep.subr.mxu0 0.0
      %2634 = vmatpush1.msra.mxu0 %v2500
      %2635 = vmatprep.subr.mxu0 0.0
      %2636 = vmatpush1.msra.mxu0 %v2499
      %2637 = vmatprep.subr.mxu0 0.0
      %2638 = vmatpush1.msra.mxu0 %v2498
      %2639 = vmatprep.subr.mxu0 0.0
      %2640 = vmatpush1.msra.mxu0 %v2497
      %2641 = vmatprep.subr.mxu0 0.0
      %2642 = vmatpush1.msra.mxu0 %v2496
      %2643 = vmatprep.subr.mxu0 0.0
      %2644 = vmatpush1.msra.mxu0 %v2495
      %2645 = vmatprep.subr.mxu0 0.0
      %2646 = vmatpush1.msra.mxu0 %v2494
      %2647 = vmatprep.subr.mxu0 0.0
      %2648 = vmatpush1.msra.mxu0 %v2493
      %2649 = vmatprep.subr.mxu0 0.0
      %2650 = vmatpush1.msra.mxu0 %v2492
      %2651 = vmatprep.subr.mxu0 0.0
      %2652 = vmatpush1.msra.mxu0 %v2491
      %2653 = vmatprep.subr.mxu0 0.0
      %2654 = vmatpush1.msra.mxu0 %v2490
      %2655 = vmatprep.subr.mxu0 0.0
      %2656 = vmatpush1.msra.mxu0 %v2489
      %2657 = vmatprep.subr.mxu0 0.0
      %2658 = vmatpush1.msra.mxu0 %v2488
      %2659 = vmatprep.subr.mxu0 0.0
      %2660 = vmatpush2.msra.mxu0 %v2519
      %2661 = vmatprep.subr.mxu0 0.0
      %2662 = vmatpush2.msra.mxu0 %v2518
      %2663 = vmatprep.subr.mxu0 0.0
      %2664 = vmatpush2.msra.mxu0 %v2517
      %2665 = vmatprep.subr.mxu0 0.0
      %2666 = vmatpush2.msra.mxu0 %v2516
      %2667 = vmatprep.subr.mxu0 0.0
      %2668 = vmatpush2.msra.mxu0 %v2515
      %2669 = vmatprep.subr.mxu0 0.0
      %2670 = vmatpush2.msra.mxu0 %v2514
      %2671 = vmatprep.subr.mxu0 0.0
      %2672 = vmatpush2.msra.mxu0 %v2513
      %2673 = vmatprep.subr.mxu0 0.0
      %2674 = vmatpush2.msra.mxu0 %v2512
      %2675 = vmatprep.subr.mxu0 0.0
      %2676 = vmatpush2.msra.mxu0 %v2511
      %2677 = vmatprep.subr.mxu0 0.0
      %2678 = vmatpush2.msra.mxu0 %v2510
      %2679 = vmatprep.subr.mxu0 0.0
      %2680 = vmatpush2.msra.mxu0 %v2509
      %2681 = vmatprep.subr.mxu0 0.0
      %2682 = vmatpush2.msra.mxu0 %v2508
      %2683 = vmatprep.subr.mxu0 0.0
      %2684 = vmatpush2.msra.mxu0 %v2507
      %2685 = vmatprep.subr.mxu0 0.0
      %2686 = vmatpush2.msra.mxu0 %v2506
      %2687 = vmatprep.subr.mxu0 0.0
      %2688 = vmatpush2.msra.mxu0 %v2505
      %2689 = vmatprep.subr.mxu0 0.0
      %2690 = vmatpush2.msra.mxu0 %v2504
      %2691 = vmatprep.mubr.f32.mxu0 %v2393
      %2692 = vmatmul.mubr.f32.gmra.mxu0 %v2392
      %v2693 = vpop.f32.mrf.mxu0
      %v2694 = vadd.f32 %v2529, %v2693
      %v2695 = vpop.f32.mrf.mxu0
      %2696 = vmatprep.mubr.f32.mxu0 %v2396
      %2697 = vmatmul.mubr.f32.gmra.mxu0 %v2395
      %v2698 = vpop.f32.mrf.mxu0
      %v2699 = vadd.f32 %v2529, %v2698
      %v2700 = vpop.f32.mrf.mxu0
      %2701 = vmatprep.mubr.f32.mxu0 %v2399
      %2702 = vmatmul.mubr.f32.gmra.mxu0 %v2398
      %v2703 = vpop.f32.mrf.mxu0
      %v2704 = vadd.f32 %v2529, %v2703
      %v2705 = vpop.f32.mrf.mxu0
      %2706 = vmatprep.mubr.f32.mxu0 %v2402
      %2707 = vmatmul.mubr.f32.gmra.mxu0 %v2401
      %v2708 = vpop.f32.mrf.mxu0
      %v2709 = vadd.f32 %v2529, %v2708
      %v2710 = vpop.f32.mrf.mxu0
      %2711 = vmatprep.mubr.f32.mxu0 %v2405
      %2712 = vmatmul.mubr.f32.gmra.mxu0 %v2404
      %v2713 = vpop.f32.mrf.mxu0
      %v2714 = vadd.f32 %v2529, %v2713
      %v2715 = vpop.f32.mrf.mxu0
      %2716 = vmatprep.mubr.f32.mxu0 %v2408
      %2717 = vmatmul.mubr.f32.gmra.mxu0 %v2407
      %v2718 = vpop.f32.mrf.mxu0
      %v2719 = vadd.f32 %v2529, %v2718
      %v2720 = vpop.f32.mrf.mxu0
      %2721 = vmatprep.mubr.f32.mxu0 %v2411
      %2722 = vmatmul.mubr.f32.gmra.mxu0 %v2410
      %v2723 = vpop.f32.mrf.mxu0
      %v2724 = vadd.f32 %v2529, %v2723
      %v2725 = vpop.f32.mrf.mxu0
      %2726 = vmatprep.mubr.f32.mxu0 %v2414
      %2727 = vmatmul.mubr.f32.gmra.mxu0 %v2413
      %v2728 = vpop.f32.mrf.mxu0
      %v2729 = vadd.f32 %v2529, %v2728
      %v2730 = vpop.f32.mrf.mxu0
      %2731 = vmatprep.mubr.f32.mxu0 %v2417
      %2732 = vmatmul.mubr.f32.gmra.mxu0 %v2416
      %v2733 = vpop.f32.mrf.mxu0
      %v2734 = vadd.f32 %v2529, %v2733
      %v2735 = vpop.f32.mrf.mxu0
      %2736 = vmatprep.mubr.f32.mxu0 %v2420
      %2737 = vmatmul.mubr.f32.gmra.mxu0 %v2419
      %v2738 = vpop.f32.mrf.mxu0
      %v2739 = vadd.f32 %v2529, %v2738
      %v2740 = vpop.f32.mrf.mxu0
      %2741 = vmatprep.mubr.f32.mxu0 %v2423
      %2742 = vmatmul.mubr.f32.gmra.mxu0 %v2422
      %v2743 = vpop.f32.mrf.mxu0
      %v2744 = vadd.f32 %v2529, %v2743
      %v2745 = vpop.f32.mrf.mxu0
      %2746 = vmatprep.mubr.f32.mxu0 %v2426
      %2747 = vmatmul.mubr.f32.gmra.mxu0 %v2425
      %v2748 = vpop.f32.mrf.mxu0
      %v2749 = vadd.f32 %v2529, %v2748
      %v2750 = vpop.f32.mrf.mxu0
      %2751 = vmatprep.mubr.f32.mxu0 %v2429
      %2752 = vmatmul.mubr.f32.gmra.mxu0 %v2428
      %v2753 = vpop.f32.mrf.mxu0
      %v2754 = vadd.f32 %v2529, %v2753
      %v2755 = vpop.f32.mrf.mxu0
      %2756 = vmatprep.mubr.f32.mxu0 %v2432
      %2757 = vmatmul.mubr.f32.gmra.mxu0 %v2431
      %v2758 = vpop.f32.mrf.mxu0
      %v2759 = vadd.f32 %v2529, %v2758
      %v2760 = vpop.f32.mrf.mxu0
      %2761 = vmatprep.mubr.f32.mxu0 %v2435
      %2762 = vmatmul.mubr.f32.gmra.mxu0 %v2434
      %v2763 = vpop.f32.mrf.mxu0
      %v2764 = vadd.f32 %v2529, %v2763
      %v2765 = vpop.f32.mrf.mxu0
      %2766 = vmatprep.mubr.f32.mxu0 %v2438
      %2767 = vmatmul.mubr.f32.gmra.mxu0 %v2437
      %v2768 = vpop.f32.mrf.mxu0
      %v2769 = vadd.f32 %v2529, %v2768
      %v2770 = vpop.f32.mrf.mxu0
      %2771 = vmatprep.mubr.f32.mxu0 %v2441
      %2772 = vmatmul.mubr.f32.gmra.mxu0 %v2440
      %v2773 = vpop.f32.mrf.mxu0
      %v2774 = vadd.f32 %v2529, %v2773
      %v2775 = vpop.f32.mrf.mxu0
      %2776 = vmatprep.mubr.f32.mxu0 %v2444
      %2777 = vmatmul.mubr.f32.gmra.mxu0 %v2443
      %v2778 = vpop.f32.mrf.mxu0
      %v2779 = vadd.f32 %v2529, %v2778
      %v2780 = vpop.f32.mrf.mxu0
      %2781 = vmatprep.mubr.f32.mxu0 %v2447
      %2782 = vmatmul.mubr.f32.gmra.mxu0 %v2446
      %v2783 = vpop.f32.mrf.mxu0
      %v2784 = vadd.f32 %v2529, %v2783
      %v2785 = vpop.f32.mrf.mxu0
      %2786 = vmatprep.mubr.f32.mxu0 %v2450
      %2787 = vmatmul.mubr.f32.gmra.mxu0 %v2449
      %v2788 = vpop.f32.mrf.mxu0
      %v2789 = vadd.f32 %v2529, %v2788
      %v2790 = vpop.f32.mrf.mxu0
      %2791 = vmatprep.mubr.f32.mxu0 %v2453
      %2792 = vmatmul.mubr.f32.gmra.mxu0 %v2452
      %v2793 = vpop.f32.mrf.mxu0
      %v2794 = vadd.f32 %v2529, %v2793
      %v2795 = vpop.f32.mrf.mxu0
      %2796 = vmatprep.mubr.f32.mxu0 %v2456
      %2797 = vmatmul.mubr.f32.gmra.mxu0 %v2455
      %v2798 = vpop.f32.mrf.mxu0
      %v2799 = vadd.f32 %v2529, %v2798
      %v2800 = vpop.f32.mrf.mxu0
      %2801 = vmatprep.mubr.f32.mxu0 %v2459
      %2802 = vmatmul.mubr.f32.gmra.mxu0 %v2458
      %v2803 = vpop.f32.mrf.mxu0
      %v2804 = vadd.f32 %v2529, %v2803
      %v2805 = vpop.f32.mrf.mxu0
      %2806 = vmatprep.mubr.f32.mxu0 %v2462
      %2807 = vmatmul.mubr.f32.gmra.mxu0 %v2461
      %v2808 = vpop.f32.mrf.mxu0
      %v2809 = vadd.f32 %v2529, %v2808
      %v2810 = vpop.f32.mrf.mxu0
      %2811 = vmatprep.mubr.f32.mxu0 %v2465
      %2812 = vmatmul.mubr.f32.gmra.mxu0 %v2464
      %v2813 = vpop.f32.mrf.mxu0
      %v2814 = vadd.f32 %v2529, %v2813
      %v2815 = vpop.f32.mrf.mxu0
      %2816 = vmatprep.mubr.f32.mxu0 %v2468
      %2817 = vmatmul.mubr.f32.gmra.mxu0 %v2467
      %v2818 = vpop.f32.mrf.mxu0
      %v2819 = vadd.f32 %v2529, %v2818
      %v2820 = vpop.f32.mrf.mxu0
      %2821 = vmatprep.mubr.f32.mxu0 %v2471
      %2822 = vmatmul.mubr.f32.gmra.mxu0 %v2470
      %v2823 = vpop.f32.mrf.mxu0
      %v2824 = vadd.f32 %v2529, %v2823
      %v2825 = vpop.f32.mrf.mxu0
      %2826 = vmatprep.mubr.f32.mxu0 %v2474
      %2827 = vmatmul.mubr.f32.gmra.mxu0 %v2473
      %v2828 = vpop.f32.mrf.mxu0
      %v2829 = vadd.f32 %v2529, %v2828
      %v2830 = vpop.f32.mrf.mxu0
      %2831 = vmatprep.mubr.f32.mxu0 %v2477
      %2832 = vmatmul.mubr.f32.gmra.mxu0 %v2476
      %v2833 = vpop.f32.mrf.mxu0
      %v2834 = vadd.f32 %v2529, %v2833
      %v2835 = vpop.f32.mrf.mxu0
      %2836 = vmatprep.mubr.f32.mxu0 %v2480
      %2837 = vmatmul.mubr.f32.gmra.mxu0 %v2479
      %v2838 = vpop.f32.mrf.mxu0
      %v2839 = vadd.f32 %v2529, %v2838
      %v2840 = vpop.f32.mrf.mxu0
      %2841 = vmatprep.mubr.f32.mxu0 %v2483
      %2842 = vmatmul.mubr.f32.gmra.mxu0 %v2482
      %v2843 = vpop.f32.mrf.mxu0
      %v2844 = vadd.f32 %v2529, %v2843
      %v2845 = vpop.f32.mrf.mxu0
      %2846 = vmatprep.mubr.f32.mxu0 %v2486
      %2847 = vmatmul.mubr.f32.gmra.mxu0 %v2485
      %v2848 = vpop.f32.mrf.mxu0
      %v2849 = vadd.f32 %v2529, %v2848
      %v2850 = vpop.f32.mrf.mxu0
      %2851 = vdwg.mxu0
      %2852 = vmatprep.subr.mxu0 0.0
      %2853 = vmatpush1.msra.mxu0 0.0
      %2854 = vmatprep.subr.mxu0 0.0
      %2855 = vmatpush1.msra.mxu0 0.0
      %2856 = vmatprep.subr.mxu0 0.0
      %2857 = vmatpush1.msra.mxu0 0.0
      %2858 = vmatprep.subr.mxu0 0.0
      %2859 = vmatpush1.msra.mxu0 0.0
      %2860 = vmatprep.subr.mxu0 0.0
      %2861 = vmatpush1.msra.mxu0 0.0
      %2862 = vmatprep.subr.mxu0 0.0
      %2863 = vmatpush1.msra.mxu0 0.0
      %2864 = vmatprep.subr.mxu0 0.0
      %2865 = vmatpush1.msra.mxu0 0.0
      %2866 = vmatprep.subr.mxu0 0.0
      %2867 = vmatpush1.msra.mxu0 0.0
      %2868 = vmatprep.subr.mxu0 0.0
      %2869 = vmatpush1.msra.mxu0 0.0
      %2870 = vmatprep.subr.mxu0 0.0
      %2871 = vmatpush1.msra.mxu0 0.0
      %2872 = vmatprep.subr.mxu0 0.0
      %2873 = vmatpush1.msra.mxu0 0.0
      %2874 = vmatprep.subr.mxu0 0.0
      %2875 = vmatpush1.msra.mxu0 0.0
      %2876 = vmatprep.subr.mxu0 0.0
      %2877 = vmatpush1.msra.mxu0 %v2523
      %2878 = vmatprep.subr.mxu0 0.0
      %2879 = vmatpush1.msra.mxu0 %v2522
      %2880 = vmatprep.subr.mxu0 0.0
      %2881 = vmatpush1.msra.mxu0 %v2521
      %2882 = vmatprep.subr.mxu0 0.0
      %2883 = vmatpush1.msra.mxu0 %v2520
      %2884 = vmatprep.subr.mxu0 0.0
      %2885 = vmatpush2.msra.mxu0 0.0
      %2886 = vmatprep.subr.mxu0 0.0
      %2887 = vmatpush2.msra.mxu0 0.0
      %2888 = vmatprep.subr.mxu0 0.0
      %2889 = vmatpush2.msra.mxu0 0.0
      %2890 = vmatprep.subr.mxu0 0.0
      %2891 = vmatpush2.msra.mxu0 0.0
      %2892 = vmatprep.subr.mxu0 0.0
      %2893 = vmatpush2.msra.mxu0 0.0
      %2894 = vmatprep.subr.mxu0 0.0
      %2895 = vmatpush2.msra.mxu0 0.0
      %2896 = vmatprep.subr.mxu0 0.0
      %2897 = vmatpush2.msra.mxu0 0.0
      %2898 = vmatprep.subr.mxu0 0.0
      %2899 = vmatpush2.msra.mxu0 0.0
      %2900 = vmatprep.subr.mxu0 0.0
      %2901 = vmatpush2.msra.mxu0 0.0
      %2902 = vmatprep.subr.mxu0 0.0
      %2903 = vmatpush2.msra.mxu0 0.0
      %2904 = vmatprep.subr.mxu0 0.0
      %2905 = vmatpush2.msra.mxu0 0.0
      %2906 = vmatprep.subr.mxu0 0.0
      %2907 = vmatpush2.msra.mxu0 0.0
      %2908 = vmatprep.subr.mxu0 0.0
      %2909 = vmatpush2.msra.mxu0 0.0
      %2910 = vmatprep.subr.mxu0 0.0
      %2911 = vmatpush2.msra.mxu0 0.0
      %2912 = vmatprep.subr.mxu0 0.0
      %2913 = vmatpush2.msra.mxu0 0.0
      %2914 = vmatprep.subr.mxu0 0.0
      %2915 = vmatpush2.msra.mxu0 0.0
      %2916 = vmatprep.mubr.f32.mxu0 0.0
      %2917 = vmatmul.mubr.f32.gmra.mxu0 %v2532
      %v2918 = vpop.f32.mrf.mxu0
      %v2919 = vadd.f32 %v2694, %v2918
      %v2920 = vpop.f32.mrf.mxu0
      %2921 = vmatprep.mubr.f32.mxu0 0.0
      %2922 = vmatmul.mubr.f32.gmra.mxu0 %v2535
      %v2923 = vpop.f32.mrf.mxu0
      %v2924 = vadd.f32 %v2699, %v2923
      %v2925 = vpop.f32.mrf.mxu0
      %2926 = vmatprep.mubr.f32.mxu0 0.0
      %2927 = vmatmul.mubr.f32.gmra.mxu0 %v2538
      %v2928 = vpop.f32.mrf.mxu0
      %v2929 = vadd.f32 %v2704, %v2928
      %v2930 = vpop.f32.mrf.mxu0
      %2931 = vmatprep.mubr.f32.mxu0 0.0
      %2932 = vmatmul.mubr.f32.gmra.mxu0 %v2541
      %v2933 = vpop.f32.mrf.mxu0
      %v2934 = vadd.f32 %v2709, %v2933
      %v2935 = vpop.f32.mrf.mxu0
      %2936 = vmatprep.mubr.f32.mxu0 0.0
      %2937 = vmatmul.mubr.f32.gmra.mxu0 %v2544
      %v2938 = vpop.f32.mrf.mxu0
      %v2939 = vadd.f32 %v2714, %v2938
      %v2940 = vpop.f32.mrf.mxu0
      %2941 = vmatprep.mubr.f32.mxu0 0.0
      %2942 = vmatmul.mubr.f32.gmra.mxu0 %v2547
      %v2943 = vpop.f32.mrf.mxu0
      %v2944 = vadd.f32 %v2719, %v2943
      %v2945 = vpop.f32.mrf.mxu0
      %2946 = vmatprep.mubr.f32.mxu0 0.0
      %2947 = vmatmul.mubr.f32.gmra.mxu0 %v2550
      %v2948 = vpop.f32.mrf.mxu0
      %v2949 = vadd.f32 %v2724, %v2948
      %v2950 = vpop.f32.mrf.mxu0
      %2951 = vmatprep.mubr.f32.mxu0 0.0
      %2952 = vmatmul.mubr.f32.gmra.mxu0 %v2553
      %v2953 = vpop.f32.mrf.mxu0
      %v2954 = vadd.f32 %v2729, %v2953
      %v2955 = vpop.f32.mrf.mxu0
      %2956 = vmatprep.mubr.f32.mxu0 0.0
      %2957 = vmatmul.mubr.f32.gmra.mxu0 %v2556
      %v2958 = vpop.f32.mrf.mxu0
      %v2959 = vadd.f32 %v2734, %v2958
      %v2960 = vpop.f32.mrf.mxu0
      %2961 = vmatprep.mubr.f32.mxu0 0.0
      %2962 = vmatmul.mubr.f32.gmra.mxu0 %v2559
      %v2963 = vpop.f32.mrf.mxu0
      %v2964 = vadd.f32 %v2739, %v2963
      %v2965 = vpop.f32.mrf.mxu0
      %2966 = vmatprep.mubr.f32.mxu0 0.0
      %2967 = vmatmul.mubr.f32.gmra.mxu0 %v2562
      %v2968 = vpop.f32.mrf.mxu0
      %v2969 = vadd.f32 %v2744, %v2968
      %v2970 = vpop.f32.mrf.mxu0
      %2971 = vmatprep.mubr.f32.mxu0 0.0
      %2972 = vmatmul.mubr.f32.gmra.mxu0 %v2565
      %v2973 = vpop.f32.mrf.mxu0
      %v2974 = vadd.f32 %v2749, %v2973
      %v2975 = vpop.f32.mrf.mxu0
      %2976 = vmatprep.mubr.f32.mxu0 0.0
      %2977 = vmatmul.mubr.f32.gmra.mxu0 %v2568
      %v2978 = vpop.f32.mrf.mxu0
      %v2979 = vadd.f32 %v2754, %v2978
      %v2980 = vpop.f32.mrf.mxu0
      %2981 = vmatprep.mubr.f32.mxu0 0.0
      %2982 = vmatmul.mubr.f32.gmra.mxu0 %v2571
      %v2983 = vpop.f32.mrf.mxu0
      %v2984 = vadd.f32 %v2759, %v2983
      %v2985 = vpop.f32.mrf.mxu0
      %2986 = vmatprep.mubr.f32.mxu0 0.0
      %2987 = vmatmul.mubr.f32.gmra.mxu0 %v2574
      %v2988 = vpop.f32.mrf.mxu0
      %v2989 = vadd.f32 %v2764, %v2988
      %v2990 = vpop.f32.mrf.mxu0
      %2991 = vmatprep.mubr.f32.mxu0 0.0
      %2992 = vmatmul.mubr.f32.gmra.mxu0 %v2577
      %v2993 = vpop.f32.mrf.mxu0
      %v2994 = vadd.f32 %v2769, %v2993
      %v2995 = vpop.f32.mrf.mxu0
      %2996 = vmatprep.mubr.f32.mxu0 0.0
      %2997 = vmatmul.mubr.f32.gmra.mxu0 %v2580
      %v2998 = vpop.f32.mrf.mxu0
      %v2999 = vadd.f32 %v2774, %v2998
      %v3000 = vpop.f32.mrf.mxu0
      %3001 = vmatprep.mubr.f32.mxu0 0.0
      %3002 = vmatmul.mubr.f32.gmra.mxu0 %v2583
      %v3003 = vpop.f32.mrf.mxu0
      %v3004 = vadd.f32 %v2779, %v3003
      %v3005 = vpop.f32.mrf.mxu0
      %3006 = vmatprep.mubr.f32.mxu0 0.0
      %3007 = vmatmul.mubr.f32.gmra.mxu0 %v2586
      %v3008 = vpop.f32.mrf.mxu0
      %v3009 = vadd.f32 %v2784, %v3008
      %v3010 = vpop.f32.mrf.mxu0
      %3011 = vmatprep.mubr.f32.mxu0 0.0
      %3012 = vmatmul.mubr.f32.gmra.mxu0 %v2589
      %v3013 = vpop.f32.mrf.mxu0
      %v3014 = vadd.f32 %v2789, %v3013
      %v3015 = vpop.f32.mrf.mxu0
      %3016 = vmatprep.mubr.f32.mxu0 0.0
      %3017 = vmatmul.mubr.f32.gmra.mxu0 %v2592
      %v3018 = vpop.f32.mrf.mxu0
      %v3019 = vadd.f32 %v2794, %v3018
      %v3020 = vpop.f32.mrf.mxu0
      %3021 = vmatprep.mubr.f32.mxu0 0.0
      %3022 = vmatmul.mubr.f32.gmra.mxu0 %v2595
      %v3023 = vpop.f32.mrf.mxu0
      %v3024 = vadd.f32 %v2799, %v3023
      %v3025 = vpop.f32.mrf.mxu0
      %3026 = vmatprep.mubr.f32.mxu0 0.0
      %3027 = vmatmul.mubr.f32.gmra.mxu0 %v2598
      %v3028 = vpop.f32.mrf.mxu0
      %v3029 = vadd.f32 %v2804, %v3028
      %v3030 = vpop.f32.mrf.mxu0
      %3031 = vmatprep.mubr.f32.mxu0 0.0
      %3032 = vmatmul.mubr.f32.gmra.mxu0 %v2601
      %v3033 = vpop.f32.mrf.mxu0
      %v3034 = vadd.f32 %v2809, %v3033
      %v3035 = vpop.f32.mrf.mxu0
      %3036 = vmatprep.mubr.f32.mxu0 0.0
      %3037 = vmatmul.mubr.f32.gmra.mxu0 %v2604
      %v3038 = vpop.f32.mrf.mxu0
      %v3039 = vadd.f32 %v2814, %v3038
      %v3040 = vpop.f32.mrf.mxu0
      %3041 = vmatprep.mubr.f32.mxu0 0.0
      %3042 = vmatmul.mubr.f32.gmra.mxu0 %v2607
      %v3043 = vpop.f32.mrf.mxu0
      %v3044 = vadd.f32 %v2819, %v3043
      %v3045 = vpop.f32.mrf.mxu0
      %3046 = vmatprep.mubr.f32.mxu0 0.0
      %3047 = vmatmul.mubr.f32.gmra.mxu0 %v2610
      %v3048 = vpop.f32.mrf.mxu0
      %v3049 = vadd.f32 %v2824, %v3048
      %v3050 = vpop.f32.mrf.mxu0
      %3051 = vmatprep.mubr.f32.mxu0 0.0
      %3052 = vmatmul.mubr.f32.gmra.mxu0 %v2613
      %v3053 = vpop.f32.mrf.mxu0
      %v3054 = vadd.f32 %v2829, %v3053
      %v3055 = vpop.f32.mrf.mxu0
      %3056 = vmatprep.mubr.f32.mxu0 0.0
      %3057 = vmatmul.mubr.f32.gmra.mxu0 %v2616
      %v3058 = vpop.f32.mrf.mxu0
      %v3059 = vadd.f32 %v2834, %v3058
      %v3060 = vpop.f32.mrf.mxu0
      %3061 = vmatprep.mubr.f32.mxu0 0.0
      %3062 = vmatmul.mubr.f32.gmra.mxu0 %v2619
      %v3063 = vpop.f32.mrf.mxu0
      %v3064 = vadd.f32 %v2839, %v3063
      %v3065 = vpop.f32.mrf.mxu0
      %3066 = vmatprep.mubr.f32.mxu0 0.0
      %3067 = vmatmul.mubr.f32.gmra.mxu0 %v2622
      %v3068 = vpop.f32.mrf.mxu0
      %v3069 = vadd.f32 %v2844, %v3068
      %v3070 = vpop.f32.mrf.mxu0
      %3071 = vmatprep.mubr.f32.mxu0 0.0
      %3072 = vmatmul.mubr.f32.gmra.mxu0 %v2625
      %v3073 = vpop.f32.mrf.mxu0
      %v3074 = vadd.f32 %v2849, %v3073
      %v3075 = vpop.f32.mrf.mxu0
      %3076 = vdwg.mxu0
      %v3077 = vmul.f32 %v2919, 0.2
      %v3078 = vmul.f32 %v2924, 0.2
      %v3079 = vmul.f32 %v2929, 0.2
      %v3080 = vmul.f32 %v2934, 0.2
      %v3081 = vmul.f32 %v2939, 0.2
      %v3082 = vmul.f32 %v2944, 0.2
      %v3083 = vmul.f32 %v2949, 0.2
      %v3084 = vmul.f32 %v2954, 0.2
      %v3085 = vmul.f32 %v2959, 0.2
      %v3086 = vmul.f32 %v2964, 0.2
      %v3087 = vmul.f32 %v2969, 0.2
      %v3088 = vmul.f32 %v2974, 0.2
      %v3089 = vmul.f32 %v2979, 0.2
      %v3090 = vmul.f32 %v2984, 0.2
      %v3091 = vmul.f32 %v2989, 0.2
      %v3092 = vmul.f32 %v2994, 0.2
      %v3093 = vmul.f32 %v2999, 0.2
      %v3094 = vmul.f32 %v3004, 0.2
      %v3095 = vmul.f32 %v3009, 0.2
      %v3096 = vmul.f32 %v3014, 0.2
      %v3097 = vmul.f32 %v3019, 0.2
      %v3098 = vmul.f32 %v3024, 0.2
      %v3099 = vmul.f32 %v3029, 0.2
      %v3100 = vmul.f32 %v3034, 0.2
      %v3101 = vmul.f32 %v3039, 0.2
      %v3102 = vmul.f32 %v3044, 0.2
      %v3103 = vmul.f32 %v3049, 0.2
      %v3104 = vmul.f32 %v3054, 0.2
      %v3105 = vmul.f32 %v3059, 0.2
      %v3106 = vmul.f32 %v3064, 0.2
      %v3107 = vmul.f32 %v3069, 0.2
      %v3108 = vmul.f32 %v3074, 0.2
      %v3109 = vmax.f32 %v2919, %v3077
      %v3110 = vmax.f32 %v2924, %v3078
      %v3111 = vmax.f32 %v2929, %v3079
      %v3112 = vmax.f32 %v2934, %v3080
      %v3113 = vmax.f32 %v2939, %v3081
      %v3114 = vmax.f32 %v2944, %v3082
      %v3115 = vmax.f32 %v2949, %v3083
      %v3116 = vmax.f32 %v2954, %v3084
      %v3117 = vmax.f32 %v2959, %v3085
      %v3118 = vmax.f32 %v2964, %v3086
      %v3119 = vmax.f32 %v2969, %v3087
      %v3120 = vmax.f32 %v2974, %v3088
      %v3121 = vmax.f32 %v2979, %v3089
      %v3122 = vmax.f32 %v2984, %v3090
      %v3123 = vmax.f32 %v2989, %v3091
      %v3124 = vmax.f32 %v2994, %v3092
      %v3125 = vmax.f32 %v2999, %v3093
      %v3126 = vmax.f32 %v3004, %v3094
      %v3127 = vmax.f32 %v3009, %v3095
      %v3128 = vmax.f32 %v3014, %v3096
      %v3129 = vmax.f32 %v3019, %v3097
      %v3130 = vmax.f32 %v3024, %v3098
      %v3131 = vmax.f32 %v3029, %v3099
      %v3132 = vmax.f32 %v3034, %v3100
      %v3133 = vmax.f32 %v3039, %v3101
      %v3134 = vmax.f32 %v3044, %v3102
      %v3135 = vmax.f32 %v3049, %v3103
      %v3136 = vmax.f32 %v3054, %v3104
      %v3137 = vmax.f32 %v3059, %v3105
      %v3138 = vmax.f32 %v3064, %v3106
      %v3139 = vmax.f32 %v3069, %v3107
      %v3140 = vmax.f32 %v3074, %v3108
      %3141 = vst.msk [vmem:[#allocation2 + $0x18] sm:$0xff] %vm365, %v3109
      %3142 = vst.msk [vmem:[#allocation2 + $0x20] sm:$0xff] %vm365, %v3110
      %3143 = vst.msk [vmem:[#allocation2 + $0x28] sm:$0xff] %vm365, %v3111
      %3144 = vst.msk [vmem:[#allocation2 + $0x30] sm:$0xff] %vm365, %v3112
      %3145 = vst.msk [vmem:[#allocation2 + $0x38] sm:$0xff] %vm365, %v3113
      %3146 = vst.msk [vmem:[#allocation2 + $0x40] sm:$0xff] %vm365, %v3114
      %3147 = vst.msk [vmem:[#allocation2 + $0x48] sm:$0xff] %vm365, %v3115
      %3148 = vst.msk [vmem:[#allocation2 + $0x50] sm:$0xff] %vm365, %v3116
      %3149 = vst.msk [vmem:[#allocation2 + $0x58] sm:$0xff] %vm365, %v3117
      %3150 = vst.msk [vmem:[#allocation2 + $0x60] sm:$0xff] %vm365, %v3118
      %3151 = vst.msk [vmem:[#allocation2 + $0x68] sm:$0xff] %vm365, %v3119
      %3152 = vst.msk [vmem:[#allocation2 + $0x70] sm:$0xff] %vm365, %v3120
      %3153 = vst.msk [vmem:[#allocation2 + $0x78] sm:$0xff] %vm365, %v3121
      %3154 = vst.msk [vmem:[#allocation2 + $0x80] sm:$0xff] %vm365, %v3122
      %3155 = vst.msk [vmem:[#allocation2 + $0x88] sm:$0xff] %vm365, %v3123
      %3156 = vst.msk [vmem:[#allocation2 + $0x90] sm:$0xff] %vm365, %v3124
      %3157 = vst.msk [vmem:[#allocation2 + $0x98] sm:$0xff] %vm365, %v3125
      %3158 = vst.msk [vmem:[#allocation2 + $0xa0] sm:$0xff] %vm365, %v3126
      %3159 = vst.msk [vmem:[#allocation2 + $0xa8] sm:$0xff] %vm365, %v3127
      %3160 = vst.msk [vmem:[#allocation2 + $0xb0] sm:$0xff] %vm365, %v3128
      %3161 = vst.msk [vmem:[#allocation2 + $0xb8] sm:$0xff] %vm365, %v3129
      %3162 = vst.msk [vmem:[#allocation2 + $0xc0] sm:$0xff] %vm365, %v3130
      %3163 = vst.msk [vmem:[#allocation2 + $0xc8] sm:$0xff] %vm365, %v3131
      %3164 = vst.msk [vmem:[#allocation2 + $0xd0] sm:$0xff] %vm365, %v3132
      %3165 = vst.msk [vmem:[#allocation2 + $0xd8] sm:$0xff] %vm365, %v3133
      %3166 = vst.msk [vmem:[#allocation2 + $0xe0] sm:$0xff] %vm365, %v3134
      %3167 = vst.msk [vmem:[#allocation2 + $0xe8] sm:$0xff] %vm365, %v3135
      %3168 = vst.msk [vmem:[#allocation2 + $0xf0] sm:$0xff] %vm365, %v3136
      %3169 = vst.msk [vmem:[#allocation2 + $0xf8] sm:$0xff] %vm365, %v3137
      %3170 = vst.msk [vmem:[#allocation2 + $0x100] sm:$0xff] %vm365, %v3138
      %3171 = vst.msk [vmem:[#allocation2 + $0x108] sm:$0xff] %vm365, %v3139
      %3172 = vst.msk [vmem:[#allocation2 + $0x110] sm:$0xff] %vm365, %v3140
      %v3173 = vld [vmem:[#allocation2 + $0x7] sm:$0xff]
      %v3174 = vld [vmem:[#allocation2 + $0xf] sm:$0xff]
      %v3175 = vld [vmem:[#allocation2 + $0x17] sm:$0xff]
      %v3176 = vld [vmem:[#allocation2 + $0x1f] sm:$0xff]
      %v3177 = vld [vmem:[#allocation2 + $0x27] sm:$0xff]
      %v3178 = vld [vmem:[#allocation2 + $0x2f] sm:$0xff]
      %v3179 = vld [vmem:[#allocation2 + $0x37] sm:$0xff]
      %v3180 = vld [vmem:[#allocation2 + $0x3f] sm:$0xff]
      %v3181 = vld [vmem:[#allocation2 + $0x47] sm:$0xff]
      %v3182 = vld [vmem:[#allocation2 + $0x4f] sm:$0xff]
      %v3183 = vld [vmem:[#allocation2 + $0x57] sm:$0xff]
      %v3184 = vld [vmem:[#allocation2 + $0x5f] sm:$0xff]
      %v3185 = vld [vmem:[#allocation2 + $0x67] sm:$0xff]
      %v3186 = vld [vmem:[#allocation2 + $0x6f] sm:$0xff]
      %v3187 = vld [vmem:[#allocation2 + $0x77] sm:$0xff]
      %v3188 = vld [vmem:[#allocation2 + $0x7f] sm:$0xff]
      %v3189 = vld [vmem:[#allocation2 + $0x87] sm:$0xff]
      %v3190 = vld [vmem:[#allocation2 + $0x8f] sm:$0xff]
      %v3191 = vld [vmem:[#allocation2 + $0x97] sm:$0xff]
      %v3192 = vld [vmem:[#allocation2 + $0x9f] sm:$0xff]
      %v3193 = vld [vmem:[#allocation2 + $0xa7] sm:$0xff]
      %v3194 = vld [vmem:[#allocation2 + $0xaf] sm:$0xff]
      %v3195 = vld [vmem:[#allocation2 + $0xb7] sm:$0xff]
      %v3196 = vld [vmem:[#allocation2 + $0xbf] sm:$0xff]
      %v3197 = vld [vmem:[#allocation2 + $0xc7] sm:$0xff]
      %v3198 = vld [vmem:[#allocation2 + $0xcf] sm:$0xff]
      %v3199 = vld [vmem:[#allocation2 + $0xd7] sm:$0xff]
      %v3200 = vld [vmem:[#allocation2 + $0xdf] sm:$0xff]
      %v3201 = vld [vmem:[#allocation2 + $0xe7] sm:$0xff]
      %v3202 = vld [vmem:[#allocation2 + $0xef] sm:$0xff]
      %v3203 = vld [vmem:[#allocation2 + $0xf7] sm:$0xff]
      %v3204 = vld [vmem:[#allocation2 + $0xff] sm:$0xff]
      %v3205 = vsel %vm789, %v3173, 0.0
      %v3206 = vsel %vm790, %v3174, 0.0
      %v3207 = vsel %vm791, %v3175, 0.0
      %v3208 = vsel %vm792, %v3176, 0.0
      %v3209 = vsel %vm793, %v3177, 0.0
      %v3210 = vsel %vm794, %v3178, 0.0
      %v3211 = vsel %vm795, %v3179, 0.0
      %v3212 = vsel %vm796, %v3180, 0.0
      %v3213 = vsel %vm797, %v3181, 0.0
      %v3214 = vsel %vm798, %v3182, 0.0
      %v3215 = vsel %vm799, %v3183, 0.0
      %v3216 = vsel %vm800, %v3184, 0.0
      %v3217 = vsel %vm801, %v3185, 0.0
      %v3218 = vsel %vm802, %v3186, 0.0
      %v3219 = vsel %vm803, %v3187, 0.0
      %v3220 = vsel %vm804, %v3188, 0.0
      %v3221 = vsel %vm805, %v3189, 0.0
      %v3222 = vsel %vm806, %v3190, 0.0
      %v3223 = vsel %vm807, %v3191, 0.0
      %v3224 = vsel %vm808, %v3192, 0.0
      %v3225 = vsel %vm809, %v3193, 0.0
      %v3226 = vsel %vm810, %v3194, 0.0
      %v3227 = vsel %vm811, %v3195, 0.0
      %v3228 = vsel %vm812, %v3196, 0.0
      %v3229 = vsel %vm813, %v3197, 0.0
      %v3230 = vsel %vm814, %v3198, 0.0
      %v3231 = vsel %vm815, %v3199, 0.0
      %v3232 = vsel %vm816, %v3200, 0.0
      %v3233 = vsel %vm817, %v3201, 0.0
      %v3234 = vsel %vm818, %v3202, 0.0
      %v3235 = vsel %vm819, %v3203, 0.0
      %v3236 = vsel %vm820, %v3204, 0.0
      %3237 = vst.msk [vmem:[#allocation3] sm:$0xff] %vm365, %v3205
      %3238 = vst.msk [vmem:[#allocation3 + $0x18] sm:$0xff] %vm365, %v3206
      %3239 = vst.msk [vmem:[#allocation3 + $0x30] sm:$0xff] %vm365, %v3207
      %3240 = vst.msk [vmem:[#allocation3 + $0x48] sm:$0xff] %vm365, %v3208
      %3241 = vst.msk [vmem:[#allocation3 + $0x60] sm:$0xff] %vm365, %v3209
      %3242 = vst.msk [vmem:[#allocation3 + $0x78] sm:$0xff] %vm365, %v3210
      %3243 = vst.msk [vmem:[#allocation3 + $0x90] sm:$0xff] %vm365, %v3211
      %3244 = vst.msk [vmem:[#allocation3 + $0xa8] sm:$0xff] %vm365, %v3212
      %3245 = vst.msk [vmem:[#allocation3 + $0xc0] sm:$0xff] %vm365, %v3213
      %3246 = vst.msk [vmem:[#allocation3 + $0xd8] sm:$0xff] %vm365, %v3214
      %3247 = vst.msk [vmem:[#allocation3 + $0xf0] sm:$0xff] %vm365, %v3215
      %3248 = vst.msk [vmem:[#allocation3 + $0x108] sm:$0xff] %vm365, %v3216
      %3249 = vst.msk [vmem:[#allocation3 + $0x120] sm:$0xff] %vm365, %v3217
      %3250 = vst.msk [vmem:[#allocation3 + $0x138] sm:$0xff] %vm365, %v3218
      %3251 = vst.msk [vmem:[#allocation3 + $0x150] sm:$0xff] %vm365, %v3219
      %3252 = vst.msk [vmem:[#allocation3 + $0x168] sm:$0xff] %vm365, %v3220
      %3253 = vst.msk [vmem:[#allocation3 + $0x180] sm:$0xff] %vm365, %v3221
      %3254 = vst.msk [vmem:[#allocation3 + $0x198] sm:$0xff] %vm365, %v3222
      %3255 = vst.msk [vmem:[#allocation3 + $0x1b0] sm:$0xff] %vm365, %v3223
      %3256 = vst.msk [vmem:[#allocation3 + $0x1c8] sm:$0xff] %vm365, %v3224
      %3257 = vst.msk [vmem:[#allocation3 + $0x1e0] sm:$0xff] %vm365, %v3225
      %3258 = vst.msk [vmem:[#allocation3 + $0x1f8] sm:$0xff] %vm365, %v3226
      %3259 = vst.msk [vmem:[#allocation3 + $0x210] sm:$0xff] %vm365, %v3227
      %3260 = vst.msk [vmem:[#allocation3 + $0x228] sm:$0xff] %vm365, %v3228
      %3261 = vst.msk [vmem:[#allocation3 + $0x240] sm:$0xff] %vm365, %v3229
      %3262 = vst.msk [vmem:[#allocation3 + $0x258] sm:$0xff] %vm365, %v3230
      %3263 = vst.msk [vmem:[#allocation3 + $0x270] sm:$0xff] %vm365, %v3231
      %3264 = vst.msk [vmem:[#allocation3 + $0x288] sm:$0xff] %vm365, %v3232
      %3265 = vst.msk [vmem:[#allocation3 + $0x2a0] sm:$0xff] %vm365, %v3233
      %3266 = vst.msk [vmem:[#allocation3 + $0x2b8] sm:$0xff] %vm365, %v3234
      %3267 = vst.msk [vmem:[#allocation3 + $0x2d0] sm:$0xff] %vm365, %v3235
      %3268 = vst.msk [vmem:[#allocation3 + $0x2e8] sm:$0xff] %vm365, %v3236
      %v3269 = vld [vmem:[#allocation2 + $0x8] sm:$0xff]
      %v3270 = vld [vmem:[#allocation2 + $0x10] sm:$0xff]
      %v3271 = vld [vmem:[#allocation2 + $0x18] sm:$0xff]
      %v3272 = vld [vmem:[#allocation2 + $0x20] sm:$0xff]
      %v3273 = vld [vmem:[#allocation2 + $0x28] sm:$0xff]
      %v3274 = vld [vmem:[#allocation2 + $0x30] sm:$0xff]
      %v3275 = vld [vmem:[#allocation2 + $0x38] sm:$0xff]
      %v3276 = vld [vmem:[#allocation2 + $0x40] sm:$0xff]
      %v3277 = vld [vmem:[#allocation2 + $0x48] sm:$0xff]
      %v3278 = vld [vmem:[#allocation2 + $0x50] sm:$0xff]
      %v3279 = vld [vmem:[#allocation2 + $0x58] sm:$0xff]
      %v3280 = vld [vmem:[#allocation2 + $0x60] sm:$0xff]
      %v3281 = vld [vmem:[#allocation2 + $0x68] sm:$0xff]
      %v3282 = vld [vmem:[#allocation2 + $0x70] sm:$0xff]
      %v3283 = vld [vmem:[#allocation2 + $0x78] sm:$0xff]
      %v3284 = vld [vmem:[#allocation2 + $0x80] sm:$0xff]
      %v3285 = vld [vmem:[#allocation2 + $0x88] sm:$0xff]
      %v3286 = vld [vmem:[#allocation2 + $0x90] sm:$0xff]
      %v3287 = vld [vmem:[#allocation2 + $0x98] sm:$0xff]
      %v3288 = vld [vmem:[#allocation2 + $0xa0] sm:$0xff]
      %v3289 = vld [vmem:[#allocation2 + $0xa8] sm:$0xff]
      %v3290 = vld [vmem:[#allocation2 + $0xb0] sm:$0xff]
      %v3291 = vld [vmem:[#allocation2 + $0xb8] sm:$0xff]
      %v3292 = vld [vmem:[#allocation2 + $0xc0] sm:$0xff]
      %v3293 = vld [vmem:[#allocation2 + $0xc8] sm:$0xff]
      %v3294 = vld [vmem:[#allocation2 + $0xd0] sm:$0xff]
      %v3295 = vld [vmem:[#allocation2 + $0xd8] sm:$0xff]
      %v3296 = vld [vmem:[#allocation2 + $0xe0] sm:$0xff]
      %v3297 = vld [vmem:[#allocation2 + $0xe8] sm:$0xff]
      %v3298 = vld [vmem:[#allocation2 + $0xf0] sm:$0xff]
      %v3299 = vld [vmem:[#allocation2 + $0xf8] sm:$0xff]
      %v3300 = vld [vmem:[#allocation2 + $0x100] sm:$0xff]
      %3333 = vrot.lane.b32.xlu0 %v3269, 32
      %v3334 = vpop.permute.xlu0 %3333
      %3335 = vrot.lane.b32.xlu0 %v3270, 32
      %v3336 = vpop.permute.xlu0 %3335
      %3337 = vrot.lane.b32.xlu0 %v3271, 32
      %v3338 = vpop.permute.xlu0 %3337
      %3339 = vrot.lane.b32.xlu0 %v3272, 32
      %v3340 = vpop.permute.xlu0 %3339
      %3341 = vrot.lane.b32.xlu0 %v3273, 32
      %v3342 = vpop.permute.xlu0 %3341
      %3343 = vrot.lane.b32.xlu0 %v3274, 32
      %v3344 = vpop.permute.xlu0 %3343
      %3345 = vrot.lane.b32.xlu0 %v3275, 32
      %v3346 = vpop.permute.xlu0 %3345
      %3347 = vrot.lane.b32.xlu0 %v3276, 32
      %v3348 = vpop.permute.xlu0 %3347
      %3349 = vrot.lane.b32.xlu0 %v3277, 32
      %v3350 = vpop.permute.xlu0 %3349
      %3351 = vrot.lane.b32.xlu0 %v3278, 32
      %v3352 = vpop.permute.xlu0 %3351
      %3353 = vrot.lane.b32.xlu0 %v3279, 32
      %v3354 = vpop.permute.xlu0 %3353
      %3355 = vrot.lane.b32.xlu0 %v3280, 32
      %v3356 = vpop.permute.xlu0 %3355
      %3357 = vrot.lane.b32.xlu0 %v3281, 32
      %v3358 = vpop.permute.xlu0 %3357
      %3359 = vrot.lane.b32.xlu0 %v3282, 32
      %v3360 = vpop.permute.xlu0 %3359
      %3361 = vrot.lane.b32.xlu0 %v3283, 32
      %v3362 = vpop.permute.xlu0 %3361
      %3363 = vrot.lane.b32.xlu0 %v3284, 32
      %v3364 = vpop.permute.xlu0 %3363
      %3365 = vrot.lane.b32.xlu0 %v3285, 32
      %v3366 = vpop.permute.xlu0 %3365
      %3367 = vrot.lane.b32.xlu0 %v3286, 32
      %v3368 = vpop.permute.xlu0 %3367
      %3369 = vrot.lane.b32.xlu0 %v3287, 32
      %v3370 = vpop.permute.xlu0 %3369
      %3371 = vrot.lane.b32.xlu0 %v3288, 32
      %v3372 = vpop.permute.xlu0 %3371
      %3373 = vrot.lane.b32.xlu0 %v3289, 32
      %v3374 = vpop.permute.xlu0 %3373
      %3375 = vrot.lane.b32.xlu0 %v3290, 32
      %v3376 = vpop.permute.xlu0 %3375
      %3377 = vrot.lane.b32.xlu0 %v3291, 32
      %v3378 = vpop.permute.xlu0 %3377
      %3379 = vrot.lane.b32.xlu0 %v3292, 32
      %v3380 = vpop.permute.xlu0 %3379
      %3381 = vrot.lane.b32.xlu0 %v3293, 32
      %v3382 = vpop.permute.xlu0 %3381
      %3383 = vrot.lane.b32.xlu0 %v3294, 32
      %v3384 = vpop.permute.xlu0 %3383
      %3385 = vrot.lane.b32.xlu0 %v3295, 32
      %v3386 = vpop.permute.xlu0 %3385
      %3387 = vrot.lane.b32.xlu0 %v3296, 32
      %v3388 = vpop.permute.xlu0 %3387
      %3389 = vrot.lane.b32.xlu0 %v3297, 32
      %v3390 = vpop.permute.xlu0 %3389
      %3391 = vrot.lane.b32.xlu0 %v3298, 32
      %v3392 = vpop.permute.xlu0 %3391
      %3393 = vrot.lane.b32.xlu0 %v3299, 32
      %v3394 = vpop.permute.xlu0 %3393
      %3395 = vrot.lane.b32.xlu0 %v3300, 32
      %v3396 = vpop.permute.xlu0 %3395
      %3429 = vst.msk [vmem:[#allocation3] sm:$0xff] %vm1045, %v3334
      %3430 = vst.msk [vmem:[#allocation3 + $0x18] sm:$0xff] %vm1045, %v3336
      %3431 = vst.msk [vmem:[#allocation3 + $0x30] sm:$0xff] %vm1045, %v3338
      %3432 = vst.msk [vmem:[#allocation3 + $0x48] sm:$0xff] %vm1045, %v3340
      %3433 = vst.msk [vmem:[#allocation3 + $0x60] sm:$0xff] %vm1045, %v3342
      %3434 = vst.msk [vmem:[#allocation3 + $0x78] sm:$0xff] %vm1045, %v3344
      %3435 = vst.msk [vmem:[#allocation3 + $0x90] sm:$0xff] %vm1045, %v3346
      %3436 = vst.msk [vmem:[#allocation3 + $0xa8] sm:$0xff] %vm1045, %v3348
      %3437 = vst.msk [vmem:[#allocation3 + $0xc0] sm:$0xff] %vm1045, %v3350
      %3438 = vst.msk [vmem:[#allocation3 + $0xd8] sm:$0xff] %vm1045, %v3352
      %3439 = vst.msk [vmem:[#allocation3 + $0xf0] sm:$0xff] %vm1045, %v3354
      %3440 = vst.msk [vmem:[#allocation3 + $0x108] sm:$0xff] %vm1045, %v3356
      %3441 = vst.msk [vmem:[#allocation3 + $0x120] sm:$0xff] %vm1045, %v3358
      %3442 = vst.msk [vmem:[#allocation3 + $0x138] sm:$0xff] %vm1045, %v3360
      %3443 = vst.msk [vmem:[#allocation3 + $0x150] sm:$0xff] %vm1045, %v3362
      %3444 = vst.msk [vmem:[#allocation3 + $0x168] sm:$0xff] %vm1045, %v3364
      %3445 = vst.msk [vmem:[#allocation3 + $0x180] sm:$0xff] %vm1045, %v3366
      %3446 = vst.msk [vmem:[#allocation3 + $0x198] sm:$0xff] %vm1045, %v3368
      %3447 = vst.msk [vmem:[#allocation3 + $0x1b0] sm:$0xff] %vm1045, %v3370
      %3448 = vst.msk [vmem:[#allocation3 + $0x1c8] sm:$0xff] %vm1045, %v3372
      %3449 = vst.msk [vmem:[#allocation3 + $0x1e0] sm:$0xff] %vm1045, %v3374
      %3450 = vst.msk [vmem:[#allocation3 + $0x1f8] sm:$0xff] %vm1045, %v3376
      %3451 = vst.msk [vmem:[#allocation3 + $0x210] sm:$0xff] %vm1045, %v3378
      %3452 = vst.msk [vmem:[#allocation3 + $0x228] sm:$0xff] %vm1045, %v3380
      %3453 = vst.msk [vmem:[#allocation3 + $0x240] sm:$0xff] %vm1045, %v3382
      %3454 = vst.msk [vmem:[#allocation3 + $0x258] sm:$0xff] %vm1045, %v3384
      %3455 = vst.msk [vmem:[#allocation3 + $0x270] sm:$0xff] %vm1045, %v3386
      %3456 = vst.msk [vmem:[#allocation3 + $0x288] sm:$0xff] %vm1045, %v3388
      %3457 = vst.msk [vmem:[#allocation3 + $0x2a0] sm:$0xff] %vm1045, %v3390
      %3458 = vst.msk [vmem:[#allocation3 + $0x2b8] sm:$0xff] %vm1045, %v3392
      %3459 = vst.msk [vmem:[#allocation3 + $0x2d0] sm:$0xff] %vm1045, %v3394
      %3460 = vst.msk [vmem:[#allocation3 + $0x2e8] sm:$0xff] %vm1045, %v3396
      %v3461 = vld [vmem:[#allocation2 + $0x9] sm:$0xff]
      %v3462 = vld [vmem:[#allocation2 + $0x11] sm:$0xff]
      %v3463 = vld [vmem:[#allocation2 + $0x19] sm:$0xff]
      %v3464 = vld [vmem:[#allocation2 + $0x21] sm:$0xff]
      %v3465 = vld [vmem:[#allocation2 + $0x29] sm:$0xff]
      %v3466 = vld [vmem:[#allocation2 + $0x31] sm:$0xff]
      %v3467 = vld [vmem:[#allocation2 + $0x39] sm:$0xff]
      %v3468 = vld [vmem:[#allocation2 + $0x41] sm:$0xff]
      %v3469 = vld [vmem:[#allocation2 + $0x49] sm:$0xff]
      %v3470 = vld [vmem:[#allocation2 + $0x51] sm:$0xff]
      %v3471 = vld [vmem:[#allocation2 + $0x59] sm:$0xff]
      %v3472 = vld [vmem:[#allocation2 + $0x61] sm:$0xff]
      %v3473 = vld [vmem:[#allocation2 + $0x69] sm:$0xff]
      %v3474 = vld [vmem:[#allocation2 + $0x71] sm:$0xff]
      %v3475 = vld [vmem:[#allocation2 + $0x79] sm:$0xff]
      %v3476 = vld [vmem:[#allocation2 + $0x81] sm:$0xff]
      %v3477 = vld [vmem:[#allocation2 + $0x89] sm:$0xff]
      %v3478 = vld [vmem:[#allocation2 + $0x91] sm:$0xff]
      %v3479 = vld [vmem:[#allocation2 + $0x99] sm:$0xff]
      %v3480 = vld [vmem:[#allocation2 + $0xa1] sm:$0xff]
      %v3481 = vld [vmem:[#allocation2 + $0xa9] sm:$0xff]
      %v3482 = vld [vmem:[#allocation2 + $0xb1] sm:$0xff]
      %v3483 = vld [vmem:[#allocation2 + $0xb9] sm:$0xff]
      %v3484 = vld [vmem:[#allocation2 + $0xc1] sm:$0xff]
      %v3485 = vld [vmem:[#allocation2 + $0xc9] sm:$0xff]
      %v3486 = vld [vmem:[#allocation2 + $0xd1] sm:$0xff]
      %v3487 = vld [vmem:[#allocation2 + $0xd9] sm:$0xff]
      %v3488 = vld [vmem:[#allocation2 + $0xe1] sm:$0xff]
      %v3489 = vld [vmem:[#allocation2 + $0xe9] sm:$0xff]
      %v3490 = vld [vmem:[#allocation2 + $0xf1] sm:$0xff]
      %v3491 = vld [vmem:[#allocation2 + $0xf9] sm:$0xff]
      %v3492 = vld [vmem:[#allocation2 + $0x101] sm:$0xff]
      %v3493 = vsel %vm1142, %v3461, 0.0
      %v3494 = vsel %vm1143, %v3462, 0.0
      %v3495 = vsel %vm1144, %v3463, 0.0
      %v3496 = vsel %vm1145, %v3464, 0.0
      %v3497 = vsel %vm1146, %v3465, 0.0
      %v3498 = vsel %vm1147, %v3466, 0.0
      %v3499 = vsel %vm1148, %v3467, 0.0
      %v3500 = vsel %vm1149, %v3468, 0.0
      %v3501 = vsel %vm1150, %v3469, 0.0
      %v3502 = vsel %vm1151, %v3470, 0.0
      %v3503 = vsel %vm1152, %v3471, 0.0
      %v3504 = vsel %vm1153, %v3472, 0.0
      %v3505 = vsel %vm1154, %v3473, 0.0
      %v3506 = vsel %vm1155, %v3474, 0.0
      %v3507 = vsel %vm1156, %v3475, 0.0
      %v3508 = vsel %vm1157, %v3476, 0.0
      %v3509 = vsel %vm1158, %v3477, 0.0
      %v3510 = vsel %vm1159, %v3478, 0.0
      %v3511 = vsel %vm1160, %v3479, 0.0
      %v3512 = vsel %vm1161, %v3480, 0.0
      %v3513 = vsel %vm1162, %v3481, 0.0
      %v3514 = vsel %vm1163, %v3482, 0.0
      %v3515 = vsel %vm1164, %v3483, 0.0
      %v3516 = vsel %vm1165, %v3484, 0.0
      %v3517 = vsel %vm1166, %v3485, 0.0
      %v3518 = vsel %vm1167, %v3486, 0.0
      %v3519 = vsel %vm1168, %v3487, 0.0
      %v3520 = vsel %vm1169, %v3488, 0.0
      %v3521 = vsel %vm1170, %v3489, 0.0
      %v3522 = vsel %vm1171, %v3490, 0.0
      %v3523 = vsel %vm1172, %v3491, 0.0
      %v3524 = vsel %vm1173, %v3492, 0.0
      %3557 = vrot.lane.b32.xlu0 %v3493, 64
      %v3558 = vpop.permute.xlu0 %3557
      %3559 = vrot.lane.b32.xlu0 %v3494, 64
      %v3560 = vpop.permute.xlu0 %3559
      %3561 = vrot.lane.b32.xlu0 %v3495, 64
      %v3562 = vpop.permute.xlu0 %3561
      %3563 = vrot.lane.b32.xlu0 %v3496, 64
      %v3564 = vpop.permute.xlu0 %3563
      %3565 = vrot.lane.b32.xlu0 %v3497, 64
      %v3566 = vpop.permute.xlu0 %3565
      %3567 = vrot.lane.b32.xlu0 %v3498, 64
      %v3568 = vpop.permute.xlu0 %3567
      %3569 = vrot.lane.b32.xlu0 %v3499, 64
      %v3570 = vpop.permute.xlu0 %3569
      %3571 = vrot.lane.b32.xlu0 %v3500, 64
      %v3572 = vpop.permute.xlu0 %3571
      %3573 = vrot.lane.b32.xlu0 %v3501, 64
      %v3574 = vpop.permute.xlu0 %3573
      %3575 = vrot.lane.b32.xlu0 %v3502, 64
      %v3576 = vpop.permute.xlu0 %3575
      %3577 = vrot.lane.b32.xlu0 %v3503, 64
      %v3578 = vpop.permute.xlu0 %3577
      %3579 = vrot.lane.b32.xlu0 %v3504, 64
      %v3580 = vpop.permute.xlu0 %3579
      %3581 = vrot.lane.b32.xlu0 %v3505, 64
      %v3582 = vpop.permute.xlu0 %3581
      %3583 = vrot.lane.b32.xlu0 %v3506, 64
      %v3584 = vpop.permute.xlu0 %3583
      %3585 = vrot.lane.b32.xlu0 %v3507, 64
      %v3586 = vpop.permute.xlu0 %3585
      %3587 = vrot.lane.b32.xlu0 %v3508, 64
      %v3588 = vpop.permute.xlu0 %3587
      %3589 = vrot.lane.b32.xlu0 %v3509, 64
      %v3590 = vpop.permute.xlu0 %3589
      %3591 = vrot.lane.b32.xlu0 %v3510, 64
      %v3592 = vpop.permute.xlu0 %3591
      %3593 = vrot.lane.b32.xlu0 %v3511, 64
      %v3594 = vpop.permute.xlu0 %3593
      %3595 = vrot.lane.b32.xlu0 %v3512, 64
      %v3596 = vpop.permute.xlu0 %3595
      %3597 = vrot.lane.b32.xlu0 %v3513, 64
      %v3598 = vpop.permute.xlu0 %3597
      %3599 = vrot.lane.b32.xlu0 %v3514, 64
      %v3600 = vpop.permute.xlu0 %3599
      %3601 = vrot.lane.b32.xlu0 %v3515, 64
      %v3602 = vpop.permute.xlu0 %3601
      %3603 = vrot.lane.b32.xlu0 %v3516, 64
      %v3604 = vpop.permute.xlu0 %3603
      %3605 = vrot.lane.b32.xlu0 %v3517, 64
      %v3606 = vpop.permute.xlu0 %3605
      %3607 = vrot.lane.b32.xlu0 %v3518, 64
      %v3608 = vpop.permute.xlu0 %3607
      %3609 = vrot.lane.b32.xlu0 %v3519, 64
      %v3610 = vpop.permute.xlu0 %3609
      %3611 = vrot.lane.b32.xlu0 %v3520, 64
      %v3612 = vpop.permute.xlu0 %3611
      %3613 = vrot.lane.b32.xlu0 %v3521, 64
      %v3614 = vpop.permute.xlu0 %3613
      %3615 = vrot.lane.b32.xlu0 %v3522, 64
      %v3616 = vpop.permute.xlu0 %3615
      %3617 = vrot.lane.b32.xlu0 %v3523, 64
      %v3618 = vpop.permute.xlu0 %3617
      %3619 = vrot.lane.b32.xlu0 %v3524, 64
      %v3620 = vpop.permute.xlu0 %3619
      %3653 = vst.msk [vmem:[#allocation3] sm:$0xff] %vm1334, %v3558
      %3654 = vst.msk [vmem:[#allocation3 + $0x18] sm:$0xff] %vm1334, %v3560
      %3655 = vst.msk [vmem:[#allocation3 + $0x30] sm:$0xff] %vm1334, %v3562
      %3656 = vst.msk [vmem:[#allocation3 + $0x48] sm:$0xff] %vm1334, %v3564
      %3657 = vst.msk [vmem:[#allocation3 + $0x60] sm:$0xff] %vm1334, %v3566
      %3658 = vst.msk [vmem:[#allocation3 + $0x78] sm:$0xff] %vm1334, %v3568
      %3659 = vst.msk [vmem:[#allocation3 + $0x90] sm:$0xff] %vm1334, %v3570
      %3660 = vst.msk [vmem:[#allocation3 + $0xa8] sm:$0xff] %vm1334, %v3572
      %3661 = vst.msk [vmem:[#allocation3 + $0xc0] sm:$0xff] %vm1334, %v3574
      %3662 = vst.msk [vmem:[#allocation3 + $0xd8] sm:$0xff] %vm1334, %v3576
      %3663 = vst.msk [vmem:[#allocation3 + $0xf0] sm:$0xff] %vm1334, %v3578
      %3664 = vst.msk [vmem:[#allocation3 + $0x108] sm:$0xff] %vm1334, %v3580
      %3665 = vst.msk [vmem:[#allocation3 + $0x120] sm:$0xff] %vm1334, %v3582
      %3666 = vst.msk [vmem:[#allocation3 + $0x138] sm:$0xff] %vm1334, %v3584
      %3667 = vst.msk [vmem:[#allocation3 + $0x150] sm:$0xff] %vm1334, %v3586
      %3668 = vst.msk [vmem:[#allocation3 + $0x168] sm:$0xff] %vm1334, %v3588
      %3669 = vst.msk [vmem:[#allocation3 + $0x180] sm:$0xff] %vm1334, %v3590
      %3670 = vst.msk [vmem:[#allocation3 + $0x198] sm:$0xff] %vm1334, %v3592
      %3671 = vst.msk [vmem:[#allocation3 + $0x1b0] sm:$0xff] %vm1334, %v3594
      %3672 = vst.msk [vmem:[#allocation3 + $0x1c8] sm:$0xff] %vm1334, %v3596
      %3673 = vst.msk [vmem:[#allocation3 + $0x1e0] sm:$0xff] %vm1334, %v3598
      %3674 = vst.msk [vmem:[#allocation3 + $0x1f8] sm:$0xff] %vm1334, %v3600
      %3675 = vst.msk [vmem:[#allocation3 + $0x210] sm:$0xff] %vm1334, %v3602
      %3676 = vst.msk [vmem:[#allocation3 + $0x228] sm:$0xff] %vm1334, %v3604
      %3677 = vst.msk [vmem:[#allocation3 + $0x240] sm:$0xff] %vm1334, %v3606
      %3678 = vst.msk [vmem:[#allocation3 + $0x258] sm:$0xff] %vm1334, %v3608
      %3679 = vst.msk [vmem:[#allocation3 + $0x270] sm:$0xff] %vm1334, %v3610
      %3680 = vst.msk [vmem:[#allocation3 + $0x288] sm:$0xff] %vm1334, %v3612
      %3681 = vst.msk [vmem:[#allocation3 + $0x2a0] sm:$0xff] %vm1334, %v3614
      %3682 = vst.msk [vmem:[#allocation3 + $0x2b8] sm:$0xff] %vm1334, %v3616
      %3683 = vst.msk [vmem:[#allocation3 + $0x2d0] sm:$0xff] %vm1334, %v3618
      %3684 = vst.msk [vmem:[#allocation3 + $0x2e8] sm:$0xff] %vm1334, %v3620
      %v3685 = vld [vmem:[#allocation2 + $0x17] sm:$0xff]
      %v3686 = vld [vmem:[#allocation2 + $0x1f] sm:$0xff]
      %v3687 = vld [vmem:[#allocation2 + $0x27] sm:$0xff]
      %v3688 = vld [vmem:[#allocation2 + $0x2f] sm:$0xff]
      %v3689 = vld [vmem:[#allocation2 + $0x37] sm:$0xff]
      %v3690 = vld [vmem:[#allocation2 + $0x3f] sm:$0xff]
      %v3691 = vld [vmem:[#allocation2 + $0x47] sm:$0xff]
      %v3692 = vld [vmem:[#allocation2 + $0x4f] sm:$0xff]
      %v3693 = vld [vmem:[#allocation2 + $0x57] sm:$0xff]
      %v3694 = vld [vmem:[#allocation2 + $0x5f] sm:$0xff]
      %v3695 = vld [vmem:[#allocation2 + $0x67] sm:$0xff]
      %v3696 = vld [vmem:[#allocation2 + $0x6f] sm:$0xff]
      %v3697 = vld [vmem:[#allocation2 + $0x77] sm:$0xff]
      %v3698 = vld [vmem:[#allocation2 + $0x7f] sm:$0xff]
      %v3699 = vld [vmem:[#allocation2 + $0x87] sm:$0xff]
      %v3700 = vld [vmem:[#allocation2 + $0x8f] sm:$0xff]
      %v3701 = vld [vmem:[#allocation2 + $0x97] sm:$0xff]
      %v3702 = vld [vmem:[#allocation2 + $0x9f] sm:$0xff]
      %v3703 = vld [vmem:[#allocation2 + $0xa7] sm:$0xff]
      %v3704 = vld [vmem:[#allocation2 + $0xaf] sm:$0xff]
      %v3705 = vld [vmem:[#allocation2 + $0xb7] sm:$0xff]
      %v3706 = vld [vmem:[#allocation2 + $0xbf] sm:$0xff]
      %v3707 = vld [vmem:[#allocation2 + $0xc7] sm:$0xff]
      %v3708 = vld [vmem:[#allocation2 + $0xcf] sm:$0xff]
      %v3709 = vld [vmem:[#allocation2 + $0xd7] sm:$0xff]
      %v3710 = vld [vmem:[#allocation2 + $0xdf] sm:$0xff]
      %v3711 = vld [vmem:[#allocation2 + $0xe7] sm:$0xff]
      %v3712 = vld [vmem:[#allocation2 + $0xef] sm:$0xff]
      %v3713 = vld [vmem:[#allocation2 + $0xf7] sm:$0xff]
      %v3714 = vld [vmem:[#allocation2 + $0xff] sm:$0xff]
      %v3715 = vld [vmem:[#allocation2 + $0x107] sm:$0xff]
      %v3716 = vld [vmem:[#allocation2 + $0x10f] sm:$0xff]
      %v3717 = vsel %vm789, %v3685, 0.0
      %v3718 = vsel %vm790, %v3686, 0.0
      %v3719 = vsel %vm791, %v3687, 0.0
      %v3720 = vsel %vm792, %v3688, 0.0
      %v3721 = vsel %vm793, %v3689, 0.0
      %v3722 = vsel %vm794, %v3690, 0.0
      %v3723 = vsel %vm795, %v3691, 0.0
      %v3724 = vsel %vm796, %v3692, 0.0
      %v3725 = vsel %vm797, %v3693, 0.0
      %v3726 = vsel %vm798, %v3694, 0.0
      %v3727 = vsel %vm799, %v3695, 0.0
      %v3728 = vsel %vm800, %v3696, 0.0
      %v3729 = vsel %vm801, %v3697, 0.0
      %v3730 = vsel %vm802, %v3698, 0.0
      %v3731 = vsel %vm803, %v3699, 0.0
      %v3732 = vsel %vm804, %v3700, 0.0
      %v3733 = vsel %vm805, %v3701, 0.0
      %v3734 = vsel %vm806, %v3702, 0.0
      %v3735 = vsel %vm807, %v3703, 0.0
      %v3736 = vsel %vm808, %v3704, 0.0
      %v3737 = vsel %vm809, %v3705, 0.0
      %v3738 = vsel %vm810, %v3706, 0.0
      %v3739 = vsel %vm811, %v3707, 0.0
      %v3740 = vsel %vm812, %v3708, 0.0
      %v3741 = vsel %vm813, %v3709, 0.0
      %v3742 = vsel %vm814, %v3710, 0.0
      %v3743 = vsel %vm815, %v3711, 0.0
      %v3744 = vsel %vm816, %v3712, 0.0
      %v3745 = vsel %vm817, %v3713, 0.0
      %v3746 = vsel %vm818, %v3714, 0.0
      %v3747 = vsel %vm819, %v3715, 0.0
      %v3748 = vsel %vm820, %v3716, 0.0
      %3781 = vrot.lane.b32.xlu0 %v3717, 96
      %v3782 = vpop.permute.xlu0 %3781
      %3783 = vrot.lane.b32.xlu0 %v3718, 96
      %v3784 = vpop.permute.xlu0 %3783
      %3785 = vrot.lane.b32.xlu0 %v3719, 96
      %v3786 = vpop.permute.xlu0 %3785
      %3787 = vrot.lane.b32.xlu0 %v3720, 96
      %v3788 = vpop.permute.xlu0 %3787
      %3789 = vrot.lane.b32.xlu0 %v3721, 96
      %v3790 = vpop.permute.xlu0 %3789
      %3791 = vrot.lane.b32.xlu0 %v3722, 96
      %v3792 = vpop.permute.xlu0 %3791
      %3793 = vrot.lane.b32.xlu0 %v3723, 96
      %v3794 = vpop.permute.xlu0 %3793
      %3795 = vrot.lane.b32.xlu0 %v3724, 96
      %v3796 = vpop.permute.xlu0 %3795
      %3797 = vrot.lane.b32.xlu0 %v3725, 96
      %v3798 = vpop.permute.xlu0 %3797
      %3799 = vrot.lane.b32.xlu0 %v3726, 96
      %v3800 = vpop.permute.xlu0 %3799
      %3801 = vrot.lane.b32.xlu0 %v3727, 96
      %v3802 = vpop.permute.xlu0 %3801
      %3803 = vrot.lane.b32.xlu0 %v3728, 96
      %v3804 = vpop.permute.xlu0 %3803
      %3805 = vrot.lane.b32.xlu0 %v3729, 96
      %v3806 = vpop.permute.xlu0 %3805
      %3807 = vrot.lane.b32.xlu0 %v3730, 96
      %v3808 = vpop.permute.xlu0 %3807
      %3809 = vrot.lane.b32.xlu0 %v3731, 96
      %v3810 = vpop.permute.xlu0 %3809
      %3811 = vrot.lane.b32.xlu0 %v3732, 96
      %v3812 = vpop.permute.xlu0 %3811
      %3813 = vrot.lane.b32.xlu0 %v3733, 96
      %v3814 = vpop.permute.xlu0 %3813
      %3815 = vrot.lane.b32.xlu0 %v3734, 96
      %v3816 = vpop.permute.xlu0 %3815
      %3817 = vrot.lane.b32.xlu0 %v3735, 96
      %v3818 = vpop.permute.xlu0 %3817
      %3819 = vrot.lane.b32.xlu0 %v3736, 96
      %v3820 = vpop.permute.xlu0 %3819
      %3821 = vrot.lane.b32.xlu0 %v3737, 96
      %v3822 = vpop.permute.xlu0 %3821
      %3823 = vrot.lane.b32.xlu0 %v3738, 96
      %v3824 = vpop.permute.xlu0 %3823
      %3825 = vrot.lane.b32.xlu0 %v3739, 96
      %v3826 = vpop.permute.xlu0 %3825
      %3827 = vrot.lane.b32.xlu0 %v3740, 96
      %v3828 = vpop.permute.xlu0 %3827
      %3829 = vrot.lane.b32.xlu0 %v3741, 96
      %v3830 = vpop.permute.xlu0 %3829
      %3831 = vrot.lane.b32.xlu0 %v3742, 96
      %v3832 = vpop.permute.xlu0 %3831
      %3833 = vrot.lane.b32.xlu0 %v3743, 96
      %v3834 = vpop.permute.xlu0 %3833
      %3835 = vrot.lane.b32.xlu0 %v3744, 96
      %v3836 = vpop.permute.xlu0 %3835
      %3837 = vrot.lane.b32.xlu0 %v3745, 96
      %v3838 = vpop.permute.xlu0 %3837
      %3839 = vrot.lane.b32.xlu0 %v3746, 96
      %v3840 = vpop.permute.xlu0 %3839
      %3841 = vrot.lane.b32.xlu0 %v3747, 96
      %v3842 = vpop.permute.xlu0 %3841
      %3843 = vrot.lane.b32.xlu0 %v3748, 96
      %v3844 = vpop.permute.xlu0 %3843
      %3877 = vst.msk [vmem:[#allocation3] sm:$0xff] %vm1559, %v3782
      %3878 = vst.msk [vmem:[#allocation3 + $0x18] sm:$0xff] %vm1559, %v3784
      %3879 = vst.msk [vmem:[#allocation3 + $0x30] sm:$0xff] %vm1559, %v3786
      %3880 = vst.msk [vmem:[#allocation3 + $0x48] sm:$0xff] %vm1559, %v3788
      %3881 = vst.msk [vmem:[#allocation3 + $0x60] sm:$0xff] %vm1559, %v3790
      %3882 = vst.msk [vmem:[#allocation3 + $0x78] sm:$0xff] %vm1559, %v3792
      %3883 = vst.msk [vmem:[#allocation3 + $0x90] sm:$0xff] %vm1559, %v3794
      %3884 = vst.msk [vmem:[#allocation3 + $0xa8] sm:$0xff] %vm1559, %v3796
      %3885 = vst.msk [vmem:[#allocation3 + $0xc0] sm:$0xff] %vm1559, %v3798
      %3886 = vst.msk [vmem:[#allocation3 + $0xd8] sm:$0xff] %vm1559, %v3800
      %3887 = vst.msk [vmem:[#allocation3 + $0xf0] sm:$0xff] %vm1559, %v3802
      %3888 = vst.msk [vmem:[#allocation3 + $0x108] sm:$0xff] %vm1559, %v3804
      %3889 = vst.msk [vmem:[#allocation3 + $0x120] sm:$0xff] %vm1559, %v3806
      %3890 = vst.msk [vmem:[#allocation3 + $0x138] sm:$0xff] %vm1559, %v3808
      %3891 = vst.msk [vmem:[#allocation3 + $0x150] sm:$0xff] %vm1559, %v3810
      %3892 = vst.msk [vmem:[#allocation3 + $0x168] sm:$0xff] %vm1559, %v3812
      %3893 = vst.msk [vmem:[#allocation3 + $0x180] sm:$0xff] %vm1559, %v3814
      %3894 = vst.msk [vmem:[#allocation3 + $0x198] sm:$0xff] %vm1559, %v3816
      %3895 = vst.msk [vmem:[#allocation3 + $0x1b0] sm:$0xff] %vm1559, %v3818
      %3896 = vst.msk [vmem:[#allocation3 + $0x1c8] sm:$0xff] %vm1559, %v3820
      %3897 = vst.msk [vmem:[#allocation3 + $0x1e0] sm:$0xff] %vm1559, %v3822
      %3898 = vst.msk [vmem:[#allocation3 + $0x1f8] sm:$0xff] %vm1559, %v3824
      %3899 = vst.msk [vmem:[#allocation3 + $0x210] sm:$0xff] %vm1559, %v3826
      %3900 = vst.msk [vmem:[#allocation3 + $0x228] sm:$0xff] %vm1559, %v3828
      %3901 = vst.msk [vmem:[#allocation3 + $0x240] sm:$0xff] %vm1559, %v3830
      %3902 = vst.msk [vmem:[#allocation3 + $0x258] sm:$0xff] %vm1559, %v3832
      %3903 = vst.msk [vmem:[#allocation3 + $0x270] sm:$0xff] %vm1559, %v3834
      %3904 = vst.msk [vmem:[#allocation3 + $0x288] sm:$0xff] %vm1559, %v3836
      %3905 = vst.msk [vmem:[#allocation3 + $0x2a0] sm:$0xff] %vm1559, %v3838
      %3906 = vst.msk [vmem:[#allocation3 + $0x2b8] sm:$0xff] %vm1559, %v3840
      %3907 = vst.msk [vmem:[#allocation3 + $0x2d0] sm:$0xff] %vm1559, %v3842
      %3908 = vst.msk [vmem:[#allocation3 + $0x2e8] sm:$0xff] %vm1559, %v3844
      %v3909 = vld [vmem:[#allocation2 + $0x18] sm:$0xff]
      %v3910 = vld [vmem:[#allocation2 + $0x20] sm:$0xff]
      %v3911 = vld [vmem:[#allocation2 + $0x28] sm:$0xff]
      %v3912 = vld [vmem:[#allocation2 + $0x30] sm:$0xff]
      %v3913 = vld [vmem:[#allocation2 + $0x38] sm:$0xff]
      %v3914 = vld [vmem:[#allocation2 + $0x40] sm:$0xff]
      %v3915 = vld [vmem:[#allocation2 + $0x48] sm:$0xff]
      %v3916 = vld [vmem:[#allocation2 + $0x50] sm:$0xff]
      %v3917 = vld [vmem:[#allocation2 + $0x58] sm:$0xff]
      %v3918 = vld [vmem:[#allocation2 + $0x60] sm:$0xff]
      %v3919 = vld [vmem:[#allocation2 + $0x68] sm:$0xff]
      %v3920 = vld [vmem:[#allocation2 + $0x70] sm:$0xff]
      %v3921 = vld [vmem:[#allocation2 + $0x78] sm:$0xff]
      %v3922 = vld [vmem:[#allocation2 + $0x80] sm:$0xff]
      %v3923 = vld [vmem:[#allocation2 + $0x88] sm:$0xff]
      %v3924 = vld [vmem:[#allocation2 + $0x90] sm:$0xff]
      %v3925 = vld [vmem:[#allocation2 + $0x98] sm:$0xff]
      %v3926 = vld [vmem:[#allocation2 + $0xa0] sm:$0xff]
      %v3927 = vld [vmem:[#allocation2 + $0xa8] sm:$0xff]
      %v3928 = vld [vmem:[#allocation2 + $0xb0] sm:$0xff]
      %v3929 = vld [vmem:[#allocation2 + $0xb8] sm:$0xff]
      %v3930 = vld [vmem:[#allocation2 + $0xc0] sm:$0xff]
      %v3931 = vld [vmem:[#allocation2 + $0xc8] sm:$0xff]
      %v3932 = vld [vmem:[#allocation2 + $0xd0] sm:$0xff]
      %v3933 = vld [vmem:[#allocation2 + $0xd8] sm:$0xff]
      %v3934 = vld [vmem:[#allocation2 + $0xe0] sm:$0xff]
      %v3935 = vld [vmem:[#allocation2 + $0xe8] sm:$0xff]
      %v3936 = vld [vmem:[#allocation2 + $0xf0] sm:$0xff]
      %v3937 = vld [vmem:[#allocation2 + $0xf8] sm:$0xff]
      %v3938 = vld [vmem:[#allocation2 + $0x100] sm:$0xff]
      %v3939 = vld [vmem:[#allocation2 + $0x108] sm:$0xff]
      %v3940 = vld [vmem:[#allocation2 + $0x110] sm:$0xff]
      %3941 = vst.msk [vmem:[#allocation3 + $0x8] sm:$0xff] %vm365, %v3909
      %3942 = vst.msk [vmem:[#allocation3 + $0x20] sm:$0xff] %vm365, %v3910
      %3943 = vst.msk [vmem:[#allocation3 + $0x38] sm:$0xff] %vm365, %v3911
      %3944 = vst.msk [vmem:[#allocation3 + $0x50] sm:$0xff] %vm365, %v3912
      %3945 = vst.msk [vmem:[#allocation3 + $0x68] sm:$0xff] %vm365, %v3913
      %3946 = vst.msk [vmem:[#allocation3 + $0x80] sm:$0xff] %vm365, %v3914
      %3947 = vst.msk [vmem:[#allocation3 + $0x98] sm:$0xff] %vm365, %v3915
      %3948 = vst.msk [vmem:[#allocation3 + $0xb0] sm:$0xff] %vm365, %v3916
      %3949 = vst.msk [vmem:[#allocation3 + $0xc8] sm:$0xff] %vm365, %v3917
      %3950 = vst.msk [vmem:[#allocation3 + $0xe0] sm:$0xff] %vm365, %v3918
      %3951 = vst.msk [vmem:[#allocation3 + $0xf8] sm:$0xff] %vm365, %v3919
      %3952 = vst.msk [vmem:[#allocation3 + $0x110] sm:$0xff] %vm365, %v3920
      %3953 = vst.msk [vmem:[#allocation3 + $0x128] sm:$0xff] %vm365, %v3921
      %3954 = vst.msk [vmem:[#allocation3 + $0x140] sm:$0xff] %vm365, %v3922
      %3955 = vst.msk [vmem:[#allocation3 + $0x158] sm:$0xff] %vm365, %v3923
      %3956 = vst.msk [vmem:[#allocation3 + $0x170] sm:$0xff] %vm365, %v3924
      %3957 = vst.msk [vmem:[#allocation3 + $0x188] sm:$0xff] %vm365, %v3925
      %3958 = vst.msk [vmem:[#allocation3 + $0x1a0] sm:$0xff] %vm365, %v3926
      %3959 = vst.msk [vmem:[#allocation3 + $0x1b8] sm:$0xff] %vm365, %v3927
      %3960 = vst.msk [vmem:[#allocation3 + $0x1d0] sm:$0xff] %vm365, %v3928
      %3961 = vst.msk [vmem:[#allocation3 + $0x1e8] sm:$0xff] %vm365, %v3929
      %3962 = vst.msk [vmem:[#allocation3 + $0x200] sm:$0xff] %vm365, %v3930
      %3963 = vst.msk [vmem:[#allocation3 + $0x218] sm:$0xff] %vm365, %v3931
      %3964 = vst.msk [vmem:[#allocation3 + $0x230] sm:$0xff] %vm365, %v3932
      %3965 = vst.msk [vmem:[#allocation3 + $0x248] sm:$0xff] %vm365, %v3933
      %3966 = vst.msk [vmem:[#allocation3 + $0x260] sm:$0xff] %vm365, %v3934
      %3967 = vst.msk [vmem:[#allocation3 + $0x278] sm:$0xff] %vm365, %v3935
      %3968 = vst.msk [vmem:[#allocation3 + $0x290] sm:$0xff] %vm365, %v3936
      %3969 = vst.msk [vmem:[#allocation3 + $0x2a8] sm:$0xff] %vm365, %v3937
      %3970 = vst.msk [vmem:[#allocation3 + $0x2c0] sm:$0xff] %vm365, %v3938
      %3971 = vst.msk [vmem:[#allocation3 + $0x2d8] sm:$0xff] %vm365, %v3939
      %3972 = vst.msk [vmem:[#allocation3 + $0x2f0] sm:$0xff] %vm365, %v3940
      %v3973 = vld [vmem:[#allocation2 + $0x19] sm:$0xff]
      %v3974 = vld [vmem:[#allocation2 + $0x21] sm:$0xff]
      %v3975 = vld [vmem:[#allocation2 + $0x29] sm:$0xff]
      %v3976 = vld [vmem:[#allocation2 + $0x31] sm:$0xff]
      %v3977 = vld [vmem:[#allocation2 + $0x39] sm:$0xff]
      %v3978 = vld [vmem:[#allocation2 + $0x41] sm:$0xff]
      %v3979 = vld [vmem:[#allocation2 + $0x49] sm:$0xff]
      %v3980 = vld [vmem:[#allocation2 + $0x51] sm:$0xff]
      %v3981 = vld [vmem:[#allocation2 + $0x59] sm:$0xff]
      %v3982 = vld [vmem:[#allocation2 + $0x61] sm:$0xff]
      %v3983 = vld [vmem:[#allocation2 + $0x69] sm:$0xff]
      %v3984 = vld [vmem:[#allocation2 + $0x71] sm:$0xff]
      %v3985 = vld [vmem:[#allocation2 + $0x79] sm:$0xff]
      %v3986 = vld [vmem:[#allocation2 + $0x81] sm:$0xff]
      %v3987 = vld [vmem:[#allocation2 + $0x89] sm:$0xff]
      %v3988 = vld [vmem:[#allocation2 + $0x91] sm:$0xff]
      %v3989 = vld [vmem:[#allocation2 + $0x99] sm:$0xff]
      %v3990 = vld [vmem:[#allocation2 + $0xa1] sm:$0xff]
      %v3991 = vld [vmem:[#allocation2 + $0xa9] sm:$0xff]
      %v3992 = vld [vmem:[#allocation2 + $0xb1] sm:$0xff]
      %v3993 = vld [vmem:[#allocation2 + $0xb9] sm:$0xff]
      %v3994 = vld [vmem:[#allocation2 + $0xc1] sm:$0xff]
      %v3995 = vld [vmem:[#allocation2 + $0xc9] sm:$0xff]
      %v3996 = vld [vmem:[#allocation2 + $0xd1] sm:$0xff]
      %v3997 = vld [vmem:[#allocation2 + $0xd9] sm:$0xff]
      %v3998 = vld [vmem:[#allocation2 + $0xe1] sm:$0xff]
      %v3999 = vld [vmem:[#allocation2 + $0xe9] sm:$0xff]
      %v4000 = vld [vmem:[#allocation2 + $0xf1] sm:$0xff]
      %v4001 = vld [vmem:[#allocation2 + $0xf9] sm:$0xff]
      %v4002 = vld [vmem:[#allocation2 + $0x101] sm:$0xff]
      %v4003 = vld [vmem:[#allocation2 + $0x109] sm:$0xff]
      %v4004 = vld [vmem:[#allocation2 + $0x111] sm:$0xff]
      %v4005 = vsel %vm1142, %v3973, 0.0
      %v4006 = vsel %vm1143, %v3974, 0.0
      %v4007 = vsel %vm1144, %v3975, 0.0
      %v4008 = vsel %vm1145, %v3976, 0.0
      %v4009 = vsel %vm1146, %v3977, 0.0
      %v4010 = vsel %vm1147, %v3978, 0.0
      %v4011 = vsel %vm1148, %v3979, 0.0
      %v4012 = vsel %vm1149, %v3980, 0.0
      %v4013 = vsel %vm1150, %v3981, 0.0
      %v4014 = vsel %vm1151, %v3982, 0.0
      %v4015 = vsel %vm1152, %v3983, 0.0
      %v4016 = vsel %vm1153, %v3984, 0.0
      %v4017 = vsel %vm1154, %v3985, 0.0
      %v4018 = vsel %vm1155, %v3986, 0.0
      %v4019 = vsel %vm1156, %v3987, 0.0
      %v4020 = vsel %vm1157, %v3988, 0.0
      %v4021 = vsel %vm1158, %v3989, 0.0
      %v4022 = vsel %vm1159, %v3990, 0.0
      %v4023 = vsel %vm1160, %v3991, 0.0
      %v4024 = vsel %vm1161, %v3992, 0.0
      %v4025 = vsel %vm1162, %v3993, 0.0
      %v4026 = vsel %vm1163, %v3994, 0.0
      %v4027 = vsel %vm1164, %v3995, 0.0
      %v4028 = vsel %vm1165, %v3996, 0.0
      %v4029 = vsel %vm1166, %v3997, 0.0
      %v4030 = vsel %vm1167, %v3998, 0.0
      %v4031 = vsel %vm1168, %v3999, 0.0
      %v4032 = vsel %vm1169, %v4000, 0.0
      %v4033 = vsel %vm1170, %v4001, 0.0
      %v4034 = vsel %vm1171, %v4002, 0.0
      %v4035 = vsel %vm1172, %v4003, 0.0
      %v4036 = vsel %vm1173, %v4004, 0.0
      %4069 = vrot.lane.b32.xlu0 %v4005, 32
      %v4070 = vpop.permute.xlu0 %4069
      %4071 = vrot.lane.b32.xlu0 %v4006, 32
      %v4072 = vpop.permute.xlu0 %4071
      %4073 = vrot.lane.b32.xlu0 %v4007, 32
      %v4074 = vpop.permute.xlu0 %4073
      %4075 = vrot.lane.b32.xlu0 %v4008, 32
      %v4076 = vpop.permute.xlu0 %4075
      %4077 = vrot.lane.b32.xlu0 %v4009, 32
      %v4078 = vpop.permute.xlu0 %4077
      %4079 = vrot.lane.b32.xlu0 %v4010, 32
      %v4080 = vpop.permute.xlu0 %4079
      %4081 = vrot.lane.b32.xlu0 %v4011, 32
      %v4082 = vpop.permute.xlu0 %4081
      %4083 = vrot.lane.b32.xlu0 %v4012, 32
      %v4084 = vpop.permute.xlu0 %4083
      %4085 = vrot.lane.b32.xlu0 %v4013, 32
      %v4086 = vpop.permute.xlu0 %4085
      %4087 = vrot.lane.b32.xlu0 %v4014, 32
      %v4088 = vpop.permute.xlu0 %4087
      %4089 = vrot.lane.b32.xlu0 %v4015, 32
      %v4090 = vpop.permute.xlu0 %4089
      %4091 = vrot.lane.b32.xlu0 %v4016, 32
      %v4092 = vpop.permute.xlu0 %4091
      %4093 = vrot.lane.b32.xlu0 %v4017, 32
      %v4094 = vpop.permute.xlu0 %4093
      %4095 = vrot.lane.b32.xlu0 %v4018, 32
      %v4096 = vpop.permute.xlu0 %4095
      %4097 = vrot.lane.b32.xlu0 %v4019, 32
      %v4098 = vpop.permute.xlu0 %4097
      %4099 = vrot.lane.b32.xlu0 %v4020, 32
      %v4100 = vpop.permute.xlu0 %4099
      %4101 = vrot.lane.b32.xlu0 %v4021, 32
      %v4102 = vpop.permute.xlu0 %4101
      %4103 = vrot.lane.b32.xlu0 %v4022, 32
      %v4104 = vpop.permute.xlu0 %4103
      %4105 = vrot.lane.b32.xlu0 %v4023, 32
      %v4106 = vpop.permute.xlu0 %4105
      %4107 = vrot.lane.b32.xlu0 %v4024, 32
      %v4108 = vpop.permute.xlu0 %4107
      %4109 = vrot.lane.b32.xlu0 %v4025, 32
      %v4110 = vpop.permute.xlu0 %4109
      %4111 = vrot.lane.b32.xlu0 %v4026, 32
      %v4112 = vpop.permute.xlu0 %4111
      %4113 = vrot.lane.b32.xlu0 %v4027, 32
      %v4114 = vpop.permute.xlu0 %4113
      %4115 = vrot.lane.b32.xlu0 %v4028, 32
      %v4116 = vpop.permute.xlu0 %4115
      %4117 = vrot.lane.b32.xlu0 %v4029, 32
      %v4118 = vpop.permute.xlu0 %4117
      %4119 = vrot.lane.b32.xlu0 %v4030, 32
      %v4120 = vpop.permute.xlu0 %4119
      %4121 = vrot.lane.b32.xlu0 %v4031, 32
      %v4122 = vpop.permute.xlu0 %4121
      %4123 = vrot.lane.b32.xlu0 %v4032, 32
      %v4124 = vpop.permute.xlu0 %4123
      %4125 = vrot.lane.b32.xlu0 %v4033, 32
      %v4126 = vpop.permute.xlu0 %4125
      %4127 = vrot.lane.b32.xlu0 %v4034, 32
      %v4128 = vpop.permute.xlu0 %4127
      %4129 = vrot.lane.b32.xlu0 %v4035, 32
      %v4130 = vpop.permute.xlu0 %4129
      %4131 = vrot.lane.b32.xlu0 %v4036, 32
      %v4132 = vpop.permute.xlu0 %4131
      %4165 = vst.msk [vmem:[#allocation3 + $0x8] sm:$0xff] %vm1045, %v4070
      %4166 = vst.msk [vmem:[#allocation3 + $0x20] sm:$0xff] %vm1045, %v4072
      %4167 = vst.msk [vmem:[#allocation3 + $0x38] sm:$0xff] %vm1045, %v4074
      %4168 = vst.msk [vmem:[#allocation3 + $0x50] sm:$0xff] %vm1045, %v4076
      %4169 = vst.msk [vmem:[#allocation3 + $0x68] sm:$0xff] %vm1045, %v4078
      %4170 = vst.msk [vmem:[#allocation3 + $0x80] sm:$0xff] %vm1045, %v4080
      %4171 = vst.msk [vmem:[#allocation3 + $0x98] sm:$0xff] %vm1045, %v4082
      %4172 = vst.msk [vmem:[#allocation3 + $0xb0] sm:$0xff] %vm1045, %v4084
      %4173 = vst.msk [vmem:[#allocation3 + $0xc8] sm:$0xff] %vm1045, %v4086
      %4174 = vst.msk [vmem:[#allocation3 + $0xe0] sm:$0xff] %vm1045, %v4088
      %4175 = vst.msk [vmem:[#allocation3 + $0xf8] sm:$0xff] %vm1045, %v4090
      %4176 = vst.msk [vmem:[#allocation3 + $0x110] sm:$0xff] %vm1045, %v4092
      %4177 = vst.msk [vmem:[#allocation3 + $0x128] sm:$0xff] %vm1045, %v4094
      %4178 = vst.msk [vmem:[#allocation3 + $0x140] sm:$0xff] %vm1045, %v4096
      %4179 = vst.msk [vmem:[#allocation3 + $0x158] sm:$0xff] %vm1045, %v4098
      %4180 = vst.msk [vmem:[#allocation3 + $0x170] sm:$0xff] %vm1045, %v4100
      %4181 = vst.msk [vmem:[#allocation3 + $0x188] sm:$0xff] %vm1045, %v4102
      %4182 = vst.msk [vmem:[#allocation3 + $0x1a0] sm:$0xff] %vm1045, %v4104
      %4183 = vst.msk [vmem:[#allocation3 + $0x1b8] sm:$0xff] %vm1045, %v4106
      %4184 = vst.msk [vmem:[#allocation3 + $0x1d0] sm:$0xff] %vm1045, %v4108
      %4185 = vst.msk [vmem:[#allocation3 + $0x1e8] sm:$0xff] %vm1045, %v4110
      %4186 = vst.msk [vmem:[#allocation3 + $0x200] sm:$0xff] %vm1045, %v4112
      %4187 = vst.msk [vmem:[#allocation3 + $0x218] sm:$0xff] %vm1045, %v4114
      %4188 = vst.msk [vmem:[#allocation3 + $0x230] sm:$0xff] %vm1045, %v4116
      %4189 = vst.msk [vmem:[#allocation3 + $0x248] sm:$0xff] %vm1045, %v4118
      %4190 = vst.msk [vmem:[#allocation3 + $0x260] sm:$0xff] %vm1045, %v4120
      %4191 = vst.msk [vmem:[#allocation3 + $0x278] sm:$0xff] %vm1045, %v4122
      %4192 = vst.msk [vmem:[#allocation3 + $0x290] sm:$0xff] %vm1045, %v4124
      %4193 = vst.msk [vmem:[#allocation3 + $0x2a8] sm:$0xff] %vm1045, %v4126
      %4194 = vst.msk [vmem:[#allocation3 + $0x2c0] sm:$0xff] %vm1045, %v4128
      %4195 = vst.msk [vmem:[#allocation3 + $0x2d8] sm:$0xff] %vm1045, %v4130
      %4196 = vst.msk [vmem:[#allocation3 + $0x2f0] sm:$0xff] %vm1045, %v4132
      %v4197 = vld [vmem:[#allocation2 + $0x27] sm:$0xff]
      %v4198 = vld [vmem:[#allocation2 + $0x2f] sm:$0xff]
      %v4199 = vld [vmem:[#allocation2 + $0x37] sm:$0xff]
      %v4200 = vld [vmem:[#allocation2 + $0x3f] sm:$0xff]
      %v4201 = vld [vmem:[#allocation2 + $0x47] sm:$0xff]
      %v4202 = vld [vmem:[#allocation2 + $0x4f] sm:$0xff]
      %v4203 = vld [vmem:[#allocation2 + $0x57] sm:$0xff]
      %v4204 = vld [vmem:[#allocation2 + $0x5f] sm:$0xff]
      %v4205 = vld [vmem:[#allocation2 + $0x67] sm:$0xff]
      %v4206 = vld [vmem:[#allocation2 + $0x6f] sm:$0xff]
      %v4207 = vld [vmem:[#allocation2 + $0x77] sm:$0xff]
      %v4208 = vld [vmem:[#allocation2 + $0x7f] sm:$0xff]
      %v4209 = vld [vmem:[#allocation2 + $0x87] sm:$0xff]
      %v4210 = vld [vmem:[#allocation2 + $0x8f] sm:$0xff]
      %v4211 = vld [vmem:[#allocation2 + $0x97] sm:$0xff]
      %v4212 = vld [vmem:[#allocation2 + $0x9f] sm:$0xff]
      %v4213 = vld [vmem:[#allocation2 + $0xa7] sm:$0xff]
      %v4214 = vld [vmem:[#allocation2 + $0xaf] sm:$0xff]
      %v4215 = vld [vmem:[#allocation2 + $0xb7] sm:$0xff]
      %v4216 = vld [vmem:[#allocation2 + $0xbf] sm:$0xff]
      %v4217 = vld [vmem:[#allocation2 + $0xc7] sm:$0xff]
      %v4218 = vld [vmem:[#allocation2 + $0xcf] sm:$0xff]
      %v4219 = vld [vmem:[#allocation2 + $0xd7] sm:$0xff]
      %v4220 = vld [vmem:[#allocation2 + $0xdf] sm:$0xff]
      %v4221 = vld [vmem:[#allocation2 + $0xe7] sm:$0xff]
      %v4222 = vld [vmem:[#allocation2 + $0xef] sm:$0xff]
      %v4223 = vld [vmem:[#allocation2 + $0xf7] sm:$0xff]
      %v4224 = vld [vmem:[#allocation2 + $0xff] sm:$0xff]
      %v4225 = vld [vmem:[#allocation2 + $0x107] sm:$0xff]
      %v4226 = vld [vmem:[#allocation2 + $0x10f] sm:$0xff]
      %v4227 = vld [vmem:[#allocation2 + $0x117] sm:$0xff]
      %v4228 = vld [vmem:[#allocation2 + $0x11f] sm:$0xff]
      %v4229 = vsel %vm789, %v4197, 0.0
      %v4230 = vsel %vm790, %v4198, 0.0
      %v4231 = vsel %vm791, %v4199, 0.0
      %v4232 = vsel %vm792, %v4200, 0.0
      %v4233 = vsel %vm793, %v4201, 0.0
      %v4234 = vsel %vm794, %v4202, 0.0
      %v4235 = vsel %vm795, %v4203, 0.0
      %v4236 = vsel %vm796, %v4204, 0.0
      %v4237 = vsel %vm797, %v4205, 0.0
      %v4238 = vsel %vm798, %v4206, 0.0
      %v4239 = vsel %vm799, %v4207, 0.0
      %v4240 = vsel %vm800, %v4208, 0.0
      %v4241 = vsel %vm801, %v4209, 0.0
      %v4242 = vsel %vm802, %v4210, 0.0
      %v4243 = vsel %vm803, %v4211, 0.0
      %v4244 = vsel %vm804, %v4212, 0.0
      %v4245 = vsel %vm805, %v4213, 0.0
      %v4246 = vsel %vm806, %v4214, 0.0
      %v4247 = vsel %vm807, %v4215, 0.0
      %v4248 = vsel %vm808, %v4216, 0.0
      %v4249 = vsel %vm809, %v4217, 0.0
      %v4250 = vsel %vm810, %v4218, 0.0
      %v4251 = vsel %vm811, %v4219, 0.0
      %v4252 = vsel %vm812, %v4220, 0.0
      %v4253 = vsel %vm813, %v4221, 0.0
      %v4254 = vsel %vm814, %v4222, 0.0
      %v4255 = vsel %vm815, %v4223, 0.0
      %v4256 = vsel %vm816, %v4224, 0.0
      %v4257 = vsel %vm817, %v4225, 0.0
      %v4258 = vsel %vm818, %v4226, 0.0
      %v4259 = vsel %vm819, %v4227, 0.0
      %v4260 = vsel %vm820, %v4228, 0.0
      %4293 = vrot.lane.b32.xlu0 %v4229, 64
      %v4294 = vpop.permute.xlu0 %4293
      %4295 = vrot.lane.b32.xlu0 %v4230, 64
      %v4296 = vpop.permute.xlu0 %4295
      %4297 = vrot.lane.b32.xlu0 %v4231, 64
      %v4298 = vpop.permute.xlu0 %4297
      %4299 = vrot.lane.b32.xlu0 %v4232, 64
      %v4300 = vpop.permute.xlu0 %4299
      %4301 = vrot.lane.b32.xlu0 %v4233, 64
      %v4302 = vpop.permute.xlu0 %4301
      %4303 = vrot.lane.b32.xlu0 %v4234, 64
      %v4304 = vpop.permute.xlu0 %4303
      %4305 = vrot.lane.b32.xlu0 %v4235, 64
      %v4306 = vpop.permute.xlu0 %4305
      %4307 = vrot.lane.b32.xlu0 %v4236, 64
      %v4308 = vpop.permute.xlu0 %4307
      %4309 = vrot.lane.b32.xlu0 %v4237, 64
      %v4310 = vpop.permute.xlu0 %4309
      %4311 = vrot.lane.b32.xlu0 %v4238, 64
      %v4312 = vpop.permute.xlu0 %4311
      %4313 = vrot.lane.b32.xlu0 %v4239, 64
      %v4314 = vpop.permute.xlu0 %4313
      %4315 = vrot.lane.b32.xlu0 %v4240, 64
      %v4316 = vpop.permute.xlu0 %4315
      %4317 = vrot.lane.b32.xlu0 %v4241, 64
      %v4318 = vpop.permute.xlu0 %4317
      %4319 = vrot.lane.b32.xlu0 %v4242, 64
      %v4320 = vpop.permute.xlu0 %4319
      %4321 = vrot.lane.b32.xlu0 %v4243, 64
      %v4322 = vpop.permute.xlu0 %4321
      %4323 = vrot.lane.b32.xlu0 %v4244, 64
      %v4324 = vpop.permute.xlu0 %4323
      %4325 = vrot.lane.b32.xlu0 %v4245, 64
      %v4326 = vpop.permute.xlu0 %4325
      %4327 = vrot.lane.b32.xlu0 %v4246, 64
      %v4328 = vpop.permute.xlu0 %4327
      %4329 = vrot.lane.b32.xlu0 %v4247, 64
      %v4330 = vpop.permute.xlu0 %4329
      %4331 = vrot.lane.b32.xlu0 %v4248, 64
      %v4332 = vpop.permute.xlu0 %4331
      %4333 = vrot.lane.b32.xlu0 %v4249, 64
      %v4334 = vpop.permute.xlu0 %4333
      %4335 = vrot.lane.b32.xlu0 %v4250, 64
      %v4336 = vpop.permute.xlu0 %4335
      %4337 = vrot.lane.b32.xlu0 %v4251, 64
      %v4338 = vpop.permute.xlu0 %4337
      %4339 = vrot.lane.b32.xlu0 %v4252, 64
      %v4340 = vpop.permute.xlu0 %4339
      %4341 = vrot.lane.b32.xlu0 %v4253, 64
      %v4342 = vpop.permute.xlu0 %4341
      %4343 = vrot.lane.b32.xlu0 %v4254, 64
      %v4344 = vpop.permute.xlu0 %4343
      %4345 = vrot.lane.b32.xlu0 %v4255, 64
      %v4346 = vpop.permute.xlu0 %4345
      %4347 = vrot.lane.b32.xlu0 %v4256, 64
      %v4348 = vpop.permute.xlu0 %4347
      %4349 = vrot.lane.b32.xlu0 %v4257, 64
      %v4350 = vpop.permute.xlu0 %4349
      %4351 = vrot.lane.b32.xlu0 %v4258, 64
      %v4352 = vpop.permute.xlu0 %4351
      %4353 = vrot.lane.b32.xlu0 %v4259, 64
      %v4354 = vpop.permute.xlu0 %4353
      %4355 = vrot.lane.b32.xlu0 %v4260, 64
      %v4356 = vpop.permute.xlu0 %4355
      %4389 = vst.msk [vmem:[#allocation3 + $0x8] sm:$0xff] %vm1334, %v4294
      %4390 = vst.msk [vmem:[#allocation3 + $0x20] sm:$0xff] %vm1334, %v4296
      %4391 = vst.msk [vmem:[#allocation3 + $0x38] sm:$0xff] %vm1334, %v4298
      %4392 = vst.msk [vmem:[#allocation3 + $0x50] sm:$0xff] %vm1334, %v4300
      %4393 = vst.msk [vmem:[#allocation3 + $0x68] sm:$0xff] %vm1334, %v4302
      %4394 = vst.msk [vmem:[#allocation3 + $0x80] sm:$0xff] %vm1334, %v4304
      %4395 = vst.msk [vmem:[#allocation3 + $0x98] sm:$0xff] %vm1334, %v4306
      %4396 = vst.msk [vmem:[#allocation3 + $0xb0] sm:$0xff] %vm1334, %v4308
      %4397 = vst.msk [vmem:[#allocation3 + $0xc8] sm:$0xff] %vm1334, %v4310
      %4398 = vst.msk [vmem:[#allocation3 + $0xe0] sm:$0xff] %vm1334, %v4312
      %4399 = vst.msk [vmem:[#allocation3 + $0xf8] sm:$0xff] %vm1334, %v4314
      %4400 = vst.msk [vmem:[#allocation3 + $0x110] sm:$0xff] %vm1334, %v4316
      %4401 = vst.msk [vmem:[#allocation3 + $0x128] sm:$0xff] %vm1334, %v4318
      %4402 = vst.msk [vmem:[#allocation3 + $0x140] sm:$0xff] %vm1334, %v4320
      %4403 = vst.msk [vmem:[#allocation3 + $0x158] sm:$0xff] %vm1334, %v4322
      %4404 = vst.msk [vmem:[#allocation3 + $0x170] sm:$0xff] %vm1334, %v4324
      %4405 = vst.msk [vmem:[#allocation3 + $0x188] sm:$0xff] %vm1334, %v4326
      %4406 = vst.msk [vmem:[#allocation3 + $0x1a0] sm:$0xff] %vm1334, %v4328
      %4407 = vst.msk [vmem:[#allocation3 + $0x1b8] sm:$0xff] %vm1334, %v4330
      %4408 = vst.msk [vmem:[#allocation3 + $0x1d0] sm:$0xff] %vm1334, %v4332
      %4409 = vst.msk [vmem:[#allocation3 + $0x1e8] sm:$0xff] %vm1334, %v4334
      %4410 = vst.msk [vmem:[#allocation3 + $0x200] sm:$0xff] %vm1334, %v4336
      %4411 = vst.msk [vmem:[#allocation3 + $0x218] sm:$0xff] %vm1334, %v4338
      %4412 = vst.msk [vmem:[#allocation3 + $0x230] sm:$0xff] %vm1334, %v4340
      %4413 = vst.msk [vmem:[#allocation3 + $0x248] sm:$0xff] %vm1334, %v4342
      %4414 = vst.msk [vmem:[#allocation3 + $0x260] sm:$0xff] %vm1334, %v4344
      %4415 = vst.msk [vmem:[#allocation3 + $0x278] sm:$0xff] %vm1334, %v4346
      %4416 = vst.msk [vmem:[#allocation3 + $0x290] sm:$0xff] %vm1334, %v4348
      %4417 = vst.msk [vmem:[#allocation3 + $0x2a8] sm:$0xff] %vm1334, %v4350
      %4418 = vst.msk [vmem:[#allocation3 + $0x2c0] sm:$0xff] %vm1334, %v4352
      %4419 = vst.msk [vmem:[#allocation3 + $0x2d8] sm:$0xff] %vm1334, %v4354
      %4420 = vst.msk [vmem:[#allocation3 + $0x2f0] sm:$0xff] %vm1334, %v4356
      %v4421 = vld [vmem:[#allocation2 + $0x28] sm:$0xff]
      %v4422 = vld [vmem:[#allocation2 + $0x30] sm:$0xff]
      %v4423 = vld [vmem:[#allocation2 + $0x38] sm:$0xff]
      %v4424 = vld [vmem:[#allocation2 + $0x40] sm:$0xff]
      %v4425 = vld [vmem:[#allocation2 + $0x48] sm:$0xff]
      %v4426 = vld [vmem:[#allocation2 + $0x50] sm:$0xff]
      %v4427 = vld [vmem:[#allocation2 + $0x58] sm:$0xff]
      %v4428 = vld [vmem:[#allocation2 + $0x60] sm:$0xff]
      %v4429 = vld [vmem:[#allocation2 + $0x68] sm:$0xff]
      %v4430 = vld [vmem:[#allocation2 + $0x70] sm:$0xff]
      %v4431 = vld [vmem:[#allocation2 + $0x78] sm:$0xff]
      %v4432 = vld [vmem:[#allocation2 + $0x80] sm:$0xff]
      %v4433 = vld [vmem:[#allocation2 + $0x88] sm:$0xff]
      %v4434 = vld [vmem:[#allocation2 + $0x90] sm:$0xff]
      %v4435 = vld [vmem:[#allocation2 + $0x98] sm:$0xff]
      %v4436 = vld [vmem:[#allocation2 + $0xa0] sm:$0xff]
      %v4437 = vld [vmem:[#allocation2 + $0xa8] sm:$0xff]
      %v4438 = vld [vmem:[#allocation2 + $0xb0] sm:$0xff]
      %v4439 = vld [vmem:[#allocation2 + $0xb8] sm:$0xff]
      %v4440 = vld [vmem:[#allocation2 + $0xc0] sm:$0xff]
      %v4441 = vld [vmem:[#allocation2 + $0xc8] sm:$0xff]
      %v4442 = vld [vmem:[#allocation2 + $0xd0] sm:$0xff]
      %v4443 = vld [vmem:[#allocation2 + $0xd8] sm:$0xff]
      %v4444 = vld [vmem:[#allocation2 + $0xe0] sm:$0xff]
      %v4445 = vld [vmem:[#allocation2 + $0xe8] sm:$0xff]
      %v4446 = vld [vmem:[#allocation2 + $0xf0] sm:$0xff]
      %v4447 = vld [vmem:[#allocation2 + $0xf8] sm:$0xff]
      %v4448 = vld [vmem:[#allocation2 + $0x100] sm:$0xff]
      %v4449 = vld [vmem:[#allocation2 + $0x108] sm:$0xff]
      %v4450 = vld [vmem:[#allocation2 + $0x110] sm:$0xff]
      %v4451 = vld [vmem:[#allocation2 + $0x118] sm:$0xff]
      %v4452 = vld [vmem:[#allocation2 + $0x120] sm:$0xff]
      %4485 = vrot.lane.b32.xlu0 %v4421, 96
      %v4486 = vpop.permute.xlu0 %4485
      %4487 = vrot.lane.b32.xlu0 %v4422, 96
      %v4488 = vpop.permute.xlu0 %4487
      %4489 = vrot.lane.b32.xlu0 %v4423, 96
      %v4490 = vpop.permute.xlu0 %4489
      %4491 = vrot.lane.b32.xlu0 %v4424, 96
      %v4492 = vpop.permute.xlu0 %4491
      %4493 = vrot.lane.b32.xlu0 %v4425, 96
      %v4494 = vpop.permute.xlu0 %4493
      %4495 = vrot.lane.b32.xlu0 %v4426, 96
      %v4496 = vpop.permute.xlu0 %4495
      %4497 = vrot.lane.b32.xlu0 %v4427, 96
      %v4498 = vpop.permute.xlu0 %4497
      %4499 = vrot.lane.b32.xlu0 %v4428, 96
      %v4500 = vpop.permute.xlu0 %4499
      %4501 = vrot.lane.b32.xlu0 %v4429, 96
      %v4502 = vpop.permute.xlu0 %4501
      %4503 = vrot.lane.b32.xlu0 %v4430, 96
      %v4504 = vpop.permute.xlu0 %4503
      %4505 = vrot.lane.b32.xlu0 %v4431, 96
      %v4506 = vpop.permute.xlu0 %4505
      %4507 = vrot.lane.b32.xlu0 %v4432, 96
      %v4508 = vpop.permute.xlu0 %4507
      %4509 = vrot.lane.b32.xlu0 %v4433, 96
      %v4510 = vpop.permute.xlu0 %4509
      %4511 = vrot.lane.b32.xlu0 %v4434, 96
      %v4512 = vpop.permute.xlu0 %4511
      %4513 = vrot.lane.b32.xlu0 %v4435, 96
      %v4514 = vpop.permute.xlu0 %4513
      %4515 = vrot.lane.b32.xlu0 %v4436, 96
      %v4516 = vpop.permute.xlu0 %4515
      %4517 = vrot.lane.b32.xlu0 %v4437, 96
      %v4518 = vpop.permute.xlu0 %4517
      %4519 = vrot.lane.b32.xlu0 %v4438, 96
      %v4520 = vpop.permute.xlu0 %4519
      %4521 = vrot.lane.b32.xlu0 %v4439, 96
      %v4522 = vpop.permute.xlu0 %4521
      %4523 = vrot.lane.b32.xlu0 %v4440, 96
      %v4524 = vpop.permute.xlu0 %4523
      %4525 = vrot.lane.b32.xlu0 %v4441, 96
      %v4526 = vpop.permute.xlu0 %4525
      %4527 = vrot.lane.b32.xlu0 %v4442, 96
      %v4528 = vpop.permute.xlu0 %4527
      %4529 = vrot.lane.b32.xlu0 %v4443, 96
      %v4530 = vpop.permute.xlu0 %4529
      %4531 = vrot.lane.b32.xlu0 %v4444, 96
      %v4532 = vpop.permute.xlu0 %4531
      %4533 = vrot.lane.b32.xlu0 %v4445, 96
      %v4534 = vpop.permute.xlu0 %4533
      %4535 = vrot.lane.b32.xlu0 %v4446, 96
      %v4536 = vpop.permute.xlu0 %4535
      %4537 = vrot.lane.b32.xlu0 %v4447, 96
      %v4538 = vpop.permute.xlu0 %4537
      %4539 = vrot.lane.b32.xlu0 %v4448, 96
      %v4540 = vpop.permute.xlu0 %4539
      %4541 = vrot.lane.b32.xlu0 %v4449, 96
      %v4542 = vpop.permute.xlu0 %4541
      %4543 = vrot.lane.b32.xlu0 %v4450, 96
      %v4544 = vpop.permute.xlu0 %4543
      %4545 = vrot.lane.b32.xlu0 %v4451, 96
      %v4546 = vpop.permute.xlu0 %4545
      %4547 = vrot.lane.b32.xlu0 %v4452, 96
      %v4548 = vpop.permute.xlu0 %4547
      %4581 = vst.msk [vmem:[#allocation3 + $0x8] sm:$0xff] %vm1559, %v4486
      %4582 = vst.msk [vmem:[#allocation3 + $0x20] sm:$0xff] %vm1559, %v4488
      %4583 = vst.msk [vmem:[#allocation3 + $0x38] sm:$0xff] %vm1559, %v4490
      %4584 = vst.msk [vmem:[#allocation3 + $0x50] sm:$0xff] %vm1559, %v4492
      %4585 = vst.msk [vmem:[#allocation3 + $0x68] sm:$0xff] %vm1559, %v4494
      %4586 = vst.msk [vmem:[#allocation3 + $0x80] sm:$0xff] %vm1559, %v4496
      %4587 = vst.msk [vmem:[#allocation3 + $0x98] sm:$0xff] %vm1559, %v4498
      %4588 = vst.msk [vmem:[#allocation3 + $0xb0] sm:$0xff] %vm1559, %v4500
      %4589 = vst.msk [vmem:[#allocation3 + $0xc8] sm:$0xff] %vm1559, %v4502
      %4590 = vst.msk [vmem:[#allocation3 + $0xe0] sm:$0xff] %vm1559, %v4504
      %4591 = vst.msk [vmem:[#allocation3 + $0xf8] sm:$0xff] %vm1559, %v4506
      %4592 = vst.msk [vmem:[#allocation3 + $0x110] sm:$0xff] %vm1559, %v4508
      %4593 = vst.msk [vmem:[#allocation3 + $0x128] sm:$0xff] %vm1559, %v4510
      %4594 = vst.msk [vmem:[#allocation3 + $0x140] sm:$0xff] %vm1559, %v4512
      %4595 = vst.msk [vmem:[#allocation3 + $0x158] sm:$0xff] %vm1559, %v4514
      %4596 = vst.msk [vmem:[#allocation3 + $0x170] sm:$0xff] %vm1559, %v4516
      %4597 = vst.msk [vmem:[#allocation3 + $0x188] sm:$0xff] %vm1559, %v4518
      %4598 = vst.msk [vmem:[#allocation3 + $0x1a0] sm:$0xff] %vm1559, %v4520
      %4599 = vst.msk [vmem:[#allocation3 + $0x1b8] sm:$0xff] %vm1559, %v4522
      %4600 = vst.msk [vmem:[#allocation3 + $0x1d0] sm:$0xff] %vm1559, %v4524
      %4601 = vst.msk [vmem:[#allocation3 + $0x1e8] sm:$0xff] %vm1559, %v4526
      %4602 = vst.msk [vmem:[#allocation3 + $0x200] sm:$0xff] %vm1559, %v4528
      %4603 = vst.msk [vmem:[#allocation3 + $0x218] sm:$0xff] %vm1559, %v4530
      %4604 = vst.msk [vmem:[#allocation3 + $0x230] sm:$0xff] %vm1559, %v4532
      %4605 = vst.msk [vmem:[#allocation3 + $0x248] sm:$0xff] %vm1559, %v4534
      %4606 = vst.msk [vmem:[#allocation3 + $0x260] sm:$0xff] %vm1559, %v4536
      %4607 = vst.msk [vmem:[#allocation3 + $0x278] sm:$0xff] %vm1559, %v4538
      %4608 = vst.msk [vmem:[#allocation3 + $0x290] sm:$0xff] %vm1559, %v4540
      %4609 = vst.msk [vmem:[#allocation3 + $0x2a8] sm:$0xff] %vm1559, %v4542
      %4610 = vst.msk [vmem:[#allocation3 + $0x2c0] sm:$0xff] %vm1559, %v4544
      %4611 = vst.msk [vmem:[#allocation3 + $0x2d8] sm:$0xff] %vm1559, %v4546
      %4612 = vst.msk [vmem:[#allocation3 + $0x2f0] sm:$0xff] %vm1559, %v4548
      %v4613 = vld [vmem:[#allocation2 + $0x29] sm:$0xff]
      %v4614 = vld [vmem:[#allocation2 + $0x31] sm:$0xff]
      %v4615 = vld [vmem:[#allocation2 + $0x39] sm:$0xff]
      %v4616 = vld [vmem:[#allocation2 + $0x41] sm:$0xff]
      %v4617 = vld [vmem:[#allocation2 + $0x49] sm:$0xff]
      %v4618 = vld [vmem:[#allocation2 + $0x51] sm:$0xff]
      %v4619 = vld [vmem:[#allocation2 + $0x59] sm:$0xff]
      %v4620 = vld [vmem:[#allocation2 + $0x61] sm:$0xff]
      %v4621 = vld [vmem:[#allocation2 + $0x69] sm:$0xff]
      %v4622 = vld [vmem:[#allocation2 + $0x71] sm:$0xff]
      %v4623 = vld [vmem:[#allocation2 + $0x79] sm:$0xff]
      %v4624 = vld [vmem:[#allocation2 + $0x81] sm:$0xff]
      %v4625 = vld [vmem:[#allocation2 + $0x89] sm:$0xff]
      %v4626 = vld [vmem:[#allocation2 + $0x91] sm:$0xff]
      %v4627 = vld [vmem:[#allocation2 + $0x99] sm:$0xff]
      %v4628 = vld [vmem:[#allocation2 + $0xa1] sm:$0xff]
      %v4629 = vld [vmem:[#allocation2 + $0xa9] sm:$0xff]
      %v4630 = vld [vmem:[#allocation2 + $0xb1] sm:$0xff]
      %v4631 = vld [vmem:[#allocation2 + $0xb9] sm:$0xff]
      %v4632 = vld [vmem:[#allocation2 + $0xc1] sm:$0xff]
      %v4633 = vld [vmem:[#allocation2 + $0xc9] sm:$0xff]
      %v4634 = vld [vmem:[#allocation2 + $0xd1] sm:$0xff]
      %v4635 = vld [vmem:[#allocation2 + $0xd9] sm:$0xff]
      %v4636 = vld [vmem:[#allocation2 + $0xe1] sm:$0xff]
      %v4637 = vld [vmem:[#allocation2 + $0xe9] sm:$0xff]
      %v4638 = vld [vmem:[#allocation2 + $0xf1] sm:$0xff]
      %v4639 = vld [vmem:[#allocation2 + $0xf9] sm:$0xff]
      %v4640 = vld [vmem:[#allocation2 + $0x101] sm:$0xff]
      %v4641 = vld [vmem:[#allocation2 + $0x109] sm:$0xff]
      %v4642 = vld [vmem:[#allocation2 + $0x111] sm:$0xff]
      %v4643 = vld [vmem:[#allocation2 + $0x119] sm:$0xff]
      %v4644 = vld [vmem:[#allocation2 + $0x121] sm:$0xff]
      %v4645 = vsel %vm1142, %v4613, 0.0
      %v4646 = vsel %vm1143, %v4614, 0.0
      %v4647 = vsel %vm1144, %v4615, 0.0
      %v4648 = vsel %vm1145, %v4616, 0.0
      %v4649 = vsel %vm1146, %v4617, 0.0
      %v4650 = vsel %vm1147, %v4618, 0.0
      %v4651 = vsel %vm1148, %v4619, 0.0
      %v4652 = vsel %vm1149, %v4620, 0.0
      %v4653 = vsel %vm1150, %v4621, 0.0
      %v4654 = vsel %vm1151, %v4622, 0.0
      %v4655 = vsel %vm1152, %v4623, 0.0
      %v4656 = vsel %vm1153, %v4624, 0.0
      %v4657 = vsel %vm1154, %v4625, 0.0
      %v4658 = vsel %vm1155, %v4626, 0.0
      %v4659 = vsel %vm1156, %v4627, 0.0
      %v4660 = vsel %vm1157, %v4628, 0.0
      %v4661 = vsel %vm1158, %v4629, 0.0
      %v4662 = vsel %vm1159, %v4630, 0.0
      %v4663 = vsel %vm1160, %v4631, 0.0
      %v4664 = vsel %vm1161, %v4632, 0.0
      %v4665 = vsel %vm1162, %v4633, 0.0
      %v4666 = vsel %vm1163, %v4634, 0.0
      %v4667 = vsel %vm1164, %v4635, 0.0
      %v4668 = vsel %vm1165, %v4636, 0.0
      %v4669 = vsel %vm1166, %v4637, 0.0
      %v4670 = vsel %vm1167, %v4638, 0.0
      %v4671 = vsel %vm1168, %v4639, 0.0
      %v4672 = vsel %vm1169, %v4640, 0.0
      %v4673 = vsel %vm1170, %v4641, 0.0
      %v4674 = vsel %vm1171, %v4642, 0.0
      %v4675 = vsel %vm1172, %v4643, 0.0
      %v4676 = vsel %vm1173, %v4644, 0.0
      %4677 = vst.msk [vmem:[#allocation3 + $0x10] sm:$0xff] %vm365, %v4645
      %4678 = vst.msk [vmem:[#allocation3 + $0x28] sm:$0xff] %vm365, %v4646
      %4679 = vst.msk [vmem:[#allocation3 + $0x40] sm:$0xff] %vm365, %v4647
      %4680 = vst.msk [vmem:[#allocation3 + $0x58] sm:$0xff] %vm365, %v4648
      %4681 = vst.msk [vmem:[#allocation3 + $0x70] sm:$0xff] %vm365, %v4649
      %4682 = vst.msk [vmem:[#allocation3 + $0x88] sm:$0xff] %vm365, %v4650
      %4683 = vst.msk [vmem:[#allocation3 + $0xa0] sm:$0xff] %vm365, %v4651
      %4684 = vst.msk [vmem:[#allocation3 + $0xb8] sm:$0xff] %vm365, %v4652
      %4685 = vst.msk [vmem:[#allocation3 + $0xd0] sm:$0xff] %vm365, %v4653
      %4686 = vst.msk [vmem:[#allocation3 + $0xe8] sm:$0xff] %vm365, %v4654
      %4687 = vst.msk [vmem:[#allocation3 + $0x100] sm:$0xff] %vm365, %v4655
      %4688 = vst.msk [vmem:[#allocation3 + $0x118] sm:$0xff] %vm365, %v4656
      %4689 = vst.msk [vmem:[#allocation3 + $0x130] sm:$0xff] %vm365, %v4657
      %4690 = vst.msk [vmem:[#allocation3 + $0x148] sm:$0xff] %vm365, %v4658
      %4691 = vst.msk [vmem:[#allocation3 + $0x160] sm:$0xff] %vm365, %v4659
      %4692 = vst.msk [vmem:[#allocation3 + $0x178] sm:$0xff] %vm365, %v4660
      %4693 = vst.msk [vmem:[#allocation3 + $0x190] sm:$0xff] %vm365, %v4661
      %4694 = vst.msk [vmem:[#allocation3 + $0x1a8] sm:$0xff] %vm365, %v4662
      %4695 = vst.msk [vmem:[#allocation3 + $0x1c0] sm:$0xff] %vm365, %v4663
      %4696 = vst.msk [vmem:[#allocation3 + $0x1d8] sm:$0xff] %vm365, %v4664
      %4697 = vst.msk [vmem:[#allocation3 + $0x1f0] sm:$0xff] %vm365, %v4665
      %4698 = vst.msk [vmem:[#allocation3 + $0x208] sm:$0xff] %vm365, %v4666
      %4699 = vst.msk [vmem:[#allocation3 + $0x220] sm:$0xff] %vm365, %v4667
      %4700 = vst.msk [vmem:[#allocation3 + $0x238] sm:$0xff] %vm365, %v4668
      %4701 = vst.msk [vmem:[#allocation3 + $0x250] sm:$0xff] %vm365, %v4669
      %4702 = vst.msk [vmem:[#allocation3 + $0x268] sm:$0xff] %vm365, %v4670
      %4703 = vst.msk [vmem:[#allocation3 + $0x280] sm:$0xff] %vm365, %v4671
      %4704 = vst.msk [vmem:[#allocation3 + $0x298] sm:$0xff] %vm365, %v4672
      %4705 = vst.msk [vmem:[#allocation3 + $0x2b0] sm:$0xff] %vm365, %v4673
      %4706 = vst.msk [vmem:[#allocation3 + $0x2c8] sm:$0xff] %vm365, %v4674
      %4707 = vst.msk [vmem:[#allocation3 + $0x2e0] sm:$0xff] %vm365, %v4675
      %4708 = vst.msk [vmem:[#allocation3 + $0x2f8] sm:$0xff] %vm365, %v4676
      %v4709 = vld [vmem:[#allocation3] sm:$0xff]
      %v4710 = vld [vmem:[#allocation3 + $0x8] sm:$0xff]
      %v4711 = vld [vmem:[#allocation3 + $0x10] sm:$0xff]
      %v4712 = vld [vmem:[#allocation3 + $0x18] sm:$0xff]
      %v4713 = vld [vmem:[#allocation3 + $0x20] sm:$0xff]
      %v4714 = vld [vmem:[#allocation3 + $0x28] sm:$0xff]
      %v4715 = vld [vmem:[#allocation3 + $0x30] sm:$0xff]
      %v4716 = vld [vmem:[#allocation3 + $0x38] sm:$0xff]
      %v4717 = vld [vmem:[#allocation3 + $0x40] sm:$0xff]
      %v4718 = vld [vmem:[#allocation3 + $0x48] sm:$0xff]
      %v4719 = vld [vmem:[#allocation3 + $0x50] sm:$0xff]
      %v4720 = vld [vmem:[#allocation3 + $0x58] sm:$0xff]
      %v4721 = vld [vmem:[#allocation3 + $0x60] sm:$0xff]
      %v4722 = vld [vmem:[#allocation3 + $0x68] sm:$0xff]
      %v4723 = vld [vmem:[#allocation3 + $0x70] sm:$0xff]
      %v4724 = vld [vmem:[#allocation3 + $0x78] sm:$0xff]
      %v4725 = vld [vmem:[#allocation3 + $0x80] sm:$0xff]
      %v4726 = vld [vmem:[#allocation3 + $0x88] sm:$0xff]
      %v4727 = vld [vmem:[#allocation3 + $0x90] sm:$0xff]
      %v4728 = vld [vmem:[#allocation3 + $0x98] sm:$0xff]
      %v4729 = vld [vmem:[#allocation3 + $0xa0] sm:$0xff]
      %v4730 = vld [vmem:[#allocation3 + $0xa8] sm:$0xff]
      %v4731 = vld [vmem:[#allocation3 + $0xb0] sm:$0xff]
      %v4732 = vld [vmem:[#allocation3 + $0xb8] sm:$0xff]
      %v4733 = vld [vmem:[#allocation3 + $0xc0] sm:$0xff]
      %v4734 = vld [vmem:[#allocation3 + $0xc8] sm:$0xff]
      %v4735 = vld [vmem:[#allocation3 + $0xd0] sm:$0xff]
      %v4736 = vld [vmem:[#allocation3 + $0xd8] sm:$0xff]
      %v4737 = vld [vmem:[#allocation3 + $0xe0] sm:$0xff]
      %v4738 = vld [vmem:[#allocation3 + $0xe8] sm:$0xff]
      %v4739 = vld [vmem:[#allocation3 + $0xf0] sm:$0xff]
      %v4740 = vld [vmem:[#allocation3 + $0xf8] sm:$0xff]
      %v4741 = vld [vmem:[#allocation3 + $0x100] sm:$0xff]
      %v4742 = vld [vmem:[#allocation3 + $0x108] sm:$0xff]
      %v4743 = vld [vmem:[#allocation3 + $0x110] sm:$0xff]
      %v4744 = vld [vmem:[#allocation3 + $0x118] sm:$0xff]
      %v4745 = vld [vmem:[#allocation3 + $0x120] sm:$0xff]
      %v4746 = vld [vmem:[#allocation3 + $0x128] sm:$0xff]
      %v4747 = vld [vmem:[#allocation3 + $0x130] sm:$0xff]
      %v4748 = vld [vmem:[#allocation3 + $0x138] sm:$0xff]
      %v4749 = vld [vmem:[#allocation3 + $0x140] sm:$0xff]
      %v4750 = vld [vmem:[#allocation3 + $0x148] sm:$0xff]
      %v4751 = vld [vmem:[#allocation3 + $0x150] sm:$0xff]
      %v4752 = vld [vmem:[#allocation3 + $0x158] sm:$0xff]
      %v4753 = vld [vmem:[#allocation3 + $0x160] sm:$0xff]
      %v4754 = vld [vmem:[#allocation3 + $0x168] sm:$0xff]
      %v4755 = vld [vmem:[#allocation3 + $0x170] sm:$0xff]
      %v4756 = vld [vmem:[#allocation3 + $0x178] sm:$0xff]
      %v4757 = vld [vmem:[#allocation3 + $0x180] sm:$0xff]
      %v4758 = vld [vmem:[#allocation3 + $0x188] sm:$0xff]
      %v4759 = vld [vmem:[#allocation3 + $0x190] sm:$0xff]
      %v4760 = vld [vmem:[#allocation3 + $0x198] sm:$0xff]
      %v4761 = vld [vmem:[#allocation3 + $0x1a0] sm:$0xff]
      %v4762 = vld [vmem:[#allocation3 + $0x1a8] sm:$0xff]
      %v4763 = vld [vmem:[#allocation3 + $0x1b0] sm:$0xff]
      %v4764 = vld [vmem:[#allocation3 + $0x1b8] sm:$0xff]
      %v4765 = vld [vmem:[#allocation3 + $0x1c0] sm:$0xff]
      %v4766 = vld [vmem:[#allocation3 + $0x1c8] sm:$0xff]
      %v4767 = vld [vmem:[#allocation3 + $0x1d0] sm:$0xff]
      %v4768 = vld [vmem:[#allocation3 + $0x1d8] sm:$0xff]
      %v4769 = vld [vmem:[#allocation3 + $0x1e0] sm:$0xff]
      %v4770 = vld [vmem:[#allocation3 + $0x1e8] sm:$0xff]
      %v4771 = vld [vmem:[#allocation3 + $0x1f0] sm:$0xff]
      %v4772 = vld [vmem:[#allocation3 + $0x1f8] sm:$0xff]
      %v4773 = vld [vmem:[#allocation3 + $0x200] sm:$0xff]
      %v4774 = vld [vmem:[#allocation3 + $0x208] sm:$0xff]
      %v4775 = vld [vmem:[#allocation3 + $0x210] sm:$0xff]
      %v4776 = vld [vmem:[#allocation3 + $0x218] sm:$0xff]
      %v4777 = vld [vmem:[#allocation3 + $0x220] sm:$0xff]
      %v4778 = vld [vmem:[#allocation3 + $0x228] sm:$0xff]
      %v4779 = vld [vmem:[#allocation3 + $0x230] sm:$0xff]
      %v4780 = vld [vmem:[#allocation3 + $0x238] sm:$0xff]
      %v4781 = vld [vmem:[#allocation3 + $0x240] sm:$0xff]
      %v4782 = vld [vmem:[#allocation3 + $0x248] sm:$0xff]
      %v4783 = vld [vmem:[#allocation3 + $0x250] sm:$0xff]
      %v4784 = vld [vmem:[#allocation3 + $0x258] sm:$0xff]
      %v4785 = vld [vmem:[#allocation3 + $0x260] sm:$0xff]
      %v4786 = vld [vmem:[#allocation3 + $0x268] sm:$0xff]
      %v4787 = vld [vmem:[#allocation3 + $0x270] sm:$0xff]
      %v4788 = vld [vmem:[#allocation3 + $0x278] sm:$0xff]
      %v4789 = vld [vmem:[#allocation3 + $0x280] sm:$0xff]
      %v4790 = vld [vmem:[#allocation3 + $0x288] sm:$0xff]
      %v4791 = vld [vmem:[#allocation3 + $0x290] sm:$0xff]
      %v4792 = vld [vmem:[#allocation3 + $0x298] sm:$0xff]
      %v4793 = vld [vmem:[#allocation3 + $0x2a0] sm:$0xff]
      %v4794 = vld [vmem:[#allocation3 + $0x2a8] sm:$0xff]
      %v4795 = vld [vmem:[#allocation3 + $0x2b0] sm:$0xff]
      %v4796 = vld [vmem:[#allocation3 + $0x2b8] sm:$0xff]
      %v4797 = vld [vmem:[#allocation3 + $0x2c0] sm:$0xff]
      %v4798 = vld [vmem:[#allocation3 + $0x2c8] sm:$0xff]
      %v4799 = vld [vmem:[#allocation3 + $0x2d0] sm:$0xff]
      %v4800 = vld [vmem:[#allocation3 + $0x2d8] sm:$0xff]
      %v4801 = vld [vmem:[#allocation3 + $0x2e0] sm:$0xff]
      %v4802 = vld [vmem:[#allocation3 + $0x2e8] sm:$0xff]
      %v4803 = vld [vmem:[#allocation3 + $0x2f0] sm:$0xff]
      %v4804 = vld [vmem:[#allocation3 + $0x2f8] sm:$0xff]
      %v4805 = vld [vmem:[%s3] sm:$0xff]
      %v4806 = vld [vmem:[%s3 + $0x8] sm:$0xff]
      %v4807 = vld [vmem:[%s3 + $0x10] sm:$0xff]
      %v4808 = vld [vmem:[%s3 + $0x18] sm:$0xff]
      %v4809 = vld [vmem:[%s3 + $0x20] sm:$0xff]
      %v4810 = vld [vmem:[%s3 + $0x28] sm:$0xff]
      %v4811 = vld [vmem:[%s3 + $0x30] sm:$0xff]
      %v4812 = vld [vmem:[%s3 + $0x38] sm:$0xff]
      %v4813 = vld [vmem:[%s3 + $0x40] sm:$0xff]
      %v4814 = vld [vmem:[%s3 + $0x48] sm:$0xff]
      %v4815 = vld [vmem:[%s3 + $0x50] sm:$0xff]
      %v4816 = vld [vmem:[%s3 + $0x58] sm:$0xff]
      %v4817 = vld [vmem:[%s3 + $0x60] sm:$0xff]
      %v4818 = vld [vmem:[%s3 + $0x68] sm:$0xff]
      %v4819 = vld [vmem:[%s3 + $0x70] sm:$0xff]
      %v4820 = vld [vmem:[%s3 + $0x78] sm:$0xff]
      %v4821 = vld [vmem:[%s3 + $0x80] sm:$0xff]
      %v4822 = vld [vmem:[%s3 + $0x88] sm:$0xff]
      %v4823 = vld [vmem:[%s3 + $0x90] sm:$0xff]
      %v4824 = vld [vmem:[%s3 + $0x98] sm:$0xff]
      %v4825 = vld [vmem:[%s3 + $0xa0] sm:$0xff]
      %v4826 = vld [vmem:[%s3 + $0xa8] sm:$0xff]
      %v4827 = vld [vmem:[%s3 + $0xb0] sm:$0xff]
      %v4828 = vld [vmem:[%s3 + $0xb8] sm:$0xff]
      %v4829 = vld [vmem:[%s3 + $0xc0] sm:$0xff]
      %v4830 = vld [vmem:[%s3 + $0xc8] sm:$0xff]
      %v4831 = vld [vmem:[%s3 + $0xd0] sm:$0xff]
      %v4832 = vld [vmem:[%s3 + $0xd8] sm:$0xff]
      %v4833 = vld [vmem:[%s3 + $0xe0] sm:$0xff]
      %v4834 = vld [vmem:[%s3 + $0xe8] sm:$0xff]
      %v4835 = vld [vmem:[%s3 + $0xf0] sm:$0xff]
      %v4836 = vld [vmem:[%s3 + $0xf8] sm:$0xff]
      %v4837 = vld [vmem:[%s3 + $0x100] sm:$0xff]
      %v4838 = vld [vmem:[%s3 + $0x108] sm:$0xff]
      %v4839 = vld [vmem:[%s3 + $0x110] sm:$0xff]
      %v4840 = vld [vmem:[%s3 + $0x118] sm:$0xff]
      %v4841 = vld [vmem:[%s4] sm:$0x1]
      %v4843 = vlaneseq
      %v4844 = vshrl.u32 %v4843, 7
      %v4845 = vsub.s32 0, %v4844
      %v4846 = vrot.slane %v4841, %v4845
      %v4849 = vsel %vm365, %v4711, 0
      %v4852 = vsel %vm365, %v4714, 0
      %v4855 = vsel %vm365, %v4717, 0
      %v4858 = vsel %vm365, %v4720, 0
      %v4861 = vsel %vm365, %v4723, 0
      %v4864 = vsel %vm365, %v4726, 0
      %v4867 = vsel %vm365, %v4729, 0
      %v4870 = vsel %vm365, %v4732, 0
      %v4873 = vsel %vm365, %v4735, 0
      %v4876 = vsel %vm365, %v4738, 0
      %v4879 = vsel %vm365, %v4741, 0
      %v4882 = vsel %vm365, %v4744, 0
      %v4885 = vsel %vm365, %v4747, 0
      %v4888 = vsel %vm365, %v4750, 0
      %v4891 = vsel %vm365, %v4753, 0
      %v4894 = vsel %vm365, %v4756, 0
      %v4897 = vsel %vm365, %v4759, 0
      %v4900 = vsel %vm365, %v4762, 0
      %v4903 = vsel %vm365, %v4765, 0
      %v4906 = vsel %vm365, %v4768, 0
      %v4909 = vsel %vm365, %v4771, 0
      %v4912 = vsel %vm365, %v4774, 0
      %v4915 = vsel %vm365, %v4777, 0
      %v4918 = vsel %vm365, %v4780, 0
      %v4921 = vsel %vm365, %v4783, 0
      %v4924 = vsel %vm365, %v4786, 0
      %v4927 = vsel %vm365, %v4789, 0
      %v4930 = vsel %vm365, %v4792, 0
      %v4933 = vsel %vm365, %v4795, 0
      %v4936 = vsel %vm365, %v4798, 0
      %v4939 = vsel %vm365, %v4801, 0
      %v4942 = vsel %vm365, %v4804, 0
      %4944 = vmatprep.subr.mxu0 0.0
      %4945 = vmatpush1.msra.mxu0 %v4820
      %4946 = vmatprep.subr.mxu0 0.0
      %4947 = vmatpush1.msra.mxu0 %v4819
      %4948 = vmatprep.subr.mxu0 0.0
      %4949 = vmatpush1.msra.mxu0 %v4818
      %4950 = vmatprep.subr.mxu0 0.0
      %4951 = vmatpush1.msra.mxu0 %v4817
      %4952 = vmatprep.subr.mxu0 0.0
      %4953 = vmatpush1.msra.mxu0 %v4816
      %4954 = vmatprep.subr.mxu0 0.0
      %4955 = vmatpush1.msra.mxu0 %v4815
      %4956 = vmatprep.subr.mxu0 0.0
      %4957 = vmatpush1.msra.mxu0 %v4814
      %4958 = vmatprep.subr.mxu0 0.0
      %4959 = vmatpush1.msra.mxu0 %v4813
      %4960 = vmatprep.subr.mxu0 0.0
      %4961 = vmatpush1.msra.mxu0 %v4812
      %4962 = vmatprep.subr.mxu0 0.0
      %4963 = vmatpush1.msra.mxu0 %v4811
      %4964 = vmatprep.subr.mxu0 0.0
      %4965 = vmatpush1.msra.mxu0 %v4810
      %4966 = vmatprep.subr.mxu0 0.0
      %4967 = vmatpush1.msra.mxu0 %v4809
      %4968 = vmatprep.subr.mxu0 0.0
      %4969 = vmatpush1.msra.mxu0 %v4808
      %4970 = vmatprep.subr.mxu0 0.0
      %4971 = vmatpush1.msra.mxu0 %v4807
      %4972 = vmatprep.subr.mxu0 0.0
      %4973 = vmatpush1.msra.mxu0 %v4806
      %4974 = vmatprep.subr.mxu0 0.0
      %4975 = vmatpush1.msra.mxu0 %v4805
      %4976 = vmatprep.subr.mxu0 0.0
      %4977 = vmatpush2.msra.mxu0 %v4836
      %4978 = vmatprep.subr.mxu0 0.0
      %4979 = vmatpush2.msra.mxu0 %v4835
      %4980 = vmatprep.subr.mxu0 0.0
      %4981 = vmatpush2.msra.mxu0 %v4834
      %4982 = vmatprep.subr.mxu0 0.0
      %4983 = vmatpush2.msra.mxu0 %v4833
      %4984 = vmatprep.subr.mxu0 0.0
      %4985 = vmatpush2.msra.mxu0 %v4832
      %4986 = vmatprep.subr.mxu0 0.0
      %4987 = vmatpush2.msra.mxu0 %v4831
      %4988 = vmatprep.subr.mxu0 0.0
      %4989 = vmatpush2.msra.mxu0 %v4830
      %4990 = vmatprep.subr.mxu0 0.0
      %4991 = vmatpush2.msra.mxu0 %v4829
      %4992 = vmatprep.subr.mxu0 0.0
      %4993 = vmatpush2.msra.mxu0 %v4828
      %4994 = vmatprep.subr.mxu0 0.0
      %4995 = vmatpush2.msra.mxu0 %v4827
      %4996 = vmatprep.subr.mxu0 0.0
      %4997 = vmatpush2.msra.mxu0 %v4826
      %4998 = vmatprep.subr.mxu0 0.0
      %4999 = vmatpush2.msra.mxu0 %v4825
      %5000 = vmatprep.subr.mxu0 0.0
      %5001 = vmatpush2.msra.mxu0 %v4824
      %5002 = vmatprep.subr.mxu0 0.0
      %5003 = vmatpush2.msra.mxu0 %v4823
      %5004 = vmatprep.subr.mxu0 0.0
      %5005 = vmatpush2.msra.mxu0 %v4822
      %5006 = vmatprep.subr.mxu0 0.0
      %5007 = vmatpush2.msra.mxu0 %v4821
      %5008 = vmatprep.mubr.f32.mxu0 %v4710
      %5009 = vmatmul.mubr.f32.gmra.mxu0 %v4709
      %v5010 = vpop.f32.mrf.mxu0
      %v5011 = vadd.f32 %v4846, %v5010
      %v5012 = vpop.f32.mrf.mxu0
      %5013 = vmatprep.mubr.f32.mxu0 %v4713
      %5014 = vmatmul.mubr.f32.gmra.mxu0 %v4712
      %v5015 = vpop.f32.mrf.mxu0
      %v5016 = vadd.f32 %v4846, %v5015
      %v5017 = vpop.f32.mrf.mxu0
      %5018 = vmatprep.mubr.f32.mxu0 %v4716
      %5019 = vmatmul.mubr.f32.gmra.mxu0 %v4715
      %v5020 = vpop.f32.mrf.mxu0
      %v5021 = vadd.f32 %v4846, %v5020
      %v5022 = vpop.f32.mrf.mxu0
      %5023 = vmatprep.mubr.f32.mxu0 %v4719
      %5024 = vmatmul.mubr.f32.gmra.mxu0 %v4718
      %v5025 = vpop.f32.mrf.mxu0
      %v5026 = vadd.f32 %v4846, %v5025
      %v5027 = vpop.f32.mrf.mxu0
      %5028 = vmatprep.mubr.f32.mxu0 %v4722
      %5029 = vmatmul.mubr.f32.gmra.mxu0 %v4721
      %v5030 = vpop.f32.mrf.mxu0
      %v5031 = vadd.f32 %v4846, %v5030
      %v5032 = vpop.f32.mrf.mxu0
      %5033 = vmatprep.mubr.f32.mxu0 %v4725
      %5034 = vmatmul.mubr.f32.gmra.mxu0 %v4724
      %v5035 = vpop.f32.mrf.mxu0
      %v5036 = vadd.f32 %v4846, %v5035
      %v5037 = vpop.f32.mrf.mxu0
      %5038 = vmatprep.mubr.f32.mxu0 %v4728
      %5039 = vmatmul.mubr.f32.gmra.mxu0 %v4727
      %v5040 = vpop.f32.mrf.mxu0
      %v5041 = vadd.f32 %v4846, %v5040
      %v5042 = vpop.f32.mrf.mxu0
      %5043 = vmatprep.mubr.f32.mxu0 %v4731
      %5044 = vmatmul.mubr.f32.gmra.mxu0 %v4730
      %v5045 = vpop.f32.mrf.mxu0
      %v5046 = vadd.f32 %v4846, %v5045
      %v5047 = vpop.f32.mrf.mxu0
      %5048 = vmatprep.mubr.f32.mxu0 %v4734
      %5049 = vmatmul.mubr.f32.gmra.mxu0 %v4733
      %v5050 = vpop.f32.mrf.mxu0
      %v5051 = vadd.f32 %v4846, %v5050
      %v5052 = vpop.f32.mrf.mxu0
      %5053 = vmatprep.mubr.f32.mxu0 %v4737
      %5054 = vmatmul.mubr.f32.gmra.mxu0 %v4736
      %v5055 = vpop.f32.mrf.mxu0
      %v5056 = vadd.f32 %v4846, %v5055
      %v5057 = vpop.f32.mrf.mxu0
      %5058 = vmatprep.mubr.f32.mxu0 %v4740
      %5059 = vmatmul.mubr.f32.gmra.mxu0 %v4739
      %v5060 = vpop.f32.mrf.mxu0
      %v5061 = vadd.f32 %v4846, %v5060
      %v5062 = vpop.f32.mrf.mxu0
      %5063 = vmatprep.mubr.f32.mxu0 %v4743
      %5064 = vmatmul.mubr.f32.gmra.mxu0 %v4742
      %v5065 = vpop.f32.mrf.mxu0
      %v5066 = vadd.f32 %v4846, %v5065
      %v5067 = vpop.f32.mrf.mxu0
      %5068 = vmatprep.mubr.f32.mxu0 %v4746
      %5069 = vmatmul.mubr.f32.gmra.mxu0 %v4745
      %v5070 = vpop.f32.mrf.mxu0
      %v5071 = vadd.f32 %v4846, %v5070
      %v5072 = vpop.f32.mrf.mxu0
      %5073 = vmatprep.mubr.f32.mxu0 %v4749
      %5074 = vmatmul.mubr.f32.gmra.mxu0 %v4748
      %v5075 = vpop.f32.mrf.mxu0
      %v5076 = vadd.f32 %v4846, %v5075
      %v5077 = vpop.f32.mrf.mxu0
      %5078 = vmatprep.mubr.f32.mxu0 %v4752
      %5079 = vmatmul.mubr.f32.gmra.mxu0 %v4751
      %v5080 = vpop.f32.mrf.mxu0
      %v5081 = vadd.f32 %v4846, %v5080
      %v5082 = vpop.f32.mrf.mxu0
      %5083 = vmatprep.mubr.f32.mxu0 %v4755
      %5084 = vmatmul.mubr.f32.gmra.mxu0 %v4754
      %v5085 = vpop.f32.mrf.mxu0
      %v5086 = vadd.f32 %v4846, %v5085
      %v5087 = vpop.f32.mrf.mxu0
      %5088 = vmatprep.mubr.f32.mxu0 %v4758
      %5089 = vmatmul.mubr.f32.gmra.mxu0 %v4757
      %v5090 = vpop.f32.mrf.mxu0
      %v5091 = vadd.f32 %v4846, %v5090
      %v5092 = vpop.f32.mrf.mxu0
      %5093 = vmatprep.mubr.f32.mxu0 %v4761
      %5094 = vmatmul.mubr.f32.gmra.mxu0 %v4760
      %v5095 = vpop.f32.mrf.mxu0
      %v5096 = vadd.f32 %v4846, %v5095
      %v5097 = vpop.f32.mrf.mxu0
      %5098 = vmatprep.mubr.f32.mxu0 %v4764
      %5099 = vmatmul.mubr.f32.gmra.mxu0 %v4763
      %v5100 = vpop.f32.mrf.mxu0
      %v5101 = vadd.f32 %v4846, %v5100
      %v5102 = vpop.f32.mrf.mxu0
      %5103 = vmatprep.mubr.f32.mxu0 %v4767
      %5104 = vmatmul.mubr.f32.gmra.mxu0 %v4766
      %v5105 = vpop.f32.mrf.mxu0
      %v5106 = vadd.f32 %v4846, %v5105
      %v5107 = vpop.f32.mrf.mxu0
      %5108 = vmatprep.mubr.f32.mxu0 %v4770
      %5109 = vmatmul.mubr.f32.gmra.mxu0 %v4769
      %v5110 = vpop.f32.mrf.mxu0
      %v5111 = vadd.f32 %v4846, %v5110
      %v5112 = vpop.f32.mrf.mxu0
      %5113 = vmatprep.mubr.f32.mxu0 %v4773
      %5114 = vmatmul.mubr.f32.gmra.mxu0 %v4772
      %v5115 = vpop.f32.mrf.mxu0
      %v5116 = vadd.f32 %v4846, %v5115
      %v5117 = vpop.f32.mrf.mxu0
      %5118 = vmatprep.mubr.f32.mxu0 %v4776
      %5119 = vmatmul.mubr.f32.gmra.mxu0 %v4775
      %v5120 = vpop.f32.mrf.mxu0
      %v5121 = vadd.f32 %v4846, %v5120
      %v5122 = vpop.f32.mrf.mxu0
      %5123 = vmatprep.mubr.f32.mxu0 %v4779
      %5124 = vmatmul.mubr.f32.gmra.mxu0 %v4778
      %v5125 = vpop.f32.mrf.mxu0
      %v5126 = vadd.f32 %v4846, %v5125
      %v5127 = vpop.f32.mrf.mxu0
      %5128 = vmatprep.mubr.f32.mxu0 %v4782
      %5129 = vmatmul.mubr.f32.gmra.mxu0 %v4781
      %v5130 = vpop.f32.mrf.mxu0
      %v5131 = vadd.f32 %v4846, %v5130
      %v5132 = vpop.f32.mrf.mxu0
      %5133 = vmatprep.mubr.f32.mxu0 %v4785
      %5134 = vmatmul.mubr.f32.gmra.mxu0 %v4784
      %v5135 = vpop.f32.mrf.mxu0
      %v5136 = vadd.f32 %v4846, %v5135
      %v5137 = vpop.f32.mrf.mxu0
      %5138 = vmatprep.mubr.f32.mxu0 %v4788
      %5139 = vmatmul.mubr.f32.gmra.mxu0 %v4787
      %v5140 = vpop.f32.mrf.mxu0
      %v5141 = vadd.f32 %v4846, %v5140
      %v5142 = vpop.f32.mrf.mxu0
      %5143 = vmatprep.mubr.f32.mxu0 %v4791
      %5144 = vmatmul.mubr.f32.gmra.mxu0 %v4790
      %v5145 = vpop.f32.mrf.mxu0
      %v5146 = vadd.f32 %v4846, %v5145
      %v5147 = vpop.f32.mrf.mxu0
      %5148 = vmatprep.mubr.f32.mxu0 %v4794
      %5149 = vmatmul.mubr.f32.gmra.mxu0 %v4793
      %v5150 = vpop.f32.mrf.mxu0
      %v5151 = vadd.f32 %v4846, %v5150
      %v5152 = vpop.f32.mrf.mxu0
      %5153 = vmatprep.mubr.f32.mxu0 %v4797
      %5154 = vmatmul.mubr.f32.gmra.mxu0 %v4796
      %v5155 = vpop.f32.mrf.mxu0
      %v5156 = vadd.f32 %v4846, %v5155
      %v5157 = vpop.f32.mrf.mxu0
      %5158 = vmatprep.mubr.f32.mxu0 %v4800
      %5159 = vmatmul.mubr.f32.gmra.mxu0 %v4799
      %v5160 = vpop.f32.mrf.mxu0
      %v5161 = vadd.f32 %v4846, %v5160
      %v5162 = vpop.f32.mrf.mxu0
      %5163 = vmatprep.mubr.f32.mxu0 %v4803
      %5164 = vmatmul.mubr.f32.gmra.mxu0 %v4802
      %v5165 = vpop.f32.mrf.mxu0
      %v5166 = vadd.f32 %v4846, %v5165
      %v5167 = vpop.f32.mrf.mxu0
      %5168 = vdwg.mxu0
      %5169 = vmatprep.subr.mxu0 0.0
      %5170 = vmatpush1.msra.mxu0 0.0
      %5171 = vmatprep.subr.mxu0 0.0
      %5172 = vmatpush1.msra.mxu0 0.0
      %5173 = vmatprep.subr.mxu0 0.0
      %5174 = vmatpush1.msra.mxu0 0.0
      %5175 = vmatprep.subr.mxu0 0.0
      %5176 = vmatpush1.msra.mxu0 0.0
      %5177 = vmatprep.subr.mxu0 0.0
      %5178 = vmatpush1.msra.mxu0 0.0
      %5179 = vmatprep.subr.mxu0 0.0
      %5180 = vmatpush1.msra.mxu0 0.0
      %5181 = vmatprep.subr.mxu0 0.0
      %5182 = vmatpush1.msra.mxu0 0.0
      %5183 = vmatprep.subr.mxu0 0.0
      %5184 = vmatpush1.msra.mxu0 0.0
      %5185 = vmatprep.subr.mxu0 0.0
      %5186 = vmatpush1.msra.mxu0 0.0
      %5187 = vmatprep.subr.mxu0 0.0
      %5188 = vmatpush1.msra.mxu0 0.0
      %5189 = vmatprep.subr.mxu0 0.0
      %5190 = vmatpush1.msra.mxu0 0.0
      %5191 = vmatprep.subr.mxu0 0.0
      %5192 = vmatpush1.msra.mxu0 0.0
      %5193 = vmatprep.subr.mxu0 0.0
      %5194 = vmatpush1.msra.mxu0 %v4840
      %5195 = vmatprep.subr.mxu0 0.0
      %5196 = vmatpush1.msra.mxu0 %v4839
      %5197 = vmatprep.subr.mxu0 0.0
      %5198 = vmatpush1.msra.mxu0 %v4838
      %5199 = vmatprep.subr.mxu0 0.0
      %5200 = vmatpush1.msra.mxu0 %v4837
      %5201 = vmatprep.subr.mxu0 0.0
      %5202 = vmatpush2.msra.mxu0 0.0
      %5203 = vmatprep.subr.mxu0 0.0
      %5204 = vmatpush2.msra.mxu0 0.0
      %5205 = vmatprep.subr.mxu0 0.0
      %5206 = vmatpush2.msra.mxu0 0.0
      %5207 = vmatprep.subr.mxu0 0.0
      %5208 = vmatpush2.msra.mxu0 0.0
      %5209 = vmatprep.subr.mxu0 0.0
      %5210 = vmatpush2.msra.mxu0 0.0
      %5211 = vmatprep.subr.mxu0 0.0
      %5212 = vmatpush2.msra.mxu0 0.0
      %5213 = vmatprep.subr.mxu0 0.0
      %5214 = vmatpush2.msra.mxu0 0.0
      %5215 = vmatprep.subr.mxu0 0.0
      %5216 = vmatpush2.msra.mxu0 0.0
      %5217 = vmatprep.subr.mxu0 0.0
      %5218 = vmatpush2.msra.mxu0 0.0
      %5219 = vmatprep.subr.mxu0 0.0
      %5220 = vmatpush2.msra.mxu0 0.0
      %5221 = vmatprep.subr.mxu0 0.0
      %5222 = vmatpush2.msra.mxu0 0.0
      %5223 = vmatprep.subr.mxu0 0.0
      %5224 = vmatpush2.msra.mxu0 0.0
      %5225 = vmatprep.subr.mxu0 0.0
      %5226 = vmatpush2.msra.mxu0 0.0
      %5227 = vmatprep.subr.mxu0 0.0
      %5228 = vmatpush2.msra.mxu0 0.0
      %5229 = vmatprep.subr.mxu0 0.0
      %5230 = vmatpush2.msra.mxu0 0.0
      %5231 = vmatprep.subr.mxu0 0.0
      %5232 = vmatpush2.msra.mxu0 0.0
      %5233 = vmatprep.mubr.f32.mxu0 0.0
      %5234 = vmatmul.mubr.f32.gmra.mxu0 %v4849
      %v5235 = vpop.f32.mrf.mxu0
      %v5236 = vadd.f32 %v5011, %v5235
      %v5237 = vpop.f32.mrf.mxu0
      %5238 = vmatprep.mubr.f32.mxu0 0.0
      %5239 = vmatmul.mubr.f32.gmra.mxu0 %v4852
      %v5240 = vpop.f32.mrf.mxu0
      %v5241 = vadd.f32 %v5016, %v5240
      %v5242 = vpop.f32.mrf.mxu0
      %5243 = vmatprep.mubr.f32.mxu0 0.0
      %5244 = vmatmul.mubr.f32.gmra.mxu0 %v4855
      %v5245 = vpop.f32.mrf.mxu0
      %v5246 = vadd.f32 %v5021, %v5245
      %v5247 = vpop.f32.mrf.mxu0
      %5248 = vmatprep.mubr.f32.mxu0 0.0
      %5249 = vmatmul.mubr.f32.gmra.mxu0 %v4858
      %v5250 = vpop.f32.mrf.mxu0
      %v5251 = vadd.f32 %v5026, %v5250
      %v5252 = vpop.f32.mrf.mxu0
      %5253 = vmatprep.mubr.f32.mxu0 0.0
      %5254 = vmatmul.mubr.f32.gmra.mxu0 %v4861
      %v5255 = vpop.f32.mrf.mxu0
      %v5256 = vadd.f32 %v5031, %v5255
      %v5257 = vpop.f32.mrf.mxu0
      %5258 = vmatprep.mubr.f32.mxu0 0.0
      %5259 = vmatmul.mubr.f32.gmra.mxu0 %v4864
      %v5260 = vpop.f32.mrf.mxu0
      %v5261 = vadd.f32 %v5036, %v5260
      %v5262 = vpop.f32.mrf.mxu0
      %5263 = vmatprep.mubr.f32.mxu0 0.0
      %5264 = vmatmul.mubr.f32.gmra.mxu0 %v4867
      %v5265 = vpop.f32.mrf.mxu0
      %v5266 = vadd.f32 %v5041, %v5265
      %v5267 = vpop.f32.mrf.mxu0
      %5268 = vmatprep.mubr.f32.mxu0 0.0
      %5269 = vmatmul.mubr.f32.gmra.mxu0 %v4870
      %v5270 = vpop.f32.mrf.mxu0
      %v5271 = vadd.f32 %v5046, %v5270
      %v5272 = vpop.f32.mrf.mxu0
      %5273 = vmatprep.mubr.f32.mxu0 0.0
      %5274 = vmatmul.mubr.f32.gmra.mxu0 %v4873
      %v5275 = vpop.f32.mrf.mxu0
      %v5276 = vadd.f32 %v5051, %v5275
      %v5277 = vpop.f32.mrf.mxu0
      %5278 = vmatprep.mubr.f32.mxu0 0.0
      %5279 = vmatmul.mubr.f32.gmra.mxu0 %v4876
      %v5280 = vpop.f32.mrf.mxu0
      %v5281 = vadd.f32 %v5056, %v5280
      %v5282 = vpop.f32.mrf.mxu0
      %5283 = vmatprep.mubr.f32.mxu0 0.0
      %5284 = vmatmul.mubr.f32.gmra.mxu0 %v4879
      %v5285 = vpop.f32.mrf.mxu0
      %v5286 = vadd.f32 %v5061, %v5285
      %v5287 = vpop.f32.mrf.mxu0
      %5288 = vmatprep.mubr.f32.mxu0 0.0
      %5289 = vmatmul.mubr.f32.gmra.mxu0 %v4882
      %v5290 = vpop.f32.mrf.mxu0
      %v5291 = vadd.f32 %v5066, %v5290
      %v5292 = vpop.f32.mrf.mxu0
      %5293 = vmatprep.mubr.f32.mxu0 0.0
      %5294 = vmatmul.mubr.f32.gmra.mxu0 %v4885
      %v5295 = vpop.f32.mrf.mxu0
      %v5296 = vadd.f32 %v5071, %v5295
      %v5297 = vpop.f32.mrf.mxu0
      %5298 = vmatprep.mubr.f32.mxu0 0.0
      %5299 = vmatmul.mubr.f32.gmra.mxu0 %v4888
      %v5300 = vpop.f32.mrf.mxu0
      %v5301 = vadd.f32 %v5076, %v5300
      %v5302 = vpop.f32.mrf.mxu0
      %5303 = vmatprep.mubr.f32.mxu0 0.0
      %5304 = vmatmul.mubr.f32.gmra.mxu0 %v4891
      %v5305 = vpop.f32.mrf.mxu0
      %v5306 = vadd.f32 %v5081, %v5305
      %v5307 = vpop.f32.mrf.mxu0
      %5308 = vmatprep.mubr.f32.mxu0 0.0
      %5309 = vmatmul.mubr.f32.gmra.mxu0 %v4894
      %v5310 = vpop.f32.mrf.mxu0
      %v5311 = vadd.f32 %v5086, %v5310
      %v5312 = vpop.f32.mrf.mxu0
      %5313 = vmatprep.mubr.f32.mxu0 0.0
      %5314 = vmatmul.mubr.f32.gmra.mxu0 %v4897
      %v5315 = vpop.f32.mrf.mxu0
      %v5316 = vadd.f32 %v5091, %v5315
      %v5317 = vpop.f32.mrf.mxu0
      %5318 = vmatprep.mubr.f32.mxu0 0.0
      %5319 = vmatmul.mubr.f32.gmra.mxu0 %v4900
      %v5320 = vpop.f32.mrf.mxu0
      %v5321 = vadd.f32 %v5096, %v5320
      %v5322 = vpop.f32.mrf.mxu0
      %5323 = vmatprep.mubr.f32.mxu0 0.0
      %5324 = vmatmul.mubr.f32.gmra.mxu0 %v4903
      %v5325 = vpop.f32.mrf.mxu0
      %v5326 = vadd.f32 %v5101, %v5325
      %v5327 = vpop.f32.mrf.mxu0
      %5328 = vmatprep.mubr.f32.mxu0 0.0
      %5329 = vmatmul.mubr.f32.gmra.mxu0 %v4906
      %v5330 = vpop.f32.mrf.mxu0
      %v5331 = vadd.f32 %v5106, %v5330
      %v5332 = vpop.f32.mrf.mxu0
      %5333 = vmatprep.mubr.f32.mxu0 0.0
      %5334 = vmatmul.mubr.f32.gmra.mxu0 %v4909
      %v5335 = vpop.f32.mrf.mxu0
      %v5336 = vadd.f32 %v5111, %v5335
      %v5337 = vpop.f32.mrf.mxu0
      %5338 = vmatprep.mubr.f32.mxu0 0.0
      %5339 = vmatmul.mubr.f32.gmra.mxu0 %v4912
      %v5340 = vpop.f32.mrf.mxu0
      %v5341 = vadd.f32 %v5116, %v5340
      %v5342 = vpop.f32.mrf.mxu0
      %5343 = vmatprep.mubr.f32.mxu0 0.0
      %5344 = vmatmul.mubr.f32.gmra.mxu0 %v4915
      %v5345 = vpop.f32.mrf.mxu0
      %v5346 = vadd.f32 %v5121, %v5345
      %v5347 = vpop.f32.mrf.mxu0
      %5348 = vmatprep.mubr.f32.mxu0 0.0
      %5349 = vmatmul.mubr.f32.gmra.mxu0 %v4918
      %v5350 = vpop.f32.mrf.mxu0
      %v5351 = vadd.f32 %v5126, %v5350
      %v5352 = vpop.f32.mrf.mxu0
      %5353 = vmatprep.mubr.f32.mxu0 0.0
      %5354 = vmatmul.mubr.f32.gmra.mxu0 %v4921
      %v5355 = vpop.f32.mrf.mxu0
      %v5356 = vadd.f32 %v5131, %v5355
      %v5357 = vpop.f32.mrf.mxu0
      %5358 = vmatprep.mubr.f32.mxu0 0.0
      %5359 = vmatmul.mubr.f32.gmra.mxu0 %v4924
      %v5360 = vpop.f32.mrf.mxu0
      %v5361 = vadd.f32 %v5136, %v5360
      %v5362 = vpop.f32.mrf.mxu0
      %5363 = vmatprep.mubr.f32.mxu0 0.0
      %5364 = vmatmul.mubr.f32.gmra.mxu0 %v4927
      %v5365 = vpop.f32.mrf.mxu0
      %v5366 = vadd.f32 %v5141, %v5365
      %v5367 = vpop.f32.mrf.mxu0
      %5368 = vmatprep.mubr.f32.mxu0 0.0
      %5369 = vmatmul.mubr.f32.gmra.mxu0 %v4930
      %v5370 = vpop.f32.mrf.mxu0
      %v5371 = vadd.f32 %v5146, %v5370
      %v5372 = vpop.f32.mrf.mxu0
      %5373 = vmatprep.mubr.f32.mxu0 0.0
      %5374 = vmatmul.mubr.f32.gmra.mxu0 %v4933
      %v5375 = vpop.f32.mrf.mxu0
      %v5376 = vadd.f32 %v5151, %v5375
      %v5377 = vpop.f32.mrf.mxu0
      %5378 = vmatprep.mubr.f32.mxu0 0.0
      %5379 = vmatmul.mubr.f32.gmra.mxu0 %v4936
      %v5380 = vpop.f32.mrf.mxu0
      %v5381 = vadd.f32 %v5156, %v5380
      %v5382 = vpop.f32.mrf.mxu0
      %5383 = vmatprep.mubr.f32.mxu0 0.0
      %5384 = vmatmul.mubr.f32.gmra.mxu0 %v4939
      %v5385 = vpop.f32.mrf.mxu0
      %v5386 = vadd.f32 %v5161, %v5385
      %v5387 = vpop.f32.mrf.mxu0
      %5388 = vmatprep.mubr.f32.mxu0 0.0
      %5389 = vmatmul.mubr.f32.gmra.mxu0 %v4942
      %v5390 = vpop.f32.mrf.mxu0
      %v5391 = vadd.f32 %v5166, %v5390
      %v5392 = vpop.f32.mrf.mxu0
      %5393 = vdwg.mxu0
      %v5394 = vsel %vm365, %v5236, 0.0
      %v5395 = vsel %vm365, %v5241, 0.0
      %v5396 = vadd.f32 %v5394, %v5395
      %v5397 = vsel %vm365, %v5246, 0.0
      %v5398 = vadd.f32 %v5396, %v5397
      %v5399 = vsel %vm365, %v5251, 0.0
      %v5400 = vadd.f32 %v5398, %v5399
      %v5401 = vsel %vm365, %v5256, 0.0
      %v5402 = vadd.f32 %v5400, %v5401
      %v5403 = vsel %vm365, %v5261, 0.0
      %v5404 = vadd.f32 %v5402, %v5403
      %v5405 = vsel %vm365, %v5266, 0.0
      %v5406 = vadd.f32 %v5404, %v5405
      %v5407 = vsel %vm365, %v5271, 0.0
      %v5408 = vadd.f32 %v5406, %v5407
      %v5409 = vsel %vm365, %v5276, 0.0
      %v5410 = vadd.f32 %v5408, %v5409
      %v5411 = vsel %vm365, %v5281, 0.0
      %v5412 = vadd.f32 %v5410, %v5411
      %v5413 = vsel %vm365, %v5286, 0.0
      %v5414 = vadd.f32 %v5412, %v5413
      %v5415 = vsel %vm365, %v5291, 0.0
      %v5416 = vadd.f32 %v5414, %v5415
      %v5417 = vsel %vm365, %v5296, 0.0
      %v5418 = vadd.f32 %v5416, %v5417
      %v5419 = vsel %vm365, %v5301, 0.0
      %v5420 = vadd.f32 %v5418, %v5419
      %v5421 = vsel %vm365, %v5306, 0.0
      %v5422 = vadd.f32 %v5420, %v5421
      %v5423 = vsel %vm365, %v5311, 0.0
      %v5424 = vadd.f32 %v5422, %v5423
      %v5425 = vsel %vm365, %v5316, 0.0
      %v5426 = vadd.f32 %v5424, %v5425
      %v5427 = vsel %vm365, %v5321, 0.0
      %v5428 = vadd.f32 %v5426, %v5427
      %v5429 = vsel %vm365, %v5326, 0.0
      %v5430 = vadd.f32 %v5428, %v5429
      %v5431 = vsel %vm365, %v5331, 0.0
      %v5432 = vadd.f32 %v5430, %v5431
      %v5433 = vsel %vm365, %v5336, 0.0
      %v5434 = vadd.f32 %v5432, %v5433
      %v5435 = vsel %vm365, %v5341, 0.0
      %v5436 = vadd.f32 %v5434, %v5435
      %v5437 = vsel %vm365, %v5346, 0.0
      %v5438 = vadd.f32 %v5436, %v5437
      %v5439 = vsel %vm365, %v5351, 0.0
      %v5440 = vadd.f32 %v5438, %v5439
      %v5441 = vsel %vm365, %v5356, 0.0
      %v5442 = vadd.f32 %v5440, %v5441
      %v5443 = vsel %vm365, %v5361, 0.0
      %v5444 = vadd.f32 %v5442, %v5443
      %v5445 = vsel %vm365, %v5366, 0.0
      %v5446 = vadd.f32 %v5444, %v5445
      %v5447 = vsel %vm365, %v5371, 0.0
      %v5448 = vadd.f32 %v5446, %v5447
      %v5449 = vsel %vm365, %v5376, 0.0
      %v5450 = vadd.f32 %v5448, %v5449
      %v5451 = vsel %vm365, %v5381, 0.0
      %v5452 = vadd.f32 %v5450, %v5451
      %v5453 = vsel %vm365, %v5386, 0.0
      %v5454 = vadd.f32 %v5452, %v5453
      %v5455 = vsel %vm365, %v5391, 0.0
      %v5456 = vadd.f32 %v5454, %v5455
      %v5457 = vrot.slane %v5456, 4
      %v5458 = vadd.f32 %v5456, %v5457
      %v5459 = vrot.slane %v5458, 2
      %v5460 = vadd.f32 %v5458, %v5459
      %v5461 = vrot.slane %v5460, 1
      %v5462 = vadd.f32 %v5460, %v5461
      %v5463 = vrcp.pop 256.0
      %v5464 = vmul.f32 %v5462, %v5463
      %v5465 = vld [vmem:[%s5] sm:$0xff]
      %v5466 = vld [vmem:[%s5 + $0x8] sm:$0xff]
      %v5467 = vld [vmem:[%s5 + $0x10] sm:$0xff]
      %v5468 = vld [vmem:[%s5 + $0x18] sm:$0xff]
      %v5469 = vld [vmem:[%s6] sm:$0x1]
      %v5471 = vsel %vm365, %v5464, 0
      %5473 = vmatprep.subr.mxu0 0.0
      %5474 = vmatpush1.msra.mxu0 0.0
      %5475 = vmatprep.subr.mxu0 0.0
      %5476 = vmatpush1.msra.mxu0 0.0
      %5477 = vmatprep.subr.mxu0 0.0
      %5478 = vmatpush1.msra.mxu0 0.0
      %5479 = vmatprep.subr.mxu0 0.0
      %5480 = vmatpush1.msra.mxu0 0.0
      %5481 = vmatprep.subr.mxu0 0.0
      %5482 = vmatpush1.msra.mxu0 0.0
      %5483 = vmatprep.subr.mxu0 0.0
      %5484 = vmatpush1.msra.mxu0 0.0
      %5485 = vmatprep.subr.mxu0 0.0
      %5486 = vmatpush1.msra.mxu0 0.0
      %5487 = vmatprep.subr.mxu0 0.0
      %5488 = vmatpush1.msra.mxu0 0.0
      %5489 = vmatprep.subr.mxu0 0.0
      %5490 = vmatpush1.msra.mxu0 0.0
      %5491 = vmatprep.subr.mxu0 0.0
      %5492 = vmatpush1.msra.mxu0 0.0
      %5493 = vmatprep.subr.mxu0 0.0
      %5494 = vmatpush1.msra.mxu0 0.0
      %5495 = vmatprep.subr.mxu0 0.0
      %5496 = vmatpush1.msra.mxu0 0.0
      %5497 = vmatprep.subr.mxu0 0.0
      %5498 = vmatpush1.msra.mxu0 %v5468
      %5499 = vmatprep.subr.mxu0 0.0
      %5500 = vmatpush1.msra.mxu0 %v5467
      %5501 = vmatprep.subr.mxu0 0.0
      %5502 = vmatpush1.msra.mxu0 %v5466
      %5503 = vmatprep.subr.mxu0 0.0
      %5504 = vmatpush1.msra.mxu0 %v5465
      %5505 = vmatprep.subr.mxu0 0.0
      %5506 = vmatpush2.msra.mxu0 0.0
      %5507 = vmatprep.subr.mxu0 0.0
      %5508 = vmatpush2.msra.mxu0 0.0
      %5509 = vmatprep.subr.mxu0 0.0
      %5510 = vmatpush2.msra.mxu0 0.0
      %5511 = vmatprep.subr.mxu0 0.0
      %5512 = vmatpush2.msra.mxu0 0.0
      %5513 = vmatprep.subr.mxu0 0.0
      %5514 = vmatpush2.msra.mxu0 0.0
      %5515 = vmatprep.subr.mxu0 0.0
      %5516 = vmatpush2.msra.mxu0 0.0
      %5517 = vmatprep.subr.mxu0 0.0
      %5518 = vmatpush2.msra.mxu0 0.0
      %5519 = vmatprep.subr.mxu0 0.0
      %5520 = vmatpush2.msra.mxu0 0.0
      %5521 = vmatprep.subr.mxu0 0.0
      %5522 = vmatpush2.msra.mxu0 0.0
      %5523 = vmatprep.subr.mxu0 0.0
      %5524 = vmatpush2.msra.mxu0 0.0
      %5525 = vmatprep.subr.mxu0 0.0
      %5526 = vmatpush2.msra.mxu0 0.0
      %5527 = vmatprep.subr.mxu0 0.0
      %5528 = vmatpush2.msra.mxu0 0.0
      %5529 = vmatprep.subr.mxu0 0.0
      %5530 = vmatpush2.msra.mxu0 0.0
      %5531 = vmatprep.subr.mxu0 0.0
      %5532 = vmatpush2.msra.mxu0 0.0
      %5533 = vmatprep.subr.mxu0 0.0
      %5534 = vmatpush2.msra.mxu0 0.0
      %5535 = vmatprep.subr.mxu0 0.0
      %5536 = vmatpush2.msra.mxu0 0.0
      %5537 = vmatprep.mubr.f32.mxu0 0.0
      %5538 = vmatmul.mubr.f32.gmra.mxu0 %v5471
      %v5539 = vpop.f32.mrf.mxu0
      %v5540 = vadd.f32 %v5469, %v5539
      %v5541 = vpop.f32.mrf.mxu0
      %5542 = vdwg.mxu0
      %v5543 = vmax.f32 %v5540, 0.0
      %v5544 = vld [vmem:[%s7] sm:$0x3]
      %v5545 = vld [vmem:[%s8] sm:$0x1]
      %vm5546 = vcmask 15360
      %v5548 = vsel %vm5546, %v5543, 0
      %vm5550 = vcmask 1041408
      %v5552 = vsel %vm5550, %v5544, 0
      %5554 = vmatprep.subr.mxu0 0.0
      %5555 = vmatpush1.msra.mxu0 0.0
      %5556 = vmatprep.subr.mxu0 0.0
      %5557 = vmatpush1.msra.mxu0 0.0
      %5558 = vmatprep.subr.mxu0 0.0
      %5559 = vmatpush1.msra.mxu0 0.0
      %5560 = vmatprep.subr.mxu0 0.0
      %5561 = vmatpush1.msra.mxu0 0.0
      %5562 = vmatprep.subr.mxu0 0.0
      %5563 = vmatpush1.msra.mxu0 0.0
      %5564 = vmatprep.subr.mxu0 0.0
      %5565 = vmatpush1.msra.mxu0 0.0
      %5566 = vmatprep.subr.mxu0 0.0
      %5567 = vmatpush1.msra.mxu0 0.0
      %5568 = vmatprep.subr.mxu0 0.0
      %5569 = vmatpush1.msra.mxu0 0.0
      %5570 = vmatprep.subr.mxu0 0.0
      %5571 = vmatpush1.msra.mxu0 0.0
      %5572 = vmatprep.subr.mxu0 0.0
      %5573 = vmatpush1.msra.mxu0 0.0
      %5574 = vmatprep.subr.mxu0 0.0
      %5575 = vmatpush1.msra.mxu0 0.0
      %5576 = vmatprep.subr.mxu0 0.0
      %5577 = vmatpush1.msra.mxu0 0.0
      %5578 = vmatprep.subr.mxu0 0.0
      %5579 = vmatpush1.msra.mxu0 0.0
      %5580 = vmatprep.subr.mxu0 0.0
      %5581 = vmatpush1.msra.mxu0 0.0
      %5582 = vmatprep.subr.mxu0 0.0
      %5583 = vmatpush1.msra.mxu0 0.0
      %5584 = vmatprep.subr.mxu0 0.0
      %5585 = vmatpush1.msra.mxu0 %v5552
      %5586 = vmatprep.subr.mxu0 0.0
      %5587 = vmatpush2.msra.mxu0 0.0
      %5588 = vmatprep.subr.mxu0 0.0
      %5589 = vmatpush2.msra.mxu0 0.0
      %5590 = vmatprep.subr.mxu0 0.0
      %5591 = vmatpush2.msra.mxu0 0.0
      %5592 = vmatprep.subr.mxu0 0.0
      %5593 = vmatpush2.msra.mxu0 0.0
      %5594 = vmatprep.subr.mxu0 0.0
      %5595 = vmatpush2.msra.mxu0 0.0
      %5596 = vmatprep.subr.mxu0 0.0
      %5597 = vmatpush2.msra.mxu0 0.0
      %5598 = vmatprep.subr.mxu0 0.0
      %5599 = vmatpush2.msra.mxu0 0.0
      %5600 = vmatprep.subr.mxu0 0.0
      %5601 = vmatpush2.msra.mxu0 0.0
      %5602 = vmatprep.subr.mxu0 0.0
      %5603 = vmatpush2.msra.mxu0 0.0
      %5604 = vmatprep.subr.mxu0 0.0
      %5605 = vmatpush2.msra.mxu0 0.0
      %5606 = vmatprep.subr.mxu0 0.0
      %5607 = vmatpush2.msra.mxu0 0.0
      %5608 = vmatprep.subr.mxu0 0.0
      %5609 = vmatpush2.msra.mxu0 0.0
      %5610 = vmatprep.subr.mxu0 0.0
      %5611 = vmatpush2.msra.mxu0 0.0
      %5612 = vmatprep.subr.mxu0 0.0
      %5613 = vmatpush2.msra.mxu0 0.0
      %5614 = vmatprep.subr.mxu0 0.0
      %5615 = vmatpush2.msra.mxu0 0.0
      %5616 = vmatprep.subr.mxu0 0.0
      %5617 = vmatpush2.msra.mxu0 0.0
      %5618 = vmatprep.mubr.f32.mxu0 0.0
      %5619 = vmatmul.mubr.f32.gmra.mxu0 %v5548
      %v5620 = vpop.f32.mrf.mxu0
      %v5621 = vadd.f32 %v5545, %v5620
      %v5622 = vpop.f32.mrf.mxu0
      %5623 = vdwg.mxu0
      %v5624 = vsub.f32 0.0, %v5621
      %v5625 = vmul.f32 %v5624, 1.442695
      %v5626 = vpow.pop %v5625
      %v5627 = vadd.f32 %v5626, 1.0
      %v5628 = vrcp.pop %v5627
      %v5629 = vmul.f32 1.0, %v5628
      %v5630 = vlaneseq
      %v5631 = vshrl.u32 %v5630, 7
      %v5632 = vsub.s32 0, %v5631
      %v5633 = vrot.slane %v5629, %v5632
      %v5634 = vmul.f32 %v5236, %v5633
      %v5635 = vmul.f32 %v5241, %v5633
      %v5636 = vmul.f32 %v5246, %v5633
      %v5637 = vmul.f32 %v5251, %v5633
      %v5638 = vmul.f32 %v5256, %v5633
      %v5639 = vmul.f32 %v5261, %v5633
      %v5640 = vmul.f32 %v5266, %v5633
      %v5641 = vmul.f32 %v5271, %v5633
      %v5642 = vmul.f32 %v5276, %v5633
      %v5643 = vmul.f32 %v5281, %v5633
      %v5644 = vmul.f32 %v5286, %v5633
      %v5645 = vmul.f32 %v5291, %v5633
      %v5646 = vmul.f32 %v5296, %v5633
      %v5647 = vmul.f32 %v5301, %v5633
      %v5648 = vmul.f32 %v5306, %v5633
      %v5649 = vmul.f32 %v5311, %v5633
      %v5650 = vmul.f32 %v5316, %v5633
      %v5651 = vmul.f32 %v5321, %v5633
      %v5652 = vmul.f32 %v5326, %v5633
      %v5653 = vmul.f32 %v5331, %v5633
      %v5654 = vmul.f32 %v5336, %v5633
      %v5655 = vmul.f32 %v5341, %v5633
      %v5656 = vmul.f32 %v5346, %v5633
      %v5657 = vmul.f32 %v5351, %v5633
      %v5658 = vmul.f32 %v5356, %v5633
      %v5659 = vmul.f32 %v5361, %v5633
      %v5660 = vmul.f32 %v5366, %v5633
      %v5661 = vmul.f32 %v5371, %v5633
      %v5662 = vmul.f32 %v5376, %v5633
      %v5663 = vmul.f32 %v5381, %v5633
      %v5664 = vmul.f32 %v5386, %v5633
      %v5665 = vmul.f32 %v5391, %v5633
      %v5666 = vadd.f32 %v5634, %v333
      %v5667 = vadd.f32 %v5635, %v334
      %v5668 = vadd.f32 %v5636, %v335
      %v5669 = vadd.f32 %v5637, %v336
      %v5670 = vadd.f32 %v5638, %v337
      %v5671 = vadd.f32 %v5639, %v338
      %v5672 = vadd.f32 %v5640, %v339
      %v5673 = vadd.f32 %v5641, %v340
      %v5674 = vadd.f32 %v5642, %v341
      %v5675 = vadd.f32 %v5643, %v342
      %v5676 = vadd.f32 %v5644, %v343
      %v5677 = vadd.f32 %v5645, %v344
      %v5678 = vadd.f32 %v5646, %v345
      %v5679 = vadd.f32 %v5647, %v346
      %v5680 = vadd.f32 %v5648, %v347
      %v5681 = vadd.f32 %v5649, %v348
      %v5682 = vadd.f32 %v5650, %v349
      %v5683 = vadd.f32 %v5651, %v350
      %v5684 = vadd.f32 %v5652, %v351
      %v5685 = vadd.f32 %v5653, %v352
      %v5686 = vadd.f32 %v5654, %v353
      %v5687 = vadd.f32 %v5655, %v354
      %v5688 = vadd.f32 %v5656, %v355
      %v5689 = vadd.f32 %v5657, %v356
      %v5690 = vadd.f32 %v5658, %v357
      %v5691 = vadd.f32 %v5659, %v358
      %v5692 = vadd.f32 %v5660, %v359
      %v5693 = vadd.f32 %v5661, %v360
      %v5694 = vadd.f32 %v5662, %v361
      %v5695 = vadd.f32 %v5663, %v362
      %v5696 = vadd.f32 %v5664, %v363
      %v5697 = vadd.f32 %v5665, %v364
      %5698 = vst.msk [vmem:[%s332] sm:$0xff] %vm365, %v5666
      %5699 = vst.msk [vmem:[%s332 + $0x8] sm:$0xff] %vm365, %v5667
      %5700 = vst.msk [vmem:[%s332 + $0x10] sm:$0xff] %vm365, %v5668
      %5701 = vst.msk [vmem:[%s332 + $0x18] sm:$0xff] %vm365, %v5669
      %5702 = vst.msk [vmem:[%s332 + $0x20] sm:$0xff] %vm365, %v5670
      %5703 = vst.msk [vmem:[%s332 + $0x28] sm:$0xff] %vm365, %v5671
      %5704 = vst.msk [vmem:[%s332 + $0x30] sm:$0xff] %vm365, %v5672
      %5705 = vst.msk [vmem:[%s332 + $0x38] sm:$0xff] %vm365, %v5673
      %5706 = vst.msk [vmem:[%s332 + $0x40] sm:$0xff] %vm365, %v5674
      %5707 = vst.msk [vmem:[%s332 + $0x48] sm:$0xff] %vm365, %v5675
      %5708 = vst.msk [vmem:[%s332 + $0x50] sm:$0xff] %vm365, %v5676
      %5709 = vst.msk [vmem:[%s332 + $0x58] sm:$0xff] %vm365, %v5677
      %5710 = vst.msk [vmem:[%s332 + $0x60] sm:$0xff] %vm365, %v5678
      %5711 = vst.msk [vmem:[%s332 + $0x68] sm:$0xff] %vm365, %v5679
      %5712 = vst.msk [vmem:[%s332 + $0x70] sm:$0xff] %vm365, %v5680
      %5713 = vst.msk [vmem:[%s332 + $0x78] sm:$0xff] %vm365, %v5681
      %5714 = vst.msk [vmem:[%s332 + $0x80] sm:$0xff] %vm365, %v5682
      %5715 = vst.msk [vmem:[%s332 + $0x88] sm:$0xff] %vm365, %v5683
      %5716 = vst.msk [vmem:[%s332 + $0x90] sm:$0xff] %vm365, %v5684
      %5717 = vst.msk [vmem:[%s332 + $0x98] sm:$0xff] %vm365, %v5685
      %5718 = vst.msk [vmem:[%s332 + $0xa0] sm:$0xff] %vm365, %v5686
      %5719 = vst.msk [vmem:[%s332 + $0xa8] sm:$0xff] %vm365, %v5687
      %5720 = vst.msk [vmem:[%s332 + $0xb0] sm:$0xff] %vm365, %v5688
      %5721 = vst.msk [vmem:[%s332 + $0xb8] sm:$0xff] %vm365, %v5689
      %5722 = vst.msk [vmem:[%s332 + $0xc0] sm:$0xff] %vm365, %v5690
      %5723 = vst.msk [vmem:[%s332 + $0xc8] sm:$0xff] %vm365, %v5691
      %5724 = vst.msk [vmem:[%s332 + $0xd0] sm:$0xff] %vm365, %v5692
      %5725 = vst.msk [vmem:[%s332 + $0xd8] sm:$0xff] %vm365, %v5693
      %5726 = vst.msk [vmem:[%s332 + $0xe0] sm:$0xff] %vm365, %v5694
      %5727 = vst.msk [vmem:[%s332 + $0xe8] sm:$0xff] %vm365, %v5695
      %5728 = vst.msk [vmem:[%s332 + $0xf0] sm:$0xff] %vm365, %v5696
      %5729 = vst.msk [vmem:[%s332 + $0xf8] sm:$0xff] %vm365, %v5697
      %p5730 = scmp.lt.s32.totalorder %s20, 1
      %s5731 = scalar_select %p5730, %s20, 1
      %s5732 = smul.addr %s5731, 32
      %s5733 = smul.addr %s5732, 8
      %s5734 = scalar_lea.vmem %s9, %s5733
      // Predicated region
      $region57: #{tpu_custom_call.1} parent=55 // pred_check
        %p5735 = pneg %p232
      $region58: #{tpu_custom_call.1} parent=55 // pred_check_branch
        %5737 = sbr.rel (%p5735) target = $region60
      $region59: #{tpu_custom_call.1} parent=55 // pred_region
        _
      $region60: #{tpu_custom_call.1} parent=55 // pred_fallthru
        _
    $region56: #{tpu_custom_call.1} parent=5 // pred_fallthru
      _
    %p5738 = scmp.le.s32.totalorder 2, %s15
    // Predicated region
    $region61: #{tpu_custom_call.1} parent=5 // pred_check
      %p5739 = pneg %p5738
    $region62: #{tpu_custom_call.1} parent=5 // pred_check_branch
      %5741 = sbr.rel (%p5739) target = $region64
    $region63: #{tpu_custom_call.1} parent=5 // pred_region
      %s5742 = ssub.s32 %s15, 2
      // Predicated region
      $region65: #{tpu_custom_call.1} parent=63 // pred_check
        %p5743 = pneg %p238
      $region66: #{tpu_custom_call.1} parent=63 // pred_check_branch
        %5745 = sbr.rel (%p5743) target = $region68
      $region67: #{tpu_custom_call.1} parent=63 // pred_region
        %p5746 = scmp.lt.s32.totalorder %s21, 1
        %s5747 = scalar_select %p5746, %s21, 1
        %s5748 = smul.addr %s5747, 32
        %s5749 = smul.addr %s5748, 8
        %s5750 = scalar_lea.vmem %s9, %s5749
      $region68: #{tpu_custom_call.1} parent=63 // pred_fallthru
        _
    $region64: #{tpu_custom_call.1} parent=5 // pred_fallthru
      _
  $region6: #{tpu_custom_call.1} parent=0 // loop_footer
    %s19 = sadd.s32 1, %s15
  $region7: #{tpu_custom_call.1} parent=0 // loop_footer_branch
    %14 = sbr.rel target = $region3
  $region8: #{tpu_custom_call.1} parent=0 // loop_exit
    _

</llo_original>
